<compile_context>
chip_gen: v7x
topology: tpu7x:2x2x1
jax: 0.10.0
libtpu: 0.0.40
codegen_flags: <defaults>
</compile_context>

<pallas_src>
import math
import functools

import jax
import jax.numpy as jnp
from jax import lax
from jax.experimental import pallas as pl
from jax.experimental.pallas import tpu as pltpu  # noqa: F401  (kept for TPU-specific tuning hooks)


_NEG_BIG = -1e9            # finite "-inf": exp underflows to exactly 0 in f32, never NaNs
_PARAMS_PER_LAYER = 12     # fused-QKV parameter layout, see prepare_params()


# ----------------------------- in-kernel helpers -----------------------------

def _layernorm(x, gamma, beta, eps=1e-5):
    # x: (N, E), gamma/beta: (1, E)
    mu = jnp.mean(x, axis=-1, keepdims=True)
    var = jnp.mean((x - mu) ** 2, axis=-1, keepdims=True)
    return (x - mu) * lax.rsqrt(var + eps) * gamma + beta


def _gelu_exact(x):
    # nn.GELU() default (erf-based, exact)
    return 0.5 * x * (1.0 + lax.erf(x * (1.0 / math.sqrt(2.0))))


# ----------------------------- fused whole-network kernel --------------------

def net_kernel(*refs, n_head, n_layers):
    """Entire Net forward on one VMEM-resident block.

    refs layout (inputs, then the single output):
      [0] x        (N, E)    token+pos embeddings, N = B*T
      [1] mask_add (N, N)    0 where key attendable (same batch & not pad), -1e9 otherwise
      [2 .. 2+12*L) per layer:
          wqkv (E,3E), bqkv (1,3E), wo (E,E), bo (1,E),
          ln1g (1,E), ln1b (1,E), ln2g (1,E), ln2b (1,E),
          wfc (E,4E), bfc (1,4E), wproj (4E,E), bproj (1,E)
      [.. +4) lnf_g (1,E), lnf_b (1,E), wlm_pad (E,Cpad), blm_pad (1,Cpad)
      [-1] out (N, Cpad)     log-softmax rows (padded class lanes hold ~-1e9)
    """
    np_l = _PARAMS_PER_LAYER
    x_ref, mask_ref = refs[0], refs[1]
    layer_refs = refs[2:2 + n_layers * np_l]
    lnf_g_ref, lnf_b_ref, wlm_ref, blm_ref = refs[2 + n_layers * np_l:2 + n_layers * np_l + 4]
    out_ref = refs[2 + n_layers * np_l + 4]

    x = x_ref[...]                        # (N, E)
    mask_add = mask_ref[...]              # (N, N)
    N, E = x.shape
    hd = E // n_head
    scale = 1.0 / math.sqrt(hd)

    for li in range(n_layers):
        (wqkv_r, bqkv_r, wo_r, bo_r, ln1g_r, ln1b_r, ln2g_r, ln2b_r,
         wfc_r, bfc_r, wpr_r, bpr_r) = layer_refs[li * np_l:(li + 1) * np_l]

        # ----- x = x + c_proj(multi_head_attention(ln_1(x))) -----
        h = _layernorm(x, ln1g_r[...], ln1b_r[...])
        # fused QKV projection: one (N,E)x(E,3E) matmul instead of 3*n_head tiny ones
        qkv = jnp.dot(h, wqkv_r[...], preferred_element_type=jnp.float32) + bqkv_r[...]
        wo = wo_r[...]

        acc = None
        for hi in range(n_head):
            q_h = qkv[:, hi * hd:(hi + 1) * hd]
            k_h = qkv[:, E + hi * hd:E + (hi + 1) * hd]
            v_h = qkv[:, 2 * E + hi * hd:2 * E + (hi + 1) * hd]
            att = jnp.dot(q_h, k_h.T, preferred_element_type=jnp.float32) * scale
            att = att + mask_add                       # blocks cross-batch keys + pad keys
            att = att - jnp.max(att, axis=-1, keepdims=True)
            p = jnp.exp(att)
            p = p * pl.reciprocal(jnp.sum(p, axis=-1, keepdims=True), approx=True)
            # TODO(synk): attn_dropout / resid_dropout are identity (eval mode)
            y_h = jnp.dot(p, v_h, preferred_element_type=jnp.float32)              # (N, hd)
            # fold this head's slice of the output projection: mathematically identical
            # to concat(heads) @ Wo, but with no lane-concatenate of 8-lane slices
            contrib = jnp.dot(y_h, wo[hi * hd:(hi + 1) * hd, :],
                              preferred_element_type=jnp.float32)                  # (N, E)
            acc = contrib if acc is None else acc + contrib
        x = x + acc + bo_r[...]

        # ----- x = x + c_proj(gelu(c_fc(ln_2(x)))) -----
        h2 = _layernorm(x, ln2g_r[...], ln2b_r[...])
        fc = jnp.dot(h2, wfc_r[...], preferred_element_type=jnp.float32) + bfc_r[...]
        mlp = jnp.dot(_gelu_exact(fc), wpr_r[...],
                      preferred_element_type=jnp.float32) + bpr_r[...]
        x = x + mlp

    # ----- ln_f + lm_head + log_softmax over the lane-padded class dim -----
    hf = _layernorm(x, lnf_g_ref[...], lnf_b_ref[...])
    logits = jnp.dot(hf, wlm_ref[...], preferred_element_type=jnp.float32) + blm_ref[...]
    m = jnp.max(logits, axis=-1, keepdims=True)        # padded lanes sit at ~-1e9, never max
    z = logits - m
    lse = jnp.log(jnp.sum(jnp.exp(z), axis=-1, keepdims=True))   # padded lanes: exp -> 0 exactly
    out_ref[...] = z - lse                             # lane-dense (N, Cpad) unmasked store


# ----------------------------- parameter init & packing ----------------------

def init_params(key, vocab_size, n_embd, n_head, n_layers, n_tags, max_pos=200):
    std = 0.02
    keys = iter(jax.random.split(key, 64))

    def normal(shape):
        return (std * jax.random.normal(next(keys), shape)).astype(jnp.float32)

    params = {
        "wte": normal((vocab_size, n_embd)),
        "wpe": normal((max_pos, n_embd)),
        "lnf_g": jnp.ones((1, n_embd), jnp.float32),
        "lnf_b": jnp.zeros((1, n_embd), jnp.float32),
        "w_lm": normal((n_embd, n_tags)),   # (in, out); lm_head has no bias
        "blocks": [],
    }
    F = 4 * n_embd
    for _ in range(n_layers):
        blk = (
            normal((n_embd, n_embd)), jnp.zeros((1, n_embd), jnp.float32),  # wq, bq
            normal((n_embd, n_embd)), jnp.zeros((1, n_embd), jnp.float32),  # wk, bk
            normal((n_embd, n_embd)), jnp.zeros((1, n_embd), jnp.float32),  # wv, bv
            normal((n_embd, n_embd)), jnp.zeros((1, n_embd), jnp.float32),  # wo, bo
            jnp.ones((1, n_embd), jnp.float32), jnp.zeros((1, n_embd), jnp.float32),  # ln1
            jnp.ones((1, n_embd), jnp.float32), jnp.zeros((1, n_embd), jnp.float32),  # ln2
            normal((n_embd, F)), jnp.zeros((1, F), jnp.float32),            # w_fc, b_fc
            normal((F, n_embd)), jnp.zeros((1, n_embd), jnp.float32),       # w_proj, b_proj
        )
        params["blocks"].append(blk)
    return params


def prepare_params(params):
    """Fuse Q/K/V weights and pad lm_head to a 128-lane-dense class dim; flatten for the kernel."""
    E = params["wte"].shape[1]
    C = params["w_lm"].shape[1]
    c_pad = ((C + 127) // 128) * 128
    flat = []
    for blk in params["blocks"]:
        (wq, bq, wk, bk, wv, bv, wo, bo,
         ln1g, ln1b, ln2g, ln2b, wfc, bfc, wpr, bpr) = blk
        flat += [jnp.concatenate([wq, wk, wv], axis=1),
                 jnp.concatenate([bq, bk, bv], axis=1),
                 wo, bo, ln1g, ln1b, ln2g, ln2b, wfc, bfc, wpr, bpr]
    wlm_pad = jnp.zeros((E, c_pad), jnp.float32).at[:, :C].set(params["w_lm"])
    # padded class lanes get a -1e9 "bias" so log-softmax over c_pad lanes equals
    # log-softmax over the real C classes (their exp underflows to exactly 0).
    blm_pad = jnp.full((1, c_pad), _NEG_BIG, jnp.float32).at[:, :C].set(0.0)
    flat += [params["lnf_g"], params["lnf_b"], wlm_pad, blm_pad]
    return tuple(flat), C, c_pad


# ----------------------------- full forward -----------------------------------

def net_forward(params, inputs, pad_ind, n_head):
    B, T = inputs.shape
    N = B * T
    E = params["wte"].shape[1]
    n_layers = len(params["blocks"])
    flat_params, C, c_pad = prepare_params(params)

    # embedding gathers + positional embeddings (plain JAX glue)
    tok_emb = jnp.take(params["wte"], inputs, axis=0)           # (B, T, E)
    pos_emb = params["wpe"][:T][None, :, :]                     # (1, T, E)
    x = (tok_emb + pos_emb).astype(jnp.float32).reshape(N, E)   # fold batch: one (B*T, E) tile
    # TODO(synk): transformer.drop is identity (eval mode)

    # additive attention mask over the folded (B*T) key axis:
    # key j is attendable from query i iff same batch and token j is not padding.
    # -1e9 (not -inf) -> no NaN even for fully padded sequences; exp() still hits exact 0.
    # NOTE: query rows at pad positions still produce outputs (PyTorch key_padding semantics).
    pad = (inputs == pad_ind).reshape(N)
    batch_id = jnp.repeat(jnp.arange(B, dtype=jnp.int32), T)
    valid = (batch_id[:, None] == batch_id[None, :]) & (~pad)[None, :]
    mask_add = jnp.where(valid, 0.0, _NEG_BIG).astype(jnp.float32)   # (N, N)

    out_pad = pl.pallas_call(
        functools.partial(net_kernel, n_head=n_head, n_layers=n_layers),
        out_shape=jax.ShapeDtypeStruct((N, c_pad), jnp.float32),
    )(x, mask_add, *flat_params)

    return out_pad[:, :C]        # (B*T, n_tags) log-probabilities


# ----------------------------- main -------------------------------------------

if __name__ == "__main__":
    vocab_size = 50
    embedding_dim = 32
    num_heads = 4
    num_layers = 2
    number_of_tags = 8
    pad_ind = 0
    B, T = 2, 8

    key = jax.random.PRNGKey(0)
    pkey, ikey = jax.random.split(key)
    params = init_params(pkey, vocab_size, embedding_dim, num_heads,
                         num_layers, number_of_tags)

    # tokens in [1, vocab); make the tail of each sequence padding
    inputs = jax.random.randint(ikey, (B, T), 1, vocab_size, dtype=jnp.int32)
    inputs = inputs.at[:, -2:].set(pad_ind)

    out = net_forward(params, inputs, pad_ind, num_heads)
    out = jax.block_until_ready(out)

    assert out.shape == (B * T, number_of_tags)
    assert bool(jnp.all(jnp.isfinite(out)))
    print("KERNEL_OK")
</pallas_src>

<mosaic_0001>
module attributes {stable_mosaic.version = 11 : i64} {
  func.func @net_kernel(%arg0: memref<16x32xf32, #tpu.memory_space<vmem>>, %arg1: memref<16x16xf32, #tpu.memory_space<vmem>>, %arg2: memref<32x96xf32, #tpu.memory_space<vmem>>, %arg3: memref<1x96xf32, #tpu.memory_space<vmem>>, %arg4: memref<32x32xf32, #tpu.memory_space<vmem>>, %arg5: memref<1x32xf32, #tpu.memory_space<vmem>>, %arg6: memref<1x32xf32, #tpu.memory_space<vmem>>, %arg7: memref<1x32xf32, #tpu.memory_space<vmem>>, %arg8: memref<1x32xf32, #tpu.memory_space<vmem>>, %arg9: memref<1x32xf32, #tpu.memory_space<vmem>>, %arg10: memref<32x128xf32, #tpu.memory_space<vmem>>, %arg11: memref<1x128xf32, #tpu.memory_space<vmem>>, %arg12: memref<128x32xf32, #tpu.memory_space<vmem>>, %arg13: memref<1x32xf32, #tpu.memory_space<vmem>>, %arg14: memref<32x96xf32, #tpu.memory_space<vmem>>, %arg15: memref<1x96xf32, #tpu.memory_space<vmem>>, %arg16: memref<32x32xf32, #tpu.memory_space<vmem>>, %arg17: memref<1x32xf32, #tpu.memory_space<vmem>>, %arg18: memref<1x32xf32, #tpu.memory_space<vmem>>, %arg19: memref<1x32xf32, #tpu.memory_space<vmem>>, %arg20: memref<1x32xf32, #tpu.memory_space<vmem>>, %arg21: memref<1x32xf32, #tpu.memory_space<vmem>>, %arg22: memref<32x128xf32, #tpu.memory_space<vmem>>, %arg23: memref<1x128xf32, #tpu.memory_space<vmem>>, %arg24: memref<128x32xf32, #tpu.memory_space<vmem>>, %arg25: memref<1x32xf32, #tpu.memory_space<vmem>>, %arg26: memref<1x32xf32, #tpu.memory_space<vmem>>, %arg27: memref<1x32xf32, #tpu.memory_space<vmem>>, %arg28: memref<32x128xf32, #tpu.memory_space<vmem>>, %arg29: memref<1x128xf32, #tpu.memory_space<vmem>>, %arg30: memref<16x128xf32, #tpu.memory_space<vmem>>) attributes {dimension_semantics = [], scalar_prefetch = 0 : i64, scratch_operands = 0 : i64, tpu.core_type = #tpu.core_type<tc>} {
    %c0 = arith.constant 0 : index
    %c0_0 = arith.constant 0 : index
    %0 = vector.load %arg0[%c0, %c0_0] : memref<16x32xf32, #tpu.memory_space<vmem>>, vector<16x32xf32>
    %c0_1 = arith.constant 0 : index
    %c0_2 = arith.constant 0 : index
    %1 = vector.load %arg1[%c0_1, %c0_2] : memref<16x16xf32, #tpu.memory_space<vmem>>, vector<16x16xf32>
    %c0_3 = arith.constant 0 : index
    %c0_4 = arith.constant 0 : index
    %2 = vector.load %arg6[%c0_3, %c0_4] : memref<1x32xf32, #tpu.memory_space<vmem>>, vector<1x32xf32>
    %c0_5 = arith.constant 0 : index
    %c0_6 = arith.constant 0 : index
    %3 = vector.load %arg7[%c0_5, %c0_6] : memref<1x32xf32, #tpu.memory_space<vmem>>, vector<1x32xf32>
    %cst = arith.constant dense<0.000000e+00> : vector<16xf32>
    %4 = vector.multi_reduction <add>, %0, %cst [1] : vector<16x32xf32> to vector<16xf32>
    %5 = vector.shape_cast %4 : vector<16xf32> to vector<16x1xf32>
    %cst_7 = arith.constant 3.200000e+01 : f32
    %6 = vector.broadcast %cst_7 : f32 to vector<16x1xf32>
    %7 = arith.divf %5, %6 : vector<16x1xf32>
    %8 = vector.broadcast %7 : vector<16x1xf32> to vector<16x32xf32>
    %9 = arith.subf %0, %8 : vector<16x32xf32>
    %10 = arith.mulf %9, %9 : vector<16x32xf32>
    %cst_8 = arith.constant dense<0.000000e+00> : vector<16xf32>
    %11 = vector.multi_reduction <add>, %10, %cst_8 [1] : vector<16x32xf32> to vector<16xf32>
    %12 = vector.shape_cast %11 : vector<16xf32> to vector<16x1xf32>
    %cst_9 = arith.constant 3.200000e+01 : f32
    %13 = vector.broadcast %cst_9 : f32 to vector<16x1xf32>
    %14 = arith.divf %12, %13 : vector<16x1xf32>
    %15 = vector.broadcast %7 : vector<16x1xf32> to vector<16x32xf32>
    %16 = arith.subf %0, %15 : vector<16x32xf32>
    %cst_10 = arith.constant 9.99999974E-6 : f32
    %17 = vector.broadcast %cst_10 : f32 to vector<16x1xf32>
    %18 = arith.addf %14, %17 : vector<16x1xf32>
    %19 = math.rsqrt %18 : vector<16x1xf32>
    %20 = vector.broadcast %19 : vector<16x1xf32> to vector<16x32xf32>
    %21 = arith.mulf %16, %20 : vector<16x32xf32>
    %22 = vector.broadcast %2 : vector<1x32xf32> to vector<16x32xf32>
    %23 = arith.mulf %21, %22 : vector<16x32xf32>
    %24 = vector.broadcast %3 : vector<1x32xf32> to vector<16x32xf32>
    %25 = arith.addf %23, %24 : vector<16x32xf32>
    %c0_11 = arith.constant 0 : index
    %c0_12 = arith.constant 0 : index
    %26 = vector.load %arg2[%c0_11, %c0_12] : memref<32x96xf32, #tpu.memory_space<vmem>>, vector<32x96xf32>
    %cst_13 = arith.constant dense<0.000000e+00> : vector<16x96xf32>
    %27 = tpu.matmul %25, %26, %cst_13 {dimension_numbers = #tpu.dot_dimension_numbers<[1], [0], [0], [1], [0, 0, 1, 1], [], []>} : vector<16x32xf32>, vector<32x96xf32>, vector<16x96xf32> -> vector<16x96xf32>
    %c0_14 = arith.constant 0 : index
    %c0_15 = arith.constant 0 : index
    %28 = vector.load %arg3[%c0_14, %c0_15] : memref<1x96xf32, #tpu.memory_space<vmem>>, vector<1x96xf32>
    %29 = vector.broadcast %28 : vector<1x96xf32> to vector<16x96xf32>
    %30 = arith.addf %27, %29 : vector<16x96xf32>
    %c0_16 = arith.constant 0 : index
    %c0_17 = arith.constant 0 : index
    %31 = vector.load %arg4[%c0_16, %c0_17] : memref<32x32xf32, #tpu.memory_space<vmem>>, vector<32x32xf32>
    %32 = vector.extract_strided_slice %30 {offsets = [0, 0], sizes = [16, 8], strides = [1, 1]} : vector<16x96xf32> to vector<16x8xf32>
    %33 = vector.extract_strided_slice %30 {offsets = [0, 32], sizes = [16, 8], strides = [1, 1]} : vector<16x96xf32> to vector<16x8xf32>
    %34 = vector.extract_strided_slice %30 {offsets = [0, 64], sizes = [16, 8], strides = [1, 1]} : vector<16x96xf32> to vector<16x8xf32>
    %35 = tpu.transpose %33, [1, 0] : vector<16x8xf32> -> vector<8x16xf32>
    %cst_18 = arith.constant dense<0.000000e+00> : vector<16x16xf32>
    %36 = tpu.matmul %32, %35, %cst_18 {dimension_numbers = #tpu.dot_dimension_numbers<[1], [0], [0], [1], [0, 0, 1, 1], [], []>} : vector<16x8xf32>, vector<8x16xf32>, vector<16x16xf32> -> vector<16x16xf32>
    %cst_19 = arith.constant 0.353553385 : f32
    %37 = vector.broadcast %cst_19 : f32 to vector<16x16xf32>
    %38 = arith.mulf %36, %37 : vector<16x16xf32>
    %39 = arith.addf %38, %1 : vector<16x16xf32>
    %cst_20 = arith.constant dense<0xFF800000> : vector<16xf32>
    %40 = vector.multi_reduction <maximumf>, %39, %cst_20 [1] : vector<16x16xf32> to vector<16xf32>
    %41 = vector.shape_cast %40 : vector<16xf32> to vector<16x1xf32>
    %42 = vector.broadcast %41 : vector<16x1xf32> to vector<16x16xf32>
    %43 = arith.subf %39, %42 : vector<16x16xf32>
    %44 = math.exp %43 : vector<16x16xf32>
    %cst_21 = arith.constant dense<0.000000e+00> : vector<16xf32>
    %45 = vector.multi_reduction <add>, %44, %cst_21 [1] : vector<16x16xf32> to vector<16xf32>
    %46 = vector.shape_cast %45 : vector<16xf32> to vector<16x1xf32>
    %47 = tpu.reciprocal %46 {approx = true} : vector<16x1xf32> -> vector<16x1xf32>
    %48 = vector.broadcast %47 : vector<16x1xf32> to vector<16x16xf32>
    %49 = arith.mulf %44, %48 : vector<16x16xf32>
    %cst_22 = arith.constant dense<0.000000e+00> : vector<16x8xf32>
    %50 = tpu.matmul %49, %34, %cst_22 {dimension_numbers = #tpu.dot_dimension_numbers<[1], [0], [0], [1], [0, 0, 1, 1], [], []>} : vector<16x16xf32>, vector<16x8xf32>, vector<16x8xf32> -> vector<16x8xf32>
    %51 = vector.extract_strided_slice %31 {offsets = [0, 0], sizes = [8, 32], strides = [1, 1]} : vector<32x32xf32> to vector<8x32xf32>
    %cst_23 = arith.constant dense<0.000000e+00> : vector<16x32xf32>
    %52 = tpu.matmul %50, %51, %cst_23 {dimension_numbers = #tpu.dot_dimension_numbers<[1], [0], [0], [1], [0, 0, 1, 1], [], []>} : vector<16x8xf32>, vector<8x32xf32>, vector<16x32xf32> -> vector<16x32xf32>
    %53 = vector.extract_strided_slice %30 {offsets = [0, 8], sizes = [16, 8], strides = [1, 1]} : vector<16x96xf32> to vector<16x8xf32>
    %54 = vector.extract_strided_slice %30 {offsets = [0, 40], sizes = [16, 8], strides = [1, 1]} : vector<16x96xf32> to vector<16x8xf32>
    %55 = vector.extract_strided_slice %30 {offsets = [0, 72], sizes = [16, 8], strides = [1, 1]} : vector<16x96xf32> to vector<16x8xf32>
    %56 = tpu.transpose %54, [1, 0] : vector<16x8xf32> -> vector<8x16xf32>
    %cst_24 = arith.constant dense<0.000000e+00> : vector<16x16xf32>
    %57 = tpu.matmul %53, %56, %cst_24 {dimension_numbers = #tpu.dot_dimension_numbers<[1], [0], [0], [1], [0, 0, 1, 1], [], []>} : vector<16x8xf32>, vector<8x16xf32>, vector<16x16xf32> -> vector<16x16xf32>
    %cst_25 = arith.constant 0.353553385 : f32
    %58 = vector.broadcast %cst_25 : f32 to vector<16x16xf32>
    %59 = arith.mulf %57, %58 : vector<16x16xf32>
    %60 = arith.addf %59, %1 : vector<16x16xf32>
    %cst_26 = arith.constant dense<0xFF800000> : vector<16xf32>
    %61 = vector.multi_reduction <maximumf>, %60, %cst_26 [1] : vector<16x16xf32> to vector<16xf32>
    %62 = vector.shape_cast %61 : vector<16xf32> to vector<16x1xf32>
    %63 = vector.broadcast %62 : vector<16x1xf32> to vector<16x16xf32>
    %64 = arith.subf %60, %63 : vector<16x16xf32>
    %65 = math.exp %64 : vector<16x16xf32>
    %cst_27 = arith.constant dense<0.000000e+00> : vector<16xf32>
    %66 = vector.multi_reduction <add>, %65, %cst_27 [1] : vector<16x16xf32> to vector<16xf32>
    %67 = vector.shape_cast %66 : vector<16xf32> to vector<16x1xf32>
    %68 = tpu.reciprocal %67 {approx = true} : vector<16x1xf32> -> vector<16x1xf32>
    %69 = vector.broadcast %68 : vector<16x1xf32> to vector<16x16xf32>
    %70 = arith.mulf %65, %69 : vector<16x16xf32>
    %cst_28 = arith.constant dense<0.000000e+00> : vector<16x8xf32>
    %71 = tpu.matmul %70, %55, %cst_28 {dimension_numbers = #tpu.dot_dimension_numbers<[1], [0], [0], [1], [0, 0, 1, 1], [], []>} : vector<16x16xf32>, vector<16x8xf32>, vector<16x8xf32> -> vector<16x8xf32>
    %72 = vector.extract_strided_slice %31 {offsets = [8, 0], sizes = [8, 32], strides = [1, 1]} : vector<32x32xf32> to vector<8x32xf32>
    %cst_29 = arith.constant dense<0.000000e+00> : vector<16x32xf32>
    %73 = tpu.matmul %71, %72, %cst_29 {dimension_numbers = #tpu.dot_dimension_numbers<[1], [0], [0], [1], [0, 0, 1, 1], [], []>} : vector<16x8xf32>, vector<8x32xf32>, vector<16x32xf32> -> vector<16x32xf32>
    %74 = arith.addf %52, %73 : vector<16x32xf32>
    %75 = vector.extract_strided_slice %30 {offsets = [0, 16], sizes = [16, 8], strides = [1, 1]} : vector<16x96xf32> to vector<16x8xf32>
    %76 = vector.extract_strided_slice %30 {offsets = [0, 48], sizes = [16, 8], strides = [1, 1]} : vector<16x96xf32> to vector<16x8xf32>
    %77 = vector.extract_strided_slice %30 {offsets = [0, 80], sizes = [16, 8], strides = [1, 1]} : vector<16x96xf32> to vector<16x8xf32>
    %78 = tpu.transpose %76, [1, 0] : vector<16x8xf32> -> vector<8x16xf32>
    %cst_30 = arith.constant dense<0.000000e+00> : vector<16x16xf32>
    %79 = tpu.matmul %75, %78, %cst_30 {dimension_numbers = #tpu.dot_dimension_numbers<[1], [0], [0], [1], [0, 0, 1, 1], [], []>} : vector<16x8xf32>, vector<8x16xf32>, vector<16x16xf32> -> vector<16x16xf32>
    %cst_31 = arith.constant 0.353553385 : f32
    %80 = vector.broadcast %cst_31 : f32 to vector<16x16xf32>
    %81 = arith.mulf %79, %80 : vector<16x16xf32>
    %82 = arith.addf %81, %1 : vector<16x16xf32>
    %cst_32 = arith.constant dense<0xFF800000> : vector<16xf32>
    %83 = vector.multi_reduction <maximumf>, %82, %cst_32 [1] : vector<16x16xf32> to vector<16xf32>
    %84 = vector.shape_cast %83 : vector<16xf32> to vector<16x1xf32>
    %85 = vector.broadcast %84 : vector<16x1xf32> to vector<16x16xf32>
    %86 = arith.subf %82, %85 : vector<16x16xf32>
    %87 = math.exp %86 : vector<16x16xf32>
    %cst_33 = arith.constant dense<0.000000e+00> : vector<16xf32>
    %88 = vector.multi_reduction <add>, %87, %cst_33 [1] : vector<16x16xf32> to vector<16xf32>
    %89 = vector.shape_cast %88 : vector<16xf32> to vector<16x1xf32>
    %90 = tpu.reciprocal %89 {approx = true} : vector<16x1xf32> -> vector<16x1xf32>
    %91 = vector.broadcast %90 : vector<16x1xf32> to vector<16x16xf32>
    %92 = arith.mulf %87, %91 : vector<16x16xf32>
    %cst_34 = arith.constant dense<0.000000e+00> : vector<16x8xf32>
    %93 = tpu.matmul %92, %77, %cst_34 {dimension_numbers = #tpu.dot_dimension_numbers<[1], [0], [0], [1], [0, 0, 1, 1], [], []>} : vector<16x16xf32>, vector<16x8xf32>, vector<16x8xf32> -> vector<16x8xf32>
    %94 = vector.extract_strided_slice %31 {offsets = [16, 0], sizes = [8, 32], strides = [1, 1]} : vector<32x32xf32> to vector<8x32xf32>
    %cst_35 = arith.constant dense<0.000000e+00> : vector<16x32xf32>
    %95 = tpu.matmul %93, %94, %cst_35 {dimension_numbers = #tpu.dot_dimension_numbers<[1], [0], [0], [1], [0, 0, 1, 1], [], []>} : vector<16x8xf32>, vector<8x32xf32>, vector<16x32xf32> -> vector<16x32xf32>
    %96 = arith.addf %74, %95 : vector<16x32xf32>
    %97 = vector.extract_strided_slice %30 {offsets = [0, 24], sizes = [16, 8], strides = [1, 1]} : vector<16x96xf32> to vector<16x8xf32>
    %98 = vector.extract_strided_slice %30 {offsets = [0, 56], sizes = [16, 8], strides = [1, 1]} : vector<16x96xf32> to vector<16x8xf32>
    %99 = vector.extract_strided_slice %30 {offsets = [0, 88], sizes = [16, 8], strides = [1, 1]} : vector<16x96xf32> to vector<16x8xf32>
    %100 = tpu.transpose %98, [1, 0] : vector<16x8xf32> -> vector<8x16xf32>
    %cst_36 = arith.constant dense<0.000000e+00> : vector<16x16xf32>
    %101 = tpu.matmul %97, %100, %cst_36 {dimension_numbers = #tpu.dot_dimension_numbers<[1], [0], [0], [1], [0, 0, 1, 1], [], []>} : vector<16x8xf32>, vector<8x16xf32>, vector<16x16xf32> -> vector<16x16xf32>
    %cst_37 = arith.constant 0.353553385 : f32
    %102 = vector.broadcast %cst_37 : f32 to vector<16x16xf32>
    %103 = arith.mulf %101, %102 : vector<16x16xf32>
    %104 = arith.addf %103, %1 : vector<16x16xf32>
    %cst_38 = arith.constant dense<0xFF800000> : vector<16xf32>
    %105 = vector.multi_reduction <maximumf>, %104, %cst_38 [1] : vector<16x16xf32> to vector<16xf32>
    %106 = vector.shape_cast %105 : vector<16xf32> to vector<16x1xf32>
    %107 = vector.broadcast %106 : vector<16x1xf32> to vector<16x16xf32>
    %108 = arith.subf %104, %107 : vector<16x16xf32>
    %109 = math.exp %108 : vector<16x16xf32>
    %cst_39 = arith.constant dense<0.000000e+00> : vector<16xf32>
    %110 = vector.multi_reduction <add>, %109, %cst_39 [1] : vector<16x16xf32> to vector<16xf32>
    %111 = vector.shape_cast %110 : vector<16xf32> to vector<16x1xf32>
    %112 = tpu.reciprocal %111 {approx = true} : vector<16x1xf32> -> vector<16x1xf32>
    %113 = vector.broadcast %112 : vector<16x1xf32> to vector<16x16xf32>
    %114 = arith.mulf %109, %113 : vector<16x16xf32>
    %cst_40 = arith.constant dense<0.000000e+00> : vector<16x8xf32>
    %115 = tpu.matmul %114, %99, %cst_40 {dimension_numbers = #tpu.dot_dimension_numbers<[1], [0], [0], [1], [0, 0, 1, 1], [], []>} : vector<16x16xf32>, vector<16x8xf32>, vector<16x8xf32> -> vector<16x8xf32>
    %116 = vector.extract_strided_slice %31 {offsets = [24, 0], sizes = [8, 32], strides = [1, 1]} : vector<32x32xf32> to vector<8x32xf32>
    %cst_41 = arith.constant dense<0.000000e+00> : vector<16x32xf32>
    %117 = tpu.matmul %115, %116, %cst_41 {dimension_numbers = #tpu.dot_dimension_numbers<[1], [0], [0], [1], [0, 0, 1, 1], [], []>} : vector<16x8xf32>, vector<8x32xf32>, vector<16x32xf32> -> vector<16x32xf32>
    %118 = arith.addf %96, %117 : vector<16x32xf32>
    %119 = arith.addf %0, %118 : vector<16x32xf32>
    %c0_42 = arith.constant 0 : index
    %c0_43 = arith.constant 0 : index
    %120 = vector.load %arg5[%c0_42, %c0_43] : memref<1x32xf32, #tpu.memory_space<vmem>>, vector<1x32xf32>
    %121 = vector.broadcast %120 : vector<1x32xf32> to vector<16x32xf32>
    %122 = arith.addf %119, %121 : vector<16x32xf32>
    %c0_44 = arith.constant 0 : index
    %c0_45 = arith.constant 0 : index
    %123 = vector.load %arg8[%c0_44, %c0_45] : memref<1x32xf32, #tpu.memory_space<vmem>>, vector<1x32xf32>
    %c0_46 = arith.constant 0 : index
    %c0_47 = arith.constant 0 : index
    %124 = vector.load %arg9[%c0_46, %c0_47] : memref<1x32xf32, #tpu.memory_space<vmem>>, vector<1x32xf32>
    %cst_48 = arith.constant dense<0.000000e+00> : vector<16xf32>
    %125 = vector.multi_reduction <add>, %122, %cst_48 [1] : vector<16x32xf32> to vector<16xf32>
    %126 = vector.shape_cast %125 : vector<16xf32> to vector<16x1xf32>
    %cst_49 = arith.constant 3.200000e+01 : f32
    %127 = vector.broadcast %cst_49 : f32 to vector<16x1xf32>
    %128 = arith.divf %126, %127 : vector<16x1xf32>
    %129 = vector.broadcast %128 : vector<16x1xf32> to vector<16x32xf32>
    %130 = arith.subf %122, %129 : vector<16x32xf32>
    %131 = arith.mulf %130, %130 : vector<16x32xf32>
    %cst_50 = arith.constant dense<0.000000e+00> : vector<16xf32>
    %132 = vector.multi_reduction <add>, %131, %cst_50 [1] : vector<16x32xf32> to vector<16xf32>
    %133 = vector.shape_cast %132 : vector<16xf32> to vector<16x1xf32>
    %cst_51 = arith.constant 3.200000e+01 : f32
    %134 = vector.broadcast %cst_51 : f32 to vector<16x1xf32>
    %135 = arith.divf %133, %134 : vector<16x1xf32>
    %136 = vector.broadcast %128 : vector<16x1xf32> to vector<16x32xf32>
    %137 = arith.subf %122, %136 : vector<16x32xf32>
    %cst_52 = arith.constant 9.99999974E-6 : f32
    %138 = vector.broadcast %cst_52 : f32 to vector<16x1xf32>
    %139 = arith.addf %135, %138 : vector<16x1xf32>
    %140 = math.rsqrt %139 : vector<16x1xf32>
    %141 = vector.broadcast %140 : vector<16x1xf32> to vector<16x32xf32>
    %142 = arith.mulf %137, %141 : vector<16x32xf32>
    %143 = vector.broadcast %123 : vector<1x32xf32> to vector<16x32xf32>
    %144 = arith.mulf %142, %143 : vector<16x32xf32>
    %145 = vector.broadcast %124 : vector<1x32xf32> to vector<16x32xf32>
    %146 = arith.addf %144, %145 : vector<16x32xf32>
    %c0_53 = arith.constant 0 : index
    %c0_54 = arith.constant 0 : index
    %147 = vector.load %arg10[%c0_53, %c0_54] : memref<32x128xf32, #tpu.memory_space<vmem>>, vector<32x128xf32>
    %cst_55 = arith.constant dense<0.000000e+00> : vector<16x128xf32>
    %148 = tpu.matmul %146, %147, %cst_55 {dimension_numbers = #tpu.dot_dimension_numbers<[1], [0], [0], [1], [0, 0, 1, 1], [], []>} : vector<16x32xf32>, vector<32x128xf32>, vector<16x128xf32> -> vector<16x128xf32>
    %c0_56 = arith.constant 0 : index
    %c0_57 = arith.constant 0 : index
    %149 = vector.load %arg11[%c0_56, %c0_57] : memref<1x128xf32, #tpu.memory_space<vmem>>, vector<1x128xf32>
    %150 = vector.broadcast %149 : vector<1x128xf32> to vector<16x128xf32>
    %151 = arith.addf %148, %150 : vector<16x128xf32>
    %cst_58 = arith.constant 5.000000e-01 : f32
    %152 = vector.broadcast %cst_58 : f32 to vector<16x128xf32>
    %153 = arith.mulf %152, %151 : vector<16x128xf32>
    %cst_59 = arith.constant 0.707106769 : f32
    %154 = vector.broadcast %cst_59 : f32 to vector<16x128xf32>
    %155 = arith.mulf %151, %154 : vector<16x128xf32>
    %156 = math.erf %155 : vector<16x128xf32>
    %cst_60 = arith.constant 1.000000e+00 : f32
    %157 = vector.broadcast %cst_60 : f32 to vector<16x128xf32>
    %158 = arith.addf %157, %156 : vector<16x128xf32>
    %159 = arith.mulf %153, %158 : vector<16x128xf32>
    %c0_61 = arith.constant 0 : index
    %c0_62 = arith.constant 0 : index
    %160 = vector.load %arg12[%c0_61, %c0_62] : memref<128x32xf32, #tpu.memory_space<vmem>>, vector<128x32xf32>
    %cst_63 = arith.constant dense<0.000000e+00> : vector<16x32xf32>
    %161 = tpu.matmul %159, %160, %cst_63 {dimension_numbers = #tpu.dot_dimension_numbers<[1], [0], [0], [1], [0, 0, 1, 1], [], []>} : vector<16x128xf32>, vector<128x32xf32>, vector<16x32xf32> -> vector<16x32xf32>
    %c0_64 = arith.constant 0 : index
    %c0_65 = arith.constant 0 : index
    %162 = vector.load %arg13[%c0_64, %c0_65] : memref<1x32xf32, #tpu.memory_space<vmem>>, vector<1x32xf32>
    %163 = vector.broadcast %162 : vector<1x32xf32> to vector<16x32xf32>
    %164 = arith.addf %161, %163 : vector<16x32xf32>
    %165 = arith.addf %122, %164 : vector<16x32xf32>
    %c0_66 = arith.constant 0 : index
    %c0_67 = arith.constant 0 : index
    %166 = vector.load %arg18[%c0_66, %c0_67] : memref<1x32xf32, #tpu.memory_space<vmem>>, vector<1x32xf32>
    %c0_68 = arith.constant 0 : index
    %c0_69 = arith.constant 0 : index
    %167 = vector.load %arg19[%c0_68, %c0_69] : memref<1x32xf32, #tpu.memory_space<vmem>>, vector<1x32xf32>
    %cst_70 = arith.constant dense<0.000000e+00> : vector<16xf32>
    %168 = vector.multi_reduction <add>, %165, %cst_70 [1] : vector<16x32xf32> to vector<16xf32>
    %169 = vector.shape_cast %168 : vector<16xf32> to vector<16x1xf32>
    %cst_71 = arith.constant 3.200000e+01 : f32
    %170 = vector.broadcast %cst_71 : f32 to vector<16x1xf32>
    %171 = arith.divf %169, %170 : vector<16x1xf32>
    %172 = vector.broadcast %171 : vector<16x1xf32> to vector<16x32xf32>
    %173 = arith.subf %165, %172 : vector<16x32xf32>
    %174 = arith.mulf %173, %173 : vector<16x32xf32>
    %cst_72 = arith.constant dense<0.000000e+00> : vector<16xf32>
    %175 = vector.multi_reduction <add>, %174, %cst_72 [1] : vector<16x32xf32> to vector<16xf32>
    %176 = vector.shape_cast %175 : vector<16xf32> to vector<16x1xf32>
    %cst_73 = arith.constant 3.200000e+01 : f32
    %177 = vector.broadcast %cst_73 : f32 to vector<16x1xf32>
    %178 = arith.divf %176, %177 : vector<16x1xf32>
    %179 = vector.broadcast %171 : vector<16x1xf32> to vector<16x32xf32>
    %180 = arith.subf %165, %179 : vector<16x32xf32>
    %cst_74 = arith.constant 9.99999974E-6 : f32
    %181 = vector.broadcast %cst_74 : f32 to vector<16x1xf32>
    %182 = arith.addf %178, %181 : vector<16x1xf32>
    %183 = math.rsqrt %182 : vector<16x1xf32>
    %184 = vector.broadcast %183 : vector<16x1xf32> to vector<16x32xf32>
    %185 = arith.mulf %180, %184 : vector<16x32xf32>
    %186 = vector.broadcast %166 : vector<1x32xf32> to vector<16x32xf32>
    %187 = arith.mulf %185, %186 : vector<16x32xf32>
    %188 = vector.broadcast %167 : vector<1x32xf32> to vector<16x32xf32>
    %189 = arith.addf %187, %188 : vector<16x32xf32>
    %c0_75 = arith.constant 0 : index
    %c0_76 = arith.constant 0 : index
    %190 = vector.load %arg14[%c0_75, %c0_76] : memref<32x96xf32, #tpu.memory_space<vmem>>, vector<32x96xf32>
    %cst_77 = arith.constant dense<0.000000e+00> : vector<16x96xf32>
    %191 = tpu.matmul %189, %190, %cst_77 {dimension_numbers = #tpu.dot_dimension_numbers<[1], [0], [0], [1], [0, 0, 1, 1], [], []>} : vector<16x32xf32>, vector<32x96xf32>, vector<16x96xf32> -> vector<16x96xf32>
    %c0_78 = arith.constant 0 : index
    %c0_79 = arith.constant 0 : index
    %192 = vector.load %arg15[%c0_78, %c0_79] : memref<1x96xf32, #tpu.memory_space<vmem>>, vector<1x96xf32>
    %193 = vector.broadcast %192 : vector<1x96xf32> to vector<16x96xf32>
    %194 = arith.addf %191, %193 : vector<16x96xf32>
    %c0_80 = arith.constant 0 : index
    %c0_81 = arith.constant 0 : index
    %195 = vector.load %arg16[%c0_80, %c0_81] : memref<32x32xf32, #tpu.memory_space<vmem>>, vector<32x32xf32>
    %196 = vector.extract_strided_slice %194 {offsets = [0, 0], sizes = [16, 8], strides = [1, 1]} : vector<16x96xf32> to vector<16x8xf32>
    %197 = vector.extract_strided_slice %194 {offsets = [0, 32], sizes = [16, 8], strides = [1, 1]} : vector<16x96xf32> to vector<16x8xf32>
    %198 = vector.extract_strided_slice %194 {offsets = [0, 64], sizes = [16, 8], strides = [1, 1]} : vector<16x96xf32> to vector<16x8xf32>
    %199 = tpu.transpose %197, [1, 0] : vector<16x8xf32> -> vector<8x16xf32>
    %cst_82 = arith.constant dense<0.000000e+00> : vector<16x16xf32>
    %200 = tpu.matmul %196, %199, %cst_82 {dimension_numbers = #tpu.dot_dimension_numbers<[1], [0], [0], [1], [0, 0, 1, 1], [], []>} : vector<16x8xf32>, vector<8x16xf32>, vector<16x16xf32> -> vector<16x16xf32>
    %cst_83 = arith.constant 0.353553385 : f32
    %201 = vector.broadcast %cst_83 : f32 to vector<16x16xf32>
    %202 = arith.mulf %200, %201 : vector<16x16xf32>
    %203 = arith.addf %202, %1 : vector<16x16xf32>
    %cst_84 = arith.constant dense<0xFF800000> : vector<16xf32>
    %204 = vector.multi_reduction <maximumf>, %203, %cst_84 [1] : vector<16x16xf32> to vector<16xf32>
    %205 = vector.shape_cast %204 : vector<16xf32> to vector<16x1xf32>
    %206 = vector.broadcast %205 : vector<16x1xf32> to vector<16x16xf32>
    %207 = arith.subf %203, %206 : vector<16x16xf32>
    %208 = math.exp %207 : vector<16x16xf32>
    %cst_85 = arith.constant dense<0.000000e+00> : vector<16xf32>
    %209 = vector.multi_reduction <add>, %208, %cst_85 [1] : vector<16x16xf32> to vector<16xf32>
    %210 = vector.shape_cast %209 : vector<16xf32> to vector<16x1xf32>
    %211 = tpu.reciprocal %210 {approx = true} : vector<16x1xf32> -> vector<16x1xf32>
    %212 = vector.broadcast %211 : vector<16x1xf32> to vector<16x16xf32>
    %213 = arith.mulf %208, %212 : vector<16x16xf32>
    %cst_86 = arith.constant dense<0.000000e+00> : vector<16x8xf32>
    %214 = tpu.matmul %213, %198, %cst_86 {dimension_numbers = #tpu.dot_dimension_numbers<[1], [0], [0], [1], [0, 0, 1, 1], [], []>} : vector<16x16xf32>, vector<16x8xf32>, vector<16x8xf32> -> vector<16x8xf32>
    %215 = vector.extract_strided_slice %195 {offsets = [0, 0], sizes = [8, 32], strides = [1, 1]} : vector<32x32xf32> to vector<8x32xf32>
    %cst_87 = arith.constant dense<0.000000e+00> : vector<16x32xf32>
    %216 = tpu.matmul %214, %215, %cst_87 {dimension_numbers = #tpu.dot_dimension_numbers<[1], [0], [0], [1], [0, 0, 1, 1], [], []>} : vector<16x8xf32>, vector<8x32xf32>, vector<16x32xf32> -> vector<16x32xf32>
    %217 = vector.extract_strided_slice %194 {offsets = [0, 8], sizes = [16, 8], strides = [1, 1]} : vector<16x96xf32> to vector<16x8xf32>
    %218 = vector.extract_strided_slice %194 {offsets = [0, 40], sizes = [16, 8], strides = [1, 1]} : vector<16x96xf32> to vector<16x8xf32>
    %219 = vector.extract_strided_slice %194 {offsets = [0, 72], sizes = [16, 8], strides = [1, 1]} : vector<16x96xf32> to vector<16x8xf32>
    %220 = tpu.transpose %218, [1, 0] : vector<16x8xf32> -> vector<8x16xf32>
    %cst_88 = arith.constant dense<0.000000e+00> : vector<16x16xf32>
    %221 = tpu.matmul %217, %220, %cst_88 {dimension_numbers = #tpu.dot_dimension_numbers<[1], [0], [0], [1], [0, 0, 1, 1], [], []>} : vector<16x8xf32>, vector<8x16xf32>, vector<16x16xf32> -> vector<16x16xf32>
    %cst_89 = arith.constant 0.353553385 : f32
    %222 = vector.broadcast %cst_89 : f32 to vector<16x16xf32>
    %223 = arith.mulf %221, %222 : vector<16x16xf32>
    %224 = arith.addf %223, %1 : vector<16x16xf32>
    %cst_90 = arith.constant dense<0xFF800000> : vector<16xf32>
    %225 = vector.multi_reduction <maximumf>, %224, %cst_90 [1] : vector<16x16xf32> to vector<16xf32>
    %226 = vector.shape_cast %225 : vector<16xf32> to vector<16x1xf32>
    %227 = vector.broadcast %226 : vector<16x1xf32> to vector<16x16xf32>
    %228 = arith.subf %224, %227 : vector<16x16xf32>
    %229 = math.exp %228 : vector<16x16xf32>
    %cst_91 = arith.constant dense<0.000000e+00> : vector<16xf32>
    %230 = vector.multi_reduction <add>, %229, %cst_91 [1] : vector<16x16xf32> to vector<16xf32>
    %231 = vector.shape_cast %230 : vector<16xf32> to vector<16x1xf32>
    %232 = tpu.reciprocal %231 {approx = true} : vector<16x1xf32> -> vector<16x1xf32>
    %233 = vector.broadcast %232 : vector<16x1xf32> to vector<16x16xf32>
    %234 = arith.mulf %229, %233 : vector<16x16xf32>
    %cst_92 = arith.constant dense<0.000000e+00> : vector<16x8xf32>
    %235 = tpu.matmul %234, %219, %cst_92 {dimension_numbers = #tpu.dot_dimension_numbers<[1], [0], [0], [1], [0, 0, 1, 1], [], []>} : vector<16x16xf32>, vector<16x8xf32>, vector<16x8xf32> -> vector<16x8xf32>
    %236 = vector.extract_strided_slice %195 {offsets = [8, 0], sizes = [8, 32], strides = [1, 1]} : vector<32x32xf32> to vector<8x32xf32>
    %cst_93 = arith.constant dense<0.000000e+00> : vector<16x32xf32>
    %237 = tpu.matmul %235, %236, %cst_93 {dimension_numbers = #tpu.dot_dimension_numbers<[1], [0], [0], [1], [0, 0, 1, 1], [], []>} : vector<16x8xf32>, vector<8x32xf32>, vector<16x32xf32> -> vector<16x32xf32>
    %238 = arith.addf %216, %237 : vector<16x32xf32>
    %239 = vector.extract_strided_slice %194 {offsets = [0, 16], sizes = [16, 8], strides = [1, 1]} : vector<16x96xf32> to vector<16x8xf32>
    %240 = vector.extract_strided_slice %194 {offsets = [0, 48], sizes = [16, 8], strides = [1, 1]} : vector<16x96xf32> to vector<16x8xf32>
    %241 = vector.extract_strided_slice %194 {offsets = [0, 80], sizes = [16, 8], strides = [1, 1]} : vector<16x96xf32> to vector<16x8xf32>
    %242 = tpu.transpose %240, [1, 0] : vector<16x8xf32> -> vector<8x16xf32>
    %cst_94 = arith.constant dense<0.000000e+00> : vector<16x16xf32>
    %243 = tpu.matmul %239, %242, %cst_94 {dimension_numbers = #tpu.dot_dimension_numbers<[1], [0], [0], [1], [0, 0, 1, 1], [], []>} : vector<16x8xf32>, vector<8x16xf32>, vector<16x16xf32> -> vector<16x16xf32>
    %cst_95 = arith.constant 0.353553385 : f32
    %244 = vector.broadcast %cst_95 : f32 to vector<16x16xf32>
    %245 = arith.mulf %243, %244 : vector<16x16xf32>
    %246 = arith.addf %245, %1 : vector<16x16xf32>
    %cst_96 = arith.constant dense<0xFF800000> : vector<16xf32>
    %247 = vector.multi_reduction <maximumf>, %246, %cst_96 [1] : vector<16x16xf32> to vector<16xf32>
    %248 = vector.shape_cast %247 : vector<16xf32> to vector<16x1xf32>
    %249 = vector.broadcast %248 : vector<16x1xf32> to vector<16x16xf32>
    %250 = arith.subf %246, %249 : vector<16x16xf32>
    %251 = math.exp %250 : vector<16x16xf32>
    %cst_97 = arith.constant dense<0.000000e+00> : vector<16xf32>
    %252 = vector.multi_reduction <add>, %251, %cst_97 [1] : vector<16x16xf32> to vector<16xf32>
    %253 = vector.shape_cast %252 : vector<16xf32> to vector<16x1xf32>
    %254 = tpu.reciprocal %253 {approx = true} : vector<16x1xf32> -> vector<16x1xf32>
    %255 = vector.broadcast %254 : vector<16x1xf32> to vector<16x16xf32>
    %256 = arith.mulf %251, %255 : vector<16x16xf32>
    %cst_98 = arith.constant dense<0.000000e+00> : vector<16x8xf32>
    %257 = tpu.matmul %256, %241, %cst_98 {dimension_numbers = #tpu.dot_dimension_numbers<[1], [0], [0], [1], [0, 0, 1, 1], [], []>} : vector<16x16xf32>, vector<16x8xf32>, vector<16x8xf32> -> vector<16x8xf32>
    %258 = vector.extract_strided_slice %195 {offsets = [16, 0], sizes = [8, 32], strides = [1, 1]} : vector<32x32xf32> to vector<8x32xf32>
    %cst_99 = arith.constant dense<0.000000e+00> : vector<16x32xf32>
    %259 = tpu.matmul %257, %258, %cst_99 {dimension_numbers = #tpu.dot_dimension_numbers<[1], [0], [0], [1], [0, 0, 1, 1], [], []>} : vector<16x8xf32>, vector<8x32xf32>, vector<16x32xf32> -> vector<16x32xf32>
    %260 = arith.addf %238, %259 : vector<16x32xf32>
    %261 = vector.extract_strided_slice %194 {offsets = [0, 24], sizes = [16, 8], strides = [1, 1]} : vector<16x96xf32> to vector<16x8xf32>
    %262 = vector.extract_strided_slice %194 {offsets = [0, 56], sizes = [16, 8], strides = [1, 1]} : vector<16x96xf32> to vector<16x8xf32>
    %263 = vector.extract_strided_slice %194 {offsets = [0, 88], sizes = [16, 8], strides = [1, 1]} : vector<16x96xf32> to vector<16x8xf32>
    %264 = tpu.transpose %262, [1, 0] : vector<16x8xf32> -> vector<8x16xf32>
    %cst_100 = arith.constant dense<0.000000e+00> : vector<16x16xf32>
    %265 = tpu.matmul %261, %264, %cst_100 {dimension_numbers = #tpu.dot_dimension_numbers<[1], [0], [0], [1], [0, 0, 1, 1], [], []>} : vector<16x8xf32>, vector<8x16xf32>, vector<16x16xf32> -> vector<16x16xf32>
    %cst_101 = arith.constant 0.353553385 : f32
    %266 = vector.broadcast %cst_101 : f32 to vector<16x16xf32>
    %267 = arith.mulf %265, %266 : vector<16x16xf32>
    %268 = arith.addf %267, %1 : vector<16x16xf32>
    %cst_102 = arith.constant dense<0xFF800000> : vector<16xf32>
    %269 = vector.multi_reduction <maximumf>, %268, %cst_102 [1] : vector<16x16xf32> to vector<16xf32>
    %270 = vector.shape_cast %269 : vector<16xf32> to vector<16x1xf32>
    %271 = vector.broadcast %270 : vector<16x1xf32> to vector<16x16xf32>
    %272 = arith.subf %268, %271 : vector<16x16xf32>
    %273 = math.exp %272 : vector<16x16xf32>
    %cst_103 = arith.constant dense<0.000000e+00> : vector<16xf32>
    %274 = vector.multi_reduction <add>, %273, %cst_103 [1] : vector<16x16xf32> to vector<16xf32>
    %275 = vector.shape_cast %274 : vector<16xf32> to vector<16x1xf32>
    %276 = tpu.reciprocal %275 {approx = true} : vector<16x1xf32> -> vector<16x1xf32>
    %277 = vector.broadcast %276 : vector<16x1xf32> to vector<16x16xf32>
    %278 = arith.mulf %273, %277 : vector<16x16xf32>
    %cst_104 = arith.constant dense<0.000000e+00> : vector<16x8xf32>
    %279 = tpu.matmul %278, %263, %cst_104 {dimension_numbers = #tpu.dot_dimension_numbers<[1], [0], [0], [1], [0, 0, 1, 1], [], []>} : vector<16x16xf32>, vector<16x8xf32>, vector<16x8xf32> -> vector<16x8xf32>
    %280 = vector.extract_strided_slice %195 {offsets = [24, 0], sizes = [8, 32], strides = [1, 1]} : vector<32x32xf32> to vector<8x32xf32>
    %cst_105 = arith.constant dense<0.000000e+00> : vector<16x32xf32>
    %281 = tpu.matmul %279, %280, %cst_105 {dimension_numbers = #tpu.dot_dimension_numbers<[1], [0], [0], [1], [0, 0, 1, 1], [], []>} : vector<16x8xf32>, vector<8x32xf32>, vector<16x32xf32> -> vector<16x32xf32>
    %282 = arith.addf %260, %281 : vector<16x32xf32>
    %283 = arith.addf %165, %282 : vector<16x32xf32>
    %c0_106 = arith.constant 0 : index
    %c0_107 = arith.constant 0 : index
    %284 = vector.load %arg17[%c0_106, %c0_107] : memref<1x32xf32, #tpu.memory_space<vmem>>, vector<1x32xf32>
    %285 = vector.broadcast %284 : vector<1x32xf32> to vector<16x32xf32>
    %286 = arith.addf %283, %285 : vector<16x32xf32>
    %c0_108 = arith.constant 0 : index
    %c0_109 = arith.constant 0 : index
    %287 = vector.load %arg20[%c0_108, %c0_109] : memref<1x32xf32, #tpu.memory_space<vmem>>, vector<1x32xf32>
    %c0_110 = arith.constant 0 : index
    %c0_111 = arith.constant 0 : index
    %288 = vector.load %arg21[%c0_110, %c0_111] : memref<1x32xf32, #tpu.memory_space<vmem>>, vector<1x32xf32>
    %cst_112 = arith.constant dense<0.000000e+00> : vector<16xf32>
    %289 = vector.multi_reduction <add>, %286, %cst_112 [1] : vector<16x32xf32> to vector<16xf32>
    %290 = vector.shape_cast %289 : vector<16xf32> to vector<16x1xf32>
    %cst_113 = arith.constant 3.200000e+01 : f32
    %291 = vector.broadcast %cst_113 : f32 to vector<16x1xf32>
    %292 = arith.divf %290, %291 : vector<16x1xf32>
    %293 = vector.broadcast %292 : vector<16x1xf32> to vector<16x32xf32>
    %294 = arith.subf %286, %293 : vector<16x32xf32>
    %295 = arith.mulf %294, %294 : vector<16x32xf32>
    %cst_114 = arith.constant dense<0.000000e+00> : vector<16xf32>
    %296 = vector.multi_reduction <add>, %295, %cst_114 [1] : vector<16x32xf32> to vector<16xf32>
    %297 = vector.shape_cast %296 : vector<16xf32> to vector<16x1xf32>
    %cst_115 = arith.constant 3.200000e+01 : f32
    %298 = vector.broadcast %cst_115 : f32 to vector<16x1xf32>
    %299 = arith.divf %297, %298 : vector<16x1xf32>
    %300 = vector.broadcast %292 : vector<16x1xf32> to vector<16x32xf32>
    %301 = arith.subf %286, %300 : vector<16x32xf32>
    %cst_116 = arith.constant 9.99999974E-6 : f32
    %302 = vector.broadcast %cst_116 : f32 to vector<16x1xf32>
    %303 = arith.addf %299, %302 : vector<16x1xf32>
    %304 = math.rsqrt %303 : vector<16x1xf32>
    %305 = vector.broadcast %304 : vector<16x1xf32> to vector<16x32xf32>
    %306 = arith.mulf %301, %305 : vector<16x32xf32>
    %307 = vector.broadcast %287 : vector<1x32xf32> to vector<16x32xf32>
    %308 = arith.mulf %306, %307 : vector<16x32xf32>
    %309 = vector.broadcast %288 : vector<1x32xf32> to vector<16x32xf32>
    %310 = arith.addf %308, %309 : vector<16x32xf32>
    %c0_117 = arith.constant 0 : index
    %c0_118 = arith.constant 0 : index
    %311 = vector.load %arg22[%c0_117, %c0_118] : memref<32x128xf32, #tpu.memory_space<vmem>>, vector<32x128xf32>
    %cst_119 = arith.constant dense<0.000000e+00> : vector<16x128xf32>
    %312 = tpu.matmul %310, %311, %cst_119 {dimension_numbers = #tpu.dot_dimension_numbers<[1], [0], [0], [1], [0, 0, 1, 1], [], []>} : vector<16x32xf32>, vector<32x128xf32>, vector<16x128xf32> -> vector<16x128xf32>
    %c0_120 = arith.constant 0 : index
    %c0_121 = arith.constant 0 : index
    %313 = vector.load %arg23[%c0_120, %c0_121] : memref<1x128xf32, #tpu.memory_space<vmem>>, vector<1x128xf32>
    %314 = vector.broadcast %313 : vector<1x128xf32> to vector<16x128xf32>
    %315 = arith.addf %312, %314 : vector<16x128xf32>
    %cst_122 = arith.constant 5.000000e-01 : f32
    %316 = vector.broadcast %cst_122 : f32 to vector<16x128xf32>
    %317 = arith.mulf %316, %315 : vector<16x128xf32>
    %cst_123 = arith.constant 0.707106769 : f32
    %318 = vector.broadcast %cst_123 : f32 to vector<16x128xf32>
    %319 = arith.mulf %315, %318 : vector<16x128xf32>
    %320 = math.erf %319 : vector<16x128xf32>
    %cst_124 = arith.constant 1.000000e+00 : f32
    %321 = vector.broadcast %cst_124 : f32 to vector<16x128xf32>
    %322 = arith.addf %321, %320 : vector<16x128xf32>
    %323 = arith.mulf %317, %322 : vector<16x128xf32>
    %c0_125 = arith.constant 0 : index
    %c0_126 = arith.constant 0 : index
    %324 = vector.load %arg24[%c0_125, %c0_126] : memref<128x32xf32, #tpu.memory_space<vmem>>, vector<128x32xf32>
    %cst_127 = arith.constant dense<0.000000e+00> : vector<16x32xf32>
    %325 = tpu.matmul %323, %324, %cst_127 {dimension_numbers = #tpu.dot_dimension_numbers<[1], [0], [0], [1], [0, 0, 1, 1], [], []>} : vector<16x128xf32>, vector<128x32xf32>, vector<16x32xf32> -> vector<16x32xf32>
    %c0_128 = arith.constant 0 : index
    %c0_129 = arith.constant 0 : index
    %326 = vector.load %arg25[%c0_128, %c0_129] : memref<1x32xf32, #tpu.memory_space<vmem>>, vector<1x32xf32>
    %327 = vector.broadcast %326 : vector<1x32xf32> to vector<16x32xf32>
    %328 = arith.addf %325, %327 : vector<16x32xf32>
    %329 = arith.addf %286, %328 : vector<16x32xf32>
    %c0_130 = arith.constant 0 : index
    %c0_131 = arith.constant 0 : index
    %330 = vector.load %arg26[%c0_130, %c0_131] : memref<1x32xf32, #tpu.memory_space<vmem>>, vector<1x32xf32>
    %c0_132 = arith.constant 0 : index
    %c0_133 = arith.constant 0 : index
    %331 = vector.load %arg27[%c0_132, %c0_133] : memref<1x32xf32, #tpu.memory_space<vmem>>, vector<1x32xf32>
    %cst_134 = arith.constant dense<0.000000e+00> : vector<16xf32>
    %332 = vector.multi_reduction <add>, %329, %cst_134 [1] : vector<16x32xf32> to vector<16xf32>
    %333 = vector.shape_cast %332 : vector<16xf32> to vector<16x1xf32>
    %cst_135 = arith.constant 3.200000e+01 : f32
    %334 = vector.broadcast %cst_135 : f32 to vector<16x1xf32>
    %335 = arith.divf %333, %334 : vector<16x1xf32>
    %336 = vector.broadcast %335 : vector<16x1xf32> to vector<16x32xf32>
    %337 = arith.subf %329, %336 : vector<16x32xf32>
    %338 = arith.mulf %337, %337 : vector<16x32xf32>
    %cst_136 = arith.constant dense<0.000000e+00> : vector<16xf32>
    %339 = vector.multi_reduction <add>, %338, %cst_136 [1] : vector<16x32xf32> to vector<16xf32>
    %340 = vector.shape_cast %339 : vector<16xf32> to vector<16x1xf32>
    %cst_137 = arith.constant 3.200000e+01 : f32
    %341 = vector.broadcast %cst_137 : f32 to vector<16x1xf32>
    %342 = arith.divf %340, %341 : vector<16x1xf32>
    %343 = vector.broadcast %335 : vector<16x1xf32> to vector<16x32xf32>
    %344 = arith.subf %329, %343 : vector<16x32xf32>
    %cst_138 = arith.constant 9.99999974E-6 : f32
    %345 = vector.broadcast %cst_138 : f32 to vector<16x1xf32>
    %346 = arith.addf %342, %345 : vector<16x1xf32>
    %347 = math.rsqrt %346 : vector<16x1xf32>
    %348 = vector.broadcast %347 : vector<16x1xf32> to vector<16x32xf32>
    %349 = arith.mulf %344, %348 : vector<16x32xf32>
    %350 = vector.broadcast %330 : vector<1x32xf32> to vector<16x32xf32>
    %351 = arith.mulf %349, %350 : vector<16x32xf32>
    %352 = vector.broadcast %331 : vector<1x32xf32> to vector<16x32xf32>
    %353 = arith.addf %351, %352 : vector<16x32xf32>
    %c0_139 = arith.constant 0 : index
    %c0_140 = arith.constant 0 : index
    %354 = vector.load %arg28[%c0_139, %c0_140] : memref<32x128xf32, #tpu.memory_space<vmem>>, vector<32x128xf32>
    %cst_141 = arith.constant dense<0.000000e+00> : vector<16x128xf32>
    %355 = tpu.matmul %353, %354, %cst_141 {dimension_numbers = #tpu.dot_dimension_numbers<[1], [0], [0], [1], [0, 0, 1, 1], [], []>} : vector<16x32xf32>, vector<32x128xf32>, vector<16x128xf32> -> vector<16x128xf32>
    %c0_142 = arith.constant 0 : index
    %c0_143 = arith.constant 0 : index
    %356 = vector.load %arg29[%c0_142, %c0_143] : memref<1x128xf32, #tpu.memory_space<vmem>>, vector<1x128xf32>
    %357 = vector.broadcast %356 : vector<1x128xf32> to vector<16x128xf32>
    %358 = arith.addf %355, %357 : vector<16x128xf32>
    %cst_144 = arith.constant dense<0xFF800000> : vector<16xf32>
    %359 = vector.multi_reduction <maximumf>, %358, %cst_144 [1] : vector<16x128xf32> to vector<16xf32>
    %360 = vector.shape_cast %359 : vector<16xf32> to vector<16x1xf32>
    %361 = vector.broadcast %360 : vector<16x1xf32> to vector<16x128xf32>
    %362 = arith.subf %358, %361 : vector<16x128xf32>
    %363 = math.exp %362 : vector<16x128xf32>
    %cst_145 = arith.constant dense<0.000000e+00> : vector<16xf32>
    %364 = vector.multi_reduction <add>, %363, %cst_145 [1] : vector<16x128xf32> to vector<16xf32>
    %365 = vector.shape_cast %364 : vector<16xf32> to vector<16x1xf32>
    %366 = math.log %365 : vector<16x1xf32>
    %367 = vector.broadcast %366 : vector<16x1xf32> to vector<16x128xf32>
    %368 = arith.subf %362, %367 : vector<16x128xf32>
    %c0_146 = arith.constant 0 : index
    %c0_147 = arith.constant 0 : index
    %369 = vector.load %arg30[%c0_146, %c0_147] : memref<16x128xf32, #tpu.memory_space<vmem>>, vector<16x128xf32>
    tpu.vector_store %arg30[%c0_146, %c0_147], %368 {strides = array<i32>} : memref<16x128xf32, #tpu.memory_space<vmem>>, vector<16x128xf32>,
    return
  }
}

</mosaic_0001>

<llo_original>
// kernel: tpu_custom_call.1
$region0: #{tpu_custom_call.1}
  #allocation0 [shape = 'u32[]', space=smem, size = 0x4, offset = 0x4, fixed_abs, tag = 'smem constant byte address 0x4 - core index']
  #allocation1 [shape = 'u32[144,128]{1,0:T(1,128)}', space=vmem, size = 0x12000, scoped, tag = 'internal scratch']
  %s0 = inlined_call_operand.smem [shape: u32[31], index: -1, kind: input, shape index: {}]
  %s1 = sld [smem:[%s0]]
  %s2 = scalar_lea.smem %s0, 1
  %s3 = sld [smem:[%s2]]
  %s4 = scalar_lea.smem %s0, 2
  %s5 = sld [smem:[%s4]]
  %s6 = scalar_lea.smem %s0, 3
  %s7 = sld [smem:[%s6]]
  %s8 = scalar_lea.smem %s0, 4
  %s9 = sld [smem:[%s8]]
  %s10 = scalar_lea.smem %s0, 5
  %s11 = sld [smem:[%s10]]
  %s12 = scalar_lea.smem %s0, 6
  %s13 = sld [smem:[%s12]]
  %s14 = scalar_lea.smem %s0, 7
  %s15 = sld [smem:[%s14]]
  %s16 = scalar_lea.smem %s0, 8
  %s17 = sld [smem:[%s16]]
  %s18 = scalar_lea.smem %s0, 9
  %s19 = sld [smem:[%s18]]
  %s20 = scalar_lea.smem %s0, 10
  %s21 = sld [smem:[%s20]]
  %s22 = scalar_lea.smem %s0, 11
  %s23 = sld [smem:[%s22]]
  %s24 = scalar_lea.smem %s0, 12
  %s25 = sld [smem:[%s24]]
  %s26 = scalar_lea.smem %s0, 13
  %s27 = sld [smem:[%s26]]
  %s28 = scalar_lea.smem %s0, 14
  %s29 = sld [smem:[%s28]]
  %s30 = scalar_lea.smem %s0, 15
  %s31 = sld [smem:[%s30]]
  %s32 = scalar_lea.smem %s0, 16
  %s33 = sld [smem:[%s32]]
  %s34 = scalar_lea.smem %s0, 17
  %s35 = sld [smem:[%s34]]
  %s36 = scalar_lea.smem %s0, 18
  %s37 = sld [smem:[%s36]]
  %s38 = scalar_lea.smem %s0, 19
  %s39 = sld [smem:[%s38]]
  %s40 = scalar_lea.smem %s0, 20
  %s41 = sld [smem:[%s40]]
  %s42 = scalar_lea.smem %s0, 21
  %s43 = sld [smem:[%s42]]
  %s44 = scalar_lea.smem %s0, 22
  %s45 = sld [smem:[%s44]]
  %s46 = scalar_lea.smem %s0, 23
  %s47 = sld [smem:[%s46]]
  %s48 = scalar_lea.smem %s0, 24
  %s49 = sld [smem:[%s48]]
  %s50 = scalar_lea.smem %s0, 25
  %s51 = sld [smem:[%s50]]
  %s52 = scalar_lea.smem %s0, 26
  %s53 = sld [smem:[%s52]]
  %s54 = scalar_lea.smem %s0, 27
  %s55 = sld [smem:[%s54]]
  %s56 = scalar_lea.smem %s0, 28
  %s57 = sld [smem:[%s56]]
  %s58 = scalar_lea.smem %s0, 29
  %s59 = sld [smem:[%s58]]
  %s60 = scalar_lea.smem %s0, 30
  %s61 = sld [smem:[%s60]]
  %s62 = sld [smem:[#allocation0]]
  $region130: #{tpu_custom_call.1} parent=0
    _
  %s64 = ssub.s32 1, %s62
  %s65 = scalar_select 0, %s64, %s62
  $region1: #{tpu_custom_call.1} parent=0
    #allocation2 [shape = 'u8[8192]{0}', space=vmem, size = 0x2000, scoped, tag = 'output window, operand 0, single buffered']
    #allocation3 [shape = 's32[1]{0}', space=sflag, size = 0x4, scoped, tag = 'scoped memory for tpu_custom_call.1']
    %66 = vsyncpa [#allocation3], 0
    // Predicated region
    $region2: #{tpu_custom_call.1} parent=1 // pred_check
      _
    $region3: #{tpu_custom_call.1} parent=1 // pred_check_branch
      %68 = sbr.rel (0) target = $region5
    $region4: #{tpu_custom_call.1} parent=1 // pred_region
      _
    $region5: #{tpu_custom_call.1} parent=1 // pred_fallthru
      _
    // Predicated region
    $region6: #{tpu_custom_call.1} parent=1 // pred_check
      _
    $region7: #{tpu_custom_call.1} parent=1 // pred_check_branch
      %70 = sbr.rel (0) target = $region9
    $region8: #{tpu_custom_call.1} parent=1 // pred_region
      _
    $region9: #{tpu_custom_call.1} parent=1 // pred_fallthru
      _
    // Predicated region
    $region10: #{tpu_custom_call.1} parent=1 // pred_check
      _
    $region11: #{tpu_custom_call.1} parent=1 // pred_check_branch
      %72 = sbr.rel (0) target = $region13
    $region12: #{tpu_custom_call.1} parent=1 // pred_region
      _
    $region13: #{tpu_custom_call.1} parent=1 // pred_fallthru
      _
    // Predicated region
    $region14: #{tpu_custom_call.1} parent=1 // pred_check
      _
    $region15: #{tpu_custom_call.1} parent=1 // pred_check_branch
      %74 = sbr.rel (0) target = $region17
    $region16: #{tpu_custom_call.1} parent=1 // pred_region
      _
    $region17: #{tpu_custom_call.1} parent=1 // pred_fallthru
      _
    // Predicated region
    $region18: #{tpu_custom_call.1} parent=1 // pred_check
      _
    $region19: #{tpu_custom_call.1} parent=1 // pred_check_branch
      %76 = sbr.rel (0) target = $region21
    $region20: #{tpu_custom_call.1} parent=1 // pred_region
      _
    $region21: #{tpu_custom_call.1} parent=1 // pred_fallthru
      _
    // Predicated region
    $region22: #{tpu_custom_call.1} parent=1 // pred_check
      _
    $region23: #{tpu_custom_call.1} parent=1 // pred_check_branch
      %78 = sbr.rel (0) target = $region25
    $region24: #{tpu_custom_call.1} parent=1 // pred_region
      _
    $region25: #{tpu_custom_call.1} parent=1 // pred_fallthru
      _
    // Predicated region
    $region26: #{tpu_custom_call.1} parent=1 // pred_check
      _
    $region27: #{tpu_custom_call.1} parent=1 // pred_check_branch
      %80 = sbr.rel (0) target = $region29
    $region28: #{tpu_custom_call.1} parent=1 // pred_region
      _
    $region29: #{tpu_custom_call.1} parent=1 // pred_fallthru
      _
    // Predicated region
    $region30: #{tpu_custom_call.1} parent=1 // pred_check
      _
    $region31: #{tpu_custom_call.1} parent=1 // pred_check_branch
      %82 = sbr.rel (0) target = $region33
    $region32: #{tpu_custom_call.1} parent=1 // pred_region
      _
    $region33: #{tpu_custom_call.1} parent=1 // pred_fallthru
      _
    // Predicated region
    $region34: #{tpu_custom_call.1} parent=1 // pred_check
      _
    $region35: #{tpu_custom_call.1} parent=1 // pred_check_branch
      %84 = sbr.rel (0) target = $region37
    $region36: #{tpu_custom_call.1} parent=1 // pred_region
      _
    $region37: #{tpu_custom_call.1} parent=1 // pred_fallthru
      _
    // Predicated region
    $region38: #{tpu_custom_call.1} parent=1 // pred_check
      _
    $region39: #{tpu_custom_call.1} parent=1 // pred_check_branch
      %86 = sbr.rel (0) target = $region41
    $region40: #{tpu_custom_call.1} parent=1 // pred_region
      _
    $region41: #{tpu_custom_call.1} parent=1 // pred_fallthru
      _
    // Predicated region
    $region42: #{tpu_custom_call.1} parent=1 // pred_check
      _
    $region43: #{tpu_custom_call.1} parent=1 // pred_check_branch
      %88 = sbr.rel (0) target = $region45
    $region44: #{tpu_custom_call.1} parent=1 // pred_region
      _
    $region45: #{tpu_custom_call.1} parent=1 // pred_fallthru
      _
    // Predicated region
    $region46: #{tpu_custom_call.1} parent=1 // pred_check
      _
    $region47: #{tpu_custom_call.1} parent=1 // pred_check_branch
      %90 = sbr.rel (0) target = $region49
    $region48: #{tpu_custom_call.1} parent=1 // pred_region
      _
    $region49: #{tpu_custom_call.1} parent=1 // pred_fallthru
      _
    // Predicated region
    $region50: #{tpu_custom_call.1} parent=1 // pred_check
      _
    $region51: #{tpu_custom_call.1} parent=1 // pred_check_branch
      %92 = sbr.rel (0) target = $region53
    $region52: #{tpu_custom_call.1} parent=1 // pred_region
      _
    $region53: #{tpu_custom_call.1} parent=1 // pred_fallthru
      _
    // Predicated region
    $region54: #{tpu_custom_call.1} parent=1 // pred_check
      _
    $region55: #{tpu_custom_call.1} parent=1 // pred_check_branch
      %94 = sbr.rel (0) target = $region57
    $region56: #{tpu_custom_call.1} parent=1 // pred_region
      _
    $region57: #{tpu_custom_call.1} parent=1 // pred_fallthru
      _
    // Predicated region
    $region58: #{tpu_custom_call.1} parent=1 // pred_check
      _
    $region59: #{tpu_custom_call.1} parent=1 // pred_check_branch
      %96 = sbr.rel (0) target = $region61
    $region60: #{tpu_custom_call.1} parent=1 // pred_region
      _
    $region61: #{tpu_custom_call.1} parent=1 // pred_fallthru
      _
    // Predicated region
    $region62: #{tpu_custom_call.1} parent=1 // pred_check
      _
    $region63: #{tpu_custom_call.1} parent=1 // pred_check_branch
      %98 = sbr.rel (0) target = $region65
    $region64: #{tpu_custom_call.1} parent=1 // pred_region
      _
    $region65: #{tpu_custom_call.1} parent=1 // pred_fallthru
      _
    // Predicated region
    $region66: #{tpu_custom_call.1} parent=1 // pred_check
      _
    $region67: #{tpu_custom_call.1} parent=1 // pred_check_branch
      %100 = sbr.rel (0) target = $region69
    $region68: #{tpu_custom_call.1} parent=1 // pred_region
      _
    $region69: #{tpu_custom_call.1} parent=1 // pred_fallthru
      _
    // Predicated region
    $region70: #{tpu_custom_call.1} parent=1 // pred_check
      _
    $region71: #{tpu_custom_call.1} parent=1 // pred_check_branch
      %102 = sbr.rel (0) target = $region73
    $region72: #{tpu_custom_call.1} parent=1 // pred_region
      _
    $region73: #{tpu_custom_call.1} parent=1 // pred_fallthru
      _
    // Predicated region
    $region74: #{tpu_custom_call.1} parent=1 // pred_check
      _
    $region75: #{tpu_custom_call.1} parent=1 // pred_check_branch
      %104 = sbr.rel (0) target = $region77
    $region76: #{tpu_custom_call.1} parent=1 // pred_region
      _
    $region77: #{tpu_custom_call.1} parent=1 // pred_fallthru
      _
    // Predicated region
    $region78: #{tpu_custom_call.1} parent=1 // pred_check
      _
    $region79: #{tpu_custom_call.1} parent=1 // pred_check_branch
      %106 = sbr.rel (0) target = $region81
    $region80: #{tpu_custom_call.1} parent=1 // pred_region
      _
    $region81: #{tpu_custom_call.1} parent=1 // pred_fallthru
      _
    // Predicated region
    $region82: #{tpu_custom_call.1} parent=1 // pred_check
      _
    $region83: #{tpu_custom_call.1} parent=1 // pred_check_branch
      %108 = sbr.rel (0) target = $region85
    $region84: #{tpu_custom_call.1} parent=1 // pred_region
      _
    $region85: #{tpu_custom_call.1} parent=1 // pred_fallthru
      _
    // Predicated region
    $region86: #{tpu_custom_call.1} parent=1 // pred_check
      _
    $region87: #{tpu_custom_call.1} parent=1 // pred_check_branch
      %110 = sbr.rel (0) target = $region89
    $region88: #{tpu_custom_call.1} parent=1 // pred_region
      _
    $region89: #{tpu_custom_call.1} parent=1 // pred_fallthru
      _
    // Predicated region
    $region90: #{tpu_custom_call.1} parent=1 // pred_check
      _
    $region91: #{tpu_custom_call.1} parent=1 // pred_check_branch
      %112 = sbr.rel (0) target = $region93
    $region92: #{tpu_custom_call.1} parent=1 // pred_region
      _
    $region93: #{tpu_custom_call.1} parent=1 // pred_fallthru
      _
    // Predicated region
    $region94: #{tpu_custom_call.1} parent=1 // pred_check
      _
    $region95: #{tpu_custom_call.1} parent=1 // pred_check_branch
      %114 = sbr.rel (0) target = $region97
    $region96: #{tpu_custom_call.1} parent=1 // pred_region
      _
    $region97: #{tpu_custom_call.1} parent=1 // pred_fallthru
      _
    // Predicated region
    $region98: #{tpu_custom_call.1} parent=1 // pred_check
      _
    $region99: #{tpu_custom_call.1} parent=1 // pred_check_branch
      %116 = sbr.rel (0) target = $region101
    $region100: #{tpu_custom_call.1} parent=1 // pred_region
      _
    $region101: #{tpu_custom_call.1} parent=1 // pred_fallthru
      _
    // Predicated region
    $region102: #{tpu_custom_call.1} parent=1 // pred_check
      _
    $region103: #{tpu_custom_call.1} parent=1 // pred_check_branch
      %118 = sbr.rel (0) target = $region105
    $region104: #{tpu_custom_call.1} parent=1 // pred_region
      _
    $region105: #{tpu_custom_call.1} parent=1 // pred_fallthru
      _
    // Predicated region
    $region106: #{tpu_custom_call.1} parent=1 // pred_check
      _
    $region107: #{tpu_custom_call.1} parent=1 // pred_check_branch
      %120 = sbr.rel (0) target = $region109
    $region108: #{tpu_custom_call.1} parent=1 // pred_region
      _
    $region109: #{tpu_custom_call.1} parent=1 // pred_fallthru
      _
    // Predicated region
    $region110: #{tpu_custom_call.1} parent=1 // pred_check
      _
    $region111: #{tpu_custom_call.1} parent=1 // pred_check_branch
      %122 = sbr.rel (0) target = $region113
    $region112: #{tpu_custom_call.1} parent=1 // pred_region
      _
    $region113: #{tpu_custom_call.1} parent=1 // pred_fallthru
      _
    // Predicated region
    $region114: #{tpu_custom_call.1} parent=1 // pred_check
      _
    $region115: #{tpu_custom_call.1} parent=1 // pred_check_branch
      %124 = sbr.rel (0) target = $region117
    $region116: #{tpu_custom_call.1} parent=1 // pred_region
      _
    $region117: #{tpu_custom_call.1} parent=1 // pred_fallthru
      _
    // Predicated region
    $region118: #{tpu_custom_call.1} parent=1 // pred_check
      _
    $region119: #{tpu_custom_call.1} parent=1 // pred_check_branch
      %126 = sbr.rel (0) target = $region121
    $region120: #{tpu_custom_call.1} parent=1 // pred_region
      _
    $region121: #{tpu_custom_call.1} parent=1 // pred_fallthru
      _
    %v127 = vld [vmem:[%s1] sm:$0xff]
    %v128 = vld [vmem:[%s1 + $0x8] sm:$0xff]
    %v129 = vld [vmem:[%s3] sm:$0xff]
    %v130 = vld [vmem:[%s3 + $0x8] sm:$0xff]
    %v131 = vld [vmem:[%s13] sm:$0x1]
    %v132 = vld [vmem:[%s15] sm:$0x1]
    %vm133 = vcmask 261120
    %v134 = vsel %vm133, %v127, 0.0
    %135 = vadd.xlane.f32.xlu0 %v134
    %v136 = vpop.xlane.xlu0 %135
    %v137 = vsel %vm133, %v128, 0.0
    %138 = vadd.xlane.f32.xlu0 %v137
    %v139 = vpop.xlane.xlu0 %138
    %v140 = vrcp.pop 32.0
    %v141 = vmul.f32 %v136, %v140
    %v142 = vmul.f32 %v139, %v140
    %v143 = vsub.f32 %v127, %v141
    %v144 = vsub.f32 %v128, %v142
    %v145 = vmul.f32 %v143, %v143
    %v146 = vmul.f32 %v144, %v144
    %v147 = vsel %vm133, %v145, 0.0
    %148 = vadd.xlane.f32.xlu0 %v147
    %v149 = vpop.xlane.xlu0 %148
    %v150 = vsel %vm133, %v146, 0.0
    %151 = vadd.xlane.f32.xlu0 %v150
    %v152 = vpop.xlane.xlu0 %151
    %v153 = vmul.f32 %v149, %v140
    %v154 = vmul.f32 %v152, %v140
    %v155 = vadd.f32 %v153, 1e-05
    %v156 = vadd.f32 %v154, 1e-05
    %v157 = vrsqrt.pop %v155
    %v158 = vrsqrt.pop %v156
    %v159 = vmul.f32 %v143, %v157
    %v160 = vmul.f32 %v144, %v158
    %v162 = vlaneseq
    %v163 = vshrl.u32 %v162, 7
    %v164 = vsub.s32 0, %v163
    %v165 = vrot.slane %v131, %v164
    %v167 = vmul.f32 %v159, %v165
    %v168 = vmul.f32 %v160, %v165
    %v170 = vlaneseq
    %v171 = vshrl.u32 %v170, 7
    %v172 = vsub.s32 0, %v171
    %v173 = vrot.slane %v132, %v172
    %v175 = vadd.f32 %v167, %v173
    %v176 = vadd.f32 %v168, %v173
    %v177 = vld [vmem:[%s5] sm:$0xff]
    %v178 = vld [vmem:[%s5 + $0x8] sm:$0xff]
    %v179 = vld [vmem:[%s5 + $0x10] sm:$0xff]
    %v180 = vld [vmem:[%s5 + $0x18] sm:$0xff]
    %v181 = vld [vmem:[%s7] sm:$0x1]
    %v183 = vlaneseq
    %v184 = vshrl.u32 %v183, 7
    %v185 = vsub.s32 0, %v184
    %v186 = vrot.slane %v181, %v185
    %v189 = vsel %vm133, %v175, 0
    %v192 = vsel %vm133, %v176, 0
    %194 = vmatprep.subr.mxu0 0.0
    %195 = vmatpush1.msra.mxu0 %v177
    %196 = vmatprep.subr.mxu0 0.0
    %197 = vmatpush1.msra.mxu0 %v178
    %198 = vmatprep.subr.mxu0 0.0
    %199 = vmatpush1.msra.mxu0 %v179
    %200 = vmatprep.subr.mxu0 0.0
    %201 = vmatpush1.msra.mxu0 %v180
    %202 = vmatprep.subr.mxu0 0.0
    %203 = vmatpush1.msra.mxu0 0.0
    %204 = vmatprep.subr.mxu0 0.0
    %205 = vmatpush1.msra.mxu0 0.0
    %206 = vmatprep.subr.mxu0 0.0
    %207 = vmatpush1.msra.mxu0 0.0
    %208 = vmatprep.subr.mxu0 0.0
    %209 = vmatpush1.msra.mxu0 0.0
    %210 = vmatprep.subr.mxu0 0.0
    %211 = vmatpush1.msra.mxu0 0.0
    %212 = vmatprep.subr.mxu0 0.0
    %213 = vmatpush1.msra.mxu0 0.0
    %214 = vmatprep.subr.mxu0 0.0
    %215 = vmatpush1.msra.mxu0 0.0
    %216 = vmatprep.subr.mxu0 0.0
    %217 = vmatpush1.msra.mxu0 0.0
    %218 = vmatprep.subr.mxu0 0.0
    %219 = vmatpush1.msra.mxu0 0.0
    %220 = vmatprep.subr.mxu0 0.0
    %221 = vmatpush1.msra.mxu0 0.0
    %222 = vmatprep.subr.mxu0 0.0
    %223 = vmatpush1.msra.mxu0 0.0
    %224 = vmatprep.subr.mxu0 0.0
    %225 = vmatpush1.msra.mxu0 0.0
    %226 = vmatprep.subr.mxu0 0.0
    %227 = vmatpush1.msra.mxu0 0.0
    %228 = vmatprep.subr.mxu0 0.0
    %229 = vmatpush1.msra.mxu0 0.0
    %230 = vmatprep.subr.mxu0 0.0
    %231 = vmatpush1.msra.mxu0 0.0
    %232 = vmatprep.subr.mxu0 0.0
    %233 = vmatpush1.msra.mxu0 0.0
    %234 = vmatprep.subr.mxu0 0.0
    %235 = vmatpush1.msra.mxu0 0.0
    %236 = vmatprep.subr.mxu0 0.0
    %237 = vmatpush1.msra.mxu0 0.0
    %238 = vmatprep.subr.mxu0 0.0
    %239 = vmatpush1.msra.mxu0 0.0
    %240 = vmatprep.subr.mxu0 0.0
    %241 = vmatpush1.msra.mxu0 0.0
    %242 = vmatprep.subr.mxu0 0.0
    %243 = vmatpush1.msra.mxu0 0.0
    %244 = vmatprep.subr.mxu0 0.0
    %245 = vmatpush1.msra.mxu0 0.0
    %246 = vmatprep.subr.mxu0 0.0
    %247 = vmatpush1.msra.mxu0 0.0
    %248 = vmatprep.subr.mxu0 0.0
    %249 = vmatpush1.msra.mxu0 0.0
    %250 = vmatprep.subr.mxu0 0.0
    %251 = vmatpush1.msra.mxu0 0.0
    %252 = vmatprep.subr.mxu0 0.0
    %253 = vmatpush1.msra.mxu0 0.0
    %254 = vmatprep.subr.mxu0 0.0
    %255 = vmatpush1.msra.mxu0 0.0
    %256 = vmatprep.subr.mxu0 0.0
    %257 = vmatpush1.msra.mxu0 0.0
    %258 = vmatprep.mubr.f32.mxu0 0.0
    %259 = vmatmul.mubr.f32.gmra.mrb[0].mxu0 %v189
    %v260 = vpop.f32.mrb[0].mxu0
    %v261 = vadd.f32 %v186, %v260
    %v262 = vpop.f32.mrb[0].mxu0
    %263 = vmatprep.mubr.f32.mxu0 0.0
    %264 = vmatmul.mubr.f32.gmra.mrb[0].mxu0 %v192
    %v265 = vpop.f32.mrb[0].mxu0
    %v266 = vadd.f32 %v186, %v265
    %v267 = vpop.f32.mrb[0].mxu0
    %268 = vdwg.mxu0
    %v269 = vld [vmem:[%s9] sm:$0xff]
    %v270 = vld [vmem:[%s9 + $0x8] sm:$0xff]
    %v271 = vld [vmem:[%s9 + $0x10] sm:$0xff]
    %v272 = vld [vmem:[%s9 + $0x18] sm:$0xff]
    %275 = vrot.lane.b32.xlu0 %v261, 96
    %v276 = vpop.permute.xlu0 %275
    %277 = vrot.lane.b32.xlu0 %v266, 96
    %v278 = vpop.permute.xlu0 %277
    %vm279 = vcmask 64512
    %v280 = vsel %vm279, %v261, 0
    %v282 = vsel %vm279, %v266, 0
    %v284 = vsel %vm279, %v276, 0
    %v286 = vsel %vm279, %v278, 0
    %288 = vmatprep.subr.mxu0 0.0
    %289 = vmatpush1.xpose.msra.mxu0 %v284
    %290 = vmatprep.subr.mxu0 0.0
    %291 = vmatpush1.xpose.msra.mxu0 %v286
    %292 = vmatprep.subr.mxu0 0.0
    %293 = vmatpush1.xpose.msra.mxu0 0.0
    %294 = vmatprep.subr.mxu0 0.0
    %295 = vmatpush1.xpose.msra.mxu0 0.0
    %296 = vmatprep.subr.mxu0 0.0
    %297 = vmatpush1.xpose.msra.mxu0 0.0
    %298 = vmatprep.subr.mxu0 0.0
    %299 = vmatpush1.xpose.msra.mxu0 0.0
    %300 = vmatprep.subr.mxu0 0.0
    %301 = vmatpush1.xpose.msra.mxu0 0.0
    %302 = vmatprep.subr.mxu0 0.0
    %303 = vmatpush1.xpose.msra.mxu0 0.0
    %304 = vmatprep.subr.mxu0 0.0
    %305 = vmatpush1.xpose.msra.mxu0 0.0
    %306 = vmatprep.subr.mxu0 0.0
    %307 = vmatpush1.xpose.msra.mxu0 0.0
    %308 = vmatprep.subr.mxu0 0.0
    %309 = vmatpush1.xpose.msra.mxu0 0.0
    %310 = vmatprep.subr.mxu0 0.0
    %311 = vmatpush1.xpose.msra.mxu0 0.0
    %312 = vmatprep.subr.mxu0 0.0
    %313 = vmatpush1.xpose.msra.mxu0 0.0
    %314 = vmatprep.subr.mxu0 0.0
    %315 = vmatpush1.xpose.msra.mxu0 0.0
    %316 = vmatprep.subr.mxu0 0.0
    %317 = vmatpush1.xpose.msra.mxu0 0.0
    %318 = vmatprep.subr.mxu0 0.0
    %319 = vmatpush1.xpose.msra.mxu0 0.0
    %320 = vmatprep.subr.mxu0 0.0
    %321 = vmatpush1.xpose.msra.mxu0 0.0
    %322 = vmatprep.subr.mxu0 0.0
    %323 = vmatpush1.xpose.msra.mxu0 0.0
    %324 = vmatprep.subr.mxu0 0.0
    %325 = vmatpush1.xpose.msra.mxu0 0.0
    %326 = vmatprep.subr.mxu0 0.0
    %327 = vmatpush1.xpose.msra.mxu0 0.0
    %328 = vmatprep.subr.mxu0 0.0
    %329 = vmatpush1.xpose.msra.mxu0 0.0
    %330 = vmatprep.subr.mxu0 0.0
    %331 = vmatpush1.xpose.msra.mxu0 0.0
    %332 = vmatprep.subr.mxu0 0.0
    %333 = vmatpush1.xpose.msra.mxu0 0.0
    %334 = vmatprep.subr.mxu0 0.0
    %335 = vmatpush1.xpose.msra.mxu0 0.0
    %336 = vmatprep.subr.mxu0 0.0
    %337 = vmatpush1.xpose.msra.mxu0 0.0
    %338 = vmatprep.subr.mxu0 0.0
    %339 = vmatpush1.xpose.msra.mxu0 0.0
    %340 = vmatprep.subr.mxu0 0.0
    %341 = vmatpush1.xpose.msra.mxu0 0.0
    %342 = vmatprep.subr.mxu0 0.0
    %343 = vmatpush1.xpose.msra.mxu0 0.0
    %344 = vmatprep.subr.mxu0 0.0
    %345 = vmatpush1.xpose.msra.mxu0 0.0
    %346 = vmatprep.subr.mxu0 0.0
    %347 = vmatpush1.xpose.msra.mxu0 0.0
    %348 = vmatprep.subr.mxu0 0.0
    %349 = vmatpush1.xpose.msra.mxu0 0.0
    %350 = vmatprep.subr.mxu0 0.0
    %351 = vmatpush1.xpose.msra.mxu0 0.0
    %352 = vmatprep.mubr.f32.mxu0 0.0
    %353 = vmatmul.mubr.f32.gmra.mrb[0].mxu0 %v280
    %v354 = vpop.f32.mrb[0].mxu0
    %v355 = vadd.f32 0.0, %v354
    %v356 = vpop.f32.mrb[0].mxu0
    %357 = vmatprep.mubr.f32.mxu0 0.0
    %358 = vmatmul.mubr.f32.gmra.mrb[0].mxu0 %v282
    %v359 = vpop.f32.mrb[0].mxu0
    %v360 = vadd.f32 0.0, %v359
    %v361 = vpop.f32.mrb[0].mxu0
    %362 = vdwg.mxu0
    %v363 = vmul.f32 %v355, 0.35355338
    %v364 = vmul.f32 %v360, 0.35355338
    %v365 = vadd.f32 %v363, %v129
    %v366 = vadd.f32 %v364, %v130
    %vm367 = vcmask 130048
    %v368 = vsel %vm367, %v365, -inf
    %369 = vmax.xlane.f32.xlu0 %v368
    %v370 = vpop.xlane.xlu0 %369
    %v371 = vsel %vm367, %v366, -inf
    %372 = vmax.xlane.f32.xlu0 %v371
    %v373 = vpop.xlane.xlu0 %372
    %v374 = vsub.f32 %v365, %v370
    %v375 = vsub.f32 %v366, %v373
    %v376 = vmul.f32 %v374, 1.442695
    %v377 = vpow.pop %v376
    %v378 = vmul.f32 %v375, 1.442695
    %v379 = vpow.pop %v378
    %v380 = vsel %vm367, %v377, 0.0
    %381 = vadd.xlane.f32.xlu0 %v380
    %v382 = vpop.xlane.xlu0 %381
    %v383 = vsel %vm367, %v379, 0.0
    %384 = vadd.xlane.f32.xlu0 %v383
    %v385 = vpop.xlane.xlu0 %384
    %v386 = vrcp.pop %v382
    %v387 = vrcp.pop %v385
    %v388 = vmul.f32 %v377, %v386
    %v389 = vmul.f32 %v379, %v387
    %390 = vrot.lane.b32.xlu0 %v261, 64
    %v391 = vpop.permute.xlu0 %390
    %392 = vrot.lane.b32.xlu0 %v266, 64
    %v393 = vpop.permute.xlu0 %392
    %v397 = vsel %vm367, %v388, 0
    %v400 = vsel %vm367, %v389, 0
    %402 = vmatprep.subr.mxu0 0.0
    %403 = vmatpush1.msra.mxu0 %v391
    %404 = vmatprep.subr.mxu0 0.0
    %405 = vmatpush1.msra.mxu0 %v393
    %406 = vmatprep.subr.mxu0 0.0
    %407 = vmatpush1.msra.mxu0 0.0
    %408 = vmatprep.subr.mxu0 0.0
    %409 = vmatpush1.msra.mxu0 0.0
    %410 = vmatprep.subr.mxu0 0.0
    %411 = vmatpush1.msra.mxu0 0.0
    %412 = vmatprep.subr.mxu0 0.0
    %413 = vmatpush1.msra.mxu0 0.0
    %414 = vmatprep.subr.mxu0 0.0
    %415 = vmatpush1.msra.mxu0 0.0
    %416 = vmatprep.subr.mxu0 0.0
    %417 = vmatpush1.msra.mxu0 0.0
    %418 = vmatprep.subr.mxu0 0.0
    %419 = vmatpush1.msra.mxu0 0.0
    %420 = vmatprep.subr.mxu0 0.0
    %421 = vmatpush1.msra.mxu0 0.0
    %422 = vmatprep.subr.mxu0 0.0
    %423 = vmatpush1.msra.mxu0 0.0
    %424 = vmatprep.subr.mxu0 0.0
    %425 = vmatpush1.msra.mxu0 0.0
    %426 = vmatprep.subr.mxu0 0.0
    %427 = vmatpush1.msra.mxu0 0.0
    %428 = vmatprep.subr.mxu0 0.0
    %429 = vmatpush1.msra.mxu0 0.0
    %430 = vmatprep.subr.mxu0 0.0
    %431 = vmatpush1.msra.mxu0 0.0
    %432 = vmatprep.subr.mxu0 0.0
    %433 = vmatpush1.msra.mxu0 0.0
    %434 = vmatprep.subr.mxu0 0.0
    %435 = vmatpush1.msra.mxu0 0.0
    %436 = vmatprep.subr.mxu0 0.0
    %437 = vmatpush1.msra.mxu0 0.0
    %438 = vmatprep.subr.mxu0 0.0
    %439 = vmatpush1.msra.mxu0 0.0
    %440 = vmatprep.subr.mxu0 0.0
    %441 = vmatpush1.msra.mxu0 0.0
    %442 = vmatprep.subr.mxu0 0.0
    %443 = vmatpush1.msra.mxu0 0.0
    %444 = vmatprep.subr.mxu0 0.0
    %445 = vmatpush1.msra.mxu0 0.0
    %446 = vmatprep.subr.mxu0 0.0
    %447 = vmatpush1.msra.mxu0 0.0
    %448 = vmatprep.subr.mxu0 0.0
    %449 = vmatpush1.msra.mxu0 0.0
    %450 = vmatprep.subr.mxu0 0.0
    %451 = vmatpush1.msra.mxu0 0.0
    %452 = vmatprep.subr.mxu0 0.0
    %453 = vmatpush1.msra.mxu0 0.0
    %454 = vmatprep.subr.mxu0 0.0
    %455 = vmatpush1.msra.mxu0 0.0
    %456 = vmatprep.subr.mxu0 0.0
    %457 = vmatpush1.msra.mxu0 0.0
    %458 = vmatprep.subr.mxu0 0.0
    %459 = vmatpush1.msra.mxu0 0.0
    %460 = vmatprep.subr.mxu0 0.0
    %461 = vmatpush1.msra.mxu0 0.0
    %462 = vmatprep.subr.mxu0 0.0
    %463 = vmatpush1.msra.mxu0 0.0
    %464 = vmatprep.subr.mxu0 0.0
    %465 = vmatpush1.msra.mxu0 0.0
    %466 = vmatprep.mubr.f32.mxu0 0.0
    %467 = vmatmul.mubr.f32.gmra.mrb[0].mxu0 %v397
    %v468 = vpop.f32.mrb[0].mxu0
    %v469 = vadd.f32 0.0, %v468
    %v470 = vpop.f32.mrb[0].mxu0
    %471 = vmatprep.mubr.f32.mxu0 0.0
    %472 = vmatmul.mubr.f32.gmra.mrb[0].mxu0 %v400
    %v473 = vpop.f32.mrb[0].mxu0
    %v474 = vadd.f32 0.0, %v473
    %v475 = vpop.f32.mrb[0].mxu0
    %476 = vdwg.mxu0
    %477 = vrot.lane.b32.xlu0 %v261, 120
    %v478 = vpop.permute.xlu0 %477
    %479 = vrot.lane.b32.xlu0 %v266, 120
    %v480 = vpop.permute.xlu0 %479
    %481 = vrot.lane.b32.xlu0 %v261, 88
    %v482 = vpop.permute.xlu0 %481
    %483 = vrot.lane.b32.xlu0 %v266, 88
    %v484 = vpop.permute.xlu0 %483
    %v485 = vsel %vm279, %v478, 0
    %v487 = vsel %vm279, %v480, 0
    %v489 = vsel %vm279, %v482, 0
    %v491 = vsel %vm279, %v484, 0
    %493 = vmatprep.subr.mxu0 0.0
    %494 = vmatpush1.xpose.msra.mxu0 %v489
    %495 = vmatprep.subr.mxu0 0.0
    %496 = vmatpush1.xpose.msra.mxu0 %v491
    %497 = vmatprep.subr.mxu0 0.0
    %498 = vmatpush1.xpose.msra.mxu0 0.0
    %499 = vmatprep.subr.mxu0 0.0
    %500 = vmatpush1.xpose.msra.mxu0 0.0
    %501 = vmatprep.subr.mxu0 0.0
    %502 = vmatpush1.xpose.msra.mxu0 0.0
    %503 = vmatprep.subr.mxu0 0.0
    %504 = vmatpush1.xpose.msra.mxu0 0.0
    %505 = vmatprep.subr.mxu0 0.0
    %506 = vmatpush1.xpose.msra.mxu0 0.0
    %507 = vmatprep.subr.mxu0 0.0
    %508 = vmatpush1.xpose.msra.mxu0 0.0
    %509 = vmatprep.subr.mxu0 0.0
    %510 = vmatpush1.xpose.msra.mxu0 0.0
    %511 = vmatprep.subr.mxu0 0.0
    %512 = vmatpush1.xpose.msra.mxu0 0.0
    %513 = vmatprep.subr.mxu0 0.0
    %514 = vmatpush1.xpose.msra.mxu0 0.0
    %515 = vmatprep.subr.mxu0 0.0
    %516 = vmatpush1.xpose.msra.mxu0 0.0
    %517 = vmatprep.subr.mxu0 0.0
    %518 = vmatpush1.xpose.msra.mxu0 0.0
    %519 = vmatprep.subr.mxu0 0.0
    %520 = vmatpush1.xpose.msra.mxu0 0.0
    %521 = vmatprep.subr.mxu0 0.0
    %522 = vmatpush1.xpose.msra.mxu0 0.0
    %523 = vmatprep.subr.mxu0 0.0
    %524 = vmatpush1.xpose.msra.mxu0 0.0
    %525 = vmatprep.subr.mxu0 0.0
    %526 = vmatpush1.xpose.msra.mxu0 0.0
    %527 = vmatprep.subr.mxu0 0.0
    %528 = vmatpush1.xpose.msra.mxu0 0.0
    %529 = vmatprep.subr.mxu0 0.0
    %530 = vmatpush1.xpose.msra.mxu0 0.0
    %531 = vmatprep.subr.mxu0 0.0
    %532 = vmatpush1.xpose.msra.mxu0 0.0
    %533 = vmatprep.subr.mxu0 0.0
    %534 = vmatpush1.xpose.msra.mxu0 0.0
    %535 = vmatprep.subr.mxu0 0.0
    %536 = vmatpush1.xpose.msra.mxu0 0.0
    %537 = vmatprep.subr.mxu0 0.0
    %538 = vmatpush1.xpose.msra.mxu0 0.0
    %539 = vmatprep.subr.mxu0 0.0
    %540 = vmatpush1.xpose.msra.mxu0 0.0
    %541 = vmatprep.subr.mxu0 0.0
    %542 = vmatpush1.xpose.msra.mxu0 0.0
    %543 = vmatprep.subr.mxu0 0.0
    %544 = vmatpush1.xpose.msra.mxu0 0.0
    %545 = vmatprep.subr.mxu0 0.0
    %546 = vmatpush1.xpose.msra.mxu0 0.0
    %547 = vmatprep.subr.mxu0 0.0
    %548 = vmatpush1.xpose.msra.mxu0 0.0
    %549 = vmatprep.subr.mxu0 0.0
    %550 = vmatpush1.xpose.msra.mxu0 0.0
    %551 = vmatprep.subr.mxu0 0.0
    %552 = vmatpush1.xpose.msra.mxu0 0.0
    %553 = vmatprep.subr.mxu0 0.0
    %554 = vmatpush1.xpose.msra.mxu0 0.0
    %555 = vmatprep.subr.mxu0 0.0
    %556 = vmatpush1.xpose.msra.mxu0 0.0
    %557 = vmatprep.mubr.f32.mxu0 0.0
    %558 = vmatmul.mubr.f32.gmra.mrb[0].mxu0 %v485
    %v559 = vpop.f32.mrb[0].mxu0
    %v560 = vadd.f32 0.0, %v559
    %v561 = vpop.f32.mrb[0].mxu0
    %562 = vmatprep.mubr.f32.mxu0 0.0
    %563 = vmatmul.mubr.f32.gmra.mrb[0].mxu0 %v487
    %v564 = vpop.f32.mrb[0].mxu0
    %v565 = vadd.f32 0.0, %v564
    %v566 = vpop.f32.mrb[0].mxu0
    %567 = vdwg.mxu0
    %v568 = vmul.f32 %v560, 0.35355338
    %v569 = vmul.f32 %v565, 0.35355338
    %v570 = vadd.f32 %v568, %v129
    %v571 = vadd.f32 %v569, %v130
    %v572 = vsel %vm367, %v570, -inf
    %573 = vmax.xlane.f32.xlu0 %v572
    %v574 = vpop.xlane.xlu0 %573
    %v575 = vsel %vm367, %v571, -inf
    %576 = vmax.xlane.f32.xlu0 %v575
    %v577 = vpop.xlane.xlu0 %576
    %v578 = vsub.f32 %v570, %v574
    %v579 = vsub.f32 %v571, %v577
    %v580 = vmul.f32 %v578, 1.442695
    %v581 = vpow.pop %v580
    %v582 = vmul.f32 %v579, 1.442695
    %v583 = vpow.pop %v582
    %v584 = vsel %vm367, %v581, 0.0
    %585 = vadd.xlane.f32.xlu0 %v584
    %v586 = vpop.xlane.xlu0 %585
    %v587 = vsel %vm367, %v583, 0.0
    %588 = vadd.xlane.f32.xlu0 %v587
    %v589 = vpop.xlane.xlu0 %588
    %v590 = vrcp.pop %v586
    %v591 = vrcp.pop %v589
    %v592 = vmul.f32 %v581, %v590
    %v593 = vmul.f32 %v583, %v591
    %594 = vrot.lane.b32.xlu0 %v261, 56
    %v595 = vpop.permute.xlu0 %594
    %596 = vrot.lane.b32.xlu0 %v266, 56
    %v597 = vpop.permute.xlu0 %596
    %v601 = vsel %vm367, %v592, 0
    %v604 = vsel %vm367, %v593, 0
    %606 = vmatprep.subr.mxu0 0.0
    %607 = vmatpush1.msra.mxu0 %v595
    %608 = vmatprep.subr.mxu0 0.0
    %609 = vmatpush1.msra.mxu0 %v597
    %610 = vmatprep.subr.mxu0 0.0
    %611 = vmatpush1.msra.mxu0 0.0
    %612 = vmatprep.subr.mxu0 0.0
    %613 = vmatpush1.msra.mxu0 0.0
    %614 = vmatprep.subr.mxu0 0.0
    %615 = vmatpush1.msra.mxu0 0.0
    %616 = vmatprep.subr.mxu0 0.0
    %617 = vmatpush1.msra.mxu0 0.0
    %618 = vmatprep.subr.mxu0 0.0
    %619 = vmatpush1.msra.mxu0 0.0
    %620 = vmatprep.subr.mxu0 0.0
    %621 = vmatpush1.msra.mxu0 0.0
    %622 = vmatprep.subr.mxu0 0.0
    %623 = vmatpush1.msra.mxu0 0.0
    %624 = vmatprep.subr.mxu0 0.0
    %625 = vmatpush1.msra.mxu0 0.0
    %626 = vmatprep.subr.mxu0 0.0
    %627 = vmatpush1.msra.mxu0 0.0
    %628 = vmatprep.subr.mxu0 0.0
    %629 = vmatpush1.msra.mxu0 0.0
    %630 = vmatprep.subr.mxu0 0.0
    %631 = vmatpush1.msra.mxu0 0.0
    %632 = vmatprep.subr.mxu0 0.0
    %633 = vmatpush1.msra.mxu0 0.0
    %634 = vmatprep.subr.mxu0 0.0
    %635 = vmatpush1.msra.mxu0 0.0
    %636 = vmatprep.subr.mxu0 0.0
    %637 = vmatpush1.msra.mxu0 0.0
    %638 = vmatprep.subr.mxu0 0.0
    %639 = vmatpush1.msra.mxu0 0.0
    %640 = vmatprep.subr.mxu0 0.0
    %641 = vmatpush1.msra.mxu0 0.0
    %642 = vmatprep.subr.mxu0 0.0
    %643 = vmatpush1.msra.mxu0 0.0
    %644 = vmatprep.subr.mxu0 0.0
    %645 = vmatpush1.msra.mxu0 0.0
    %646 = vmatprep.subr.mxu0 0.0
    %647 = vmatpush1.msra.mxu0 0.0
    %648 = vmatprep.subr.mxu0 0.0
    %649 = vmatpush1.msra.mxu0 0.0
    %650 = vmatprep.subr.mxu0 0.0
    %651 = vmatpush1.msra.mxu0 0.0
    %652 = vmatprep.subr.mxu0 0.0
    %653 = vmatpush1.msra.mxu0 0.0
    %654 = vmatprep.subr.mxu0 0.0
    %655 = vmatpush1.msra.mxu0 0.0
    %656 = vmatprep.subr.mxu0 0.0
    %657 = vmatpush1.msra.mxu0 0.0
    %658 = vmatprep.subr.mxu0 0.0
    %659 = vmatpush1.msra.mxu0 0.0
    %660 = vmatprep.subr.mxu0 0.0
    %661 = vmatpush1.msra.mxu0 0.0
    %662 = vmatprep.subr.mxu0 0.0
    %663 = vmatpush1.msra.mxu0 0.0
    %664 = vmatprep.subr.mxu0 0.0
    %665 = vmatpush1.msra.mxu0 0.0
    %666 = vmatprep.subr.mxu0 0.0
    %667 = vmatpush1.msra.mxu0 0.0
    %668 = vmatprep.subr.mxu0 0.0
    %669 = vmatpush1.msra.mxu0 0.0
    %670 = vmatprep.mubr.f32.mxu0 0.0
    %671 = vmatmul.mubr.f32.gmra.mrb[0].mxu0 %v601
    %v672 = vpop.f32.mrb[0].mxu0
    %v673 = vadd.f32 0.0, %v672
    %v674 = vpop.f32.mrb[0].mxu0
    %675 = vmatprep.mubr.f32.mxu0 0.0
    %676 = vmatmul.mubr.f32.gmra.mrb[0].mxu0 %v604
    %v677 = vpop.f32.mrb[0].mxu0
    %v678 = vadd.f32 0.0, %v677
    %v679 = vpop.f32.mrb[0].mxu0
    %680 = vdwg.mxu0
    %v682 = vsel %vm279, %v673, 0
    %v685 = vsel %vm279, %v678, 0
    %687 = vmatprep.subr.mxu0 0.0
    %688 = vmatpush1.msra.mxu0 %v270
    %689 = vmatprep.subr.mxu0 0.0
    %690 = vmatpush1.msra.mxu0 0.0
    %691 = vmatprep.subr.mxu0 0.0
    %692 = vmatpush1.msra.mxu0 0.0
    %693 = vmatprep.subr.mxu0 0.0
    %694 = vmatpush1.msra.mxu0 0.0
    %695 = vmatprep.subr.mxu0 0.0
    %696 = vmatpush1.msra.mxu0 0.0
    %697 = vmatprep.subr.mxu0 0.0
    %698 = vmatpush1.msra.mxu0 0.0
    %699 = vmatprep.subr.mxu0 0.0
    %700 = vmatpush1.msra.mxu0 0.0
    %701 = vmatprep.subr.mxu0 0.0
    %702 = vmatpush1.msra.mxu0 0.0
    %703 = vmatprep.subr.mxu0 0.0
    %704 = vmatpush1.msra.mxu0 0.0
    %705 = vmatprep.subr.mxu0 0.0
    %706 = vmatpush1.msra.mxu0 0.0
    %707 = vmatprep.subr.mxu0 0.0
    %708 = vmatpush1.msra.mxu0 0.0
    %709 = vmatprep.subr.mxu0 0.0
    %710 = vmatpush1.msra.mxu0 0.0
    %711 = vmatprep.subr.mxu0 0.0
    %712 = vmatpush1.msra.mxu0 0.0
    %713 = vmatprep.subr.mxu0 0.0
    %714 = vmatpush1.msra.mxu0 0.0
    %715 = vmatprep.subr.mxu0 0.0
    %716 = vmatpush1.msra.mxu0 0.0
    %717 = vmatprep.subr.mxu0 0.0
    %718 = vmatpush1.msra.mxu0 0.0
    %719 = vmatprep.subr.mxu0 0.0
    %720 = vmatpush1.msra.mxu0 0.0
    %721 = vmatprep.subr.mxu0 0.0
    %722 = vmatpush1.msra.mxu0 0.0
    %723 = vmatprep.subr.mxu0 0.0
    %724 = vmatpush1.msra.mxu0 0.0
    %725 = vmatprep.subr.mxu0 0.0
    %726 = vmatpush1.msra.mxu0 0.0
    %727 = vmatprep.subr.mxu0 0.0
    %728 = vmatpush1.msra.mxu0 0.0
    %729 = vmatprep.subr.mxu0 0.0
    %730 = vmatpush1.msra.mxu0 0.0
    %731 = vmatprep.subr.mxu0 0.0
    %732 = vmatpush1.msra.mxu0 0.0
    %733 = vmatprep.subr.mxu0 0.0
    %734 = vmatpush1.msra.mxu0 0.0
    %735 = vmatprep.subr.mxu0 0.0
    %736 = vmatpush1.msra.mxu0 0.0
    %737 = vmatprep.subr.mxu0 0.0
    %738 = vmatpush1.msra.mxu0 0.0
    %739 = vmatprep.subr.mxu0 0.0
    %740 = vmatpush1.msra.mxu0 0.0
    %741 = vmatprep.subr.mxu0 0.0
    %742 = vmatpush1.msra.mxu0 0.0
    %743 = vmatprep.subr.mxu0 0.0
    %744 = vmatpush1.msra.mxu0 0.0
    %745 = vmatprep.subr.mxu0 0.0
    %746 = vmatpush1.msra.mxu0 0.0
    %747 = vmatprep.subr.mxu0 0.0
    %748 = vmatpush1.msra.mxu0 0.0
    %749 = vmatprep.subr.mxu0 0.0
    %750 = vmatpush1.msra.mxu0 0.0
    %751 = vmatprep.mubr.f32.mxu0 0.0
    %752 = vmatmul.mubr.f32.gmra.mrb[0].mxu0 %v682
    %v753 = vpop.f32.mrb[0].mxu0
    %v754 = vadd.f32 0.0, %v753
    %v755 = vpop.f32.mrb[0].mxu0
    %756 = vmatprep.mubr.f32.mxu0 0.0
    %757 = vmatmul.mubr.f32.gmra.mrb[0].mxu0 %v685
    %v758 = vpop.f32.mrb[0].mxu0
    %v759 = vadd.f32 0.0, %v758
    %v760 = vpop.f32.mrb[0].mxu0
    %761 = vdwg.mxu0
    %v763 = vsel %vm279, %v469, 0
    %v766 = vsel %vm279, %v474, 0
    %768 = vmatprep.subr.mxu0 0.0
    %769 = vmatpush1.msra.mxu0 %v269
    %770 = vmatprep.subr.mxu0 0.0
    %771 = vmatpush1.msra.mxu0 0.0
    %772 = vmatprep.subr.mxu0 0.0
    %773 = vmatpush1.msra.mxu0 0.0
    %774 = vmatprep.subr.mxu0 0.0
    %775 = vmatpush1.msra.mxu0 0.0
    %776 = vmatprep.subr.mxu0 0.0
    %777 = vmatpush1.msra.mxu0 0.0
    %778 = vmatprep.subr.mxu0 0.0
    %779 = vmatpush1.msra.mxu0 0.0
    %780 = vmatprep.subr.mxu0 0.0
    %781 = vmatpush1.msra.mxu0 0.0
    %782 = vmatprep.subr.mxu0 0.0
    %783 = vmatpush1.msra.mxu0 0.0
    %784 = vmatprep.subr.mxu0 0.0
    %785 = vmatpush1.msra.mxu0 0.0
    %786 = vmatprep.subr.mxu0 0.0
    %787 = vmatpush1.msra.mxu0 0.0
    %788 = vmatprep.subr.mxu0 0.0
    %789 = vmatpush1.msra.mxu0 0.0
    %790 = vmatprep.subr.mxu0 0.0
    %791 = vmatpush1.msra.mxu0 0.0
    %792 = vmatprep.subr.mxu0 0.0
    %793 = vmatpush1.msra.mxu0 0.0
    %794 = vmatprep.subr.mxu0 0.0
    %795 = vmatpush1.msra.mxu0 0.0
    %796 = vmatprep.subr.mxu0 0.0
    %797 = vmatpush1.msra.mxu0 0.0
    %798 = vmatprep.subr.mxu0 0.0
    %799 = vmatpush1.msra.mxu0 0.0
    %800 = vmatprep.subr.mxu0 0.0
    %801 = vmatpush1.msra.mxu0 0.0
    %802 = vmatprep.subr.mxu0 0.0
    %803 = vmatpush1.msra.mxu0 0.0
    %804 = vmatprep.subr.mxu0 0.0
    %805 = vmatpush1.msra.mxu0 0.0
    %806 = vmatprep.subr.mxu0 0.0
    %807 = vmatpush1.msra.mxu0 0.0
    %808 = vmatprep.subr.mxu0 0.0
    %809 = vmatpush1.msra.mxu0 0.0
    %810 = vmatprep.subr.mxu0 0.0
    %811 = vmatpush1.msra.mxu0 0.0
    %812 = vmatprep.subr.mxu0 0.0
    %813 = vmatpush1.msra.mxu0 0.0
    %814 = vmatprep.subr.mxu0 0.0
    %815 = vmatpush1.msra.mxu0 0.0
    %816 = vmatprep.subr.mxu0 0.0
    %817 = vmatpush1.msra.mxu0 0.0
    %818 = vmatprep.subr.mxu0 0.0
    %819 = vmatpush1.msra.mxu0 0.0
    %820 = vmatprep.subr.mxu0 0.0
    %821 = vmatpush1.msra.mxu0 0.0
    %822 = vmatprep.subr.mxu0 0.0
    %823 = vmatpush1.msra.mxu0 0.0
    %824 = vmatprep.subr.mxu0 0.0
    %825 = vmatpush1.msra.mxu0 0.0
    %826 = vmatprep.subr.mxu0 0.0
    %827 = vmatpush1.msra.mxu0 0.0
    %828 = vmatprep.subr.mxu0 0.0
    %829 = vmatpush1.msra.mxu0 0.0
    %830 = vmatprep.subr.mxu0 0.0
    %831 = vmatpush1.msra.mxu0 0.0
    %832 = vmatprep.mubr.f32.mxu0 0.0
    %833 = vmatmul.mubr.f32.gmra.mrb[0].mxu0 %v763
    %v834 = vpop.f32.mrb[0].mxu0
    %v835 = vadd.f32 %v754, %v834
    %v836 = vpop.f32.mrb[0].mxu0
    %837 = vmatprep.mubr.f32.mxu0 0.0
    %838 = vmatmul.mubr.f32.gmra.mrb[0].mxu0 %v766
    %v839 = vpop.f32.mrb[0].mxu0
    %v840 = vadd.f32 %v759, %v839
    %v841 = vpop.f32.mrb[0].mxu0
    %842 = vdwg.mxu0
    %843 = vrot.lane.b32.xlu0 %v261, 112
    %v844 = vpop.permute.xlu0 %843
    %845 = vrot.lane.b32.xlu0 %v266, 112
    %v846 = vpop.permute.xlu0 %845
    %847 = vrot.lane.b32.xlu0 %v261, 80
    %v848 = vpop.permute.xlu0 %847
    %849 = vrot.lane.b32.xlu0 %v266, 80
    %v850 = vpop.permute.xlu0 %849
    %v851 = vsel %vm279, %v844, 0
    %v853 = vsel %vm279, %v846, 0
    %v855 = vsel %vm279, %v848, 0
    %v857 = vsel %vm279, %v850, 0
    %859 = vmatprep.subr.mxu0 0.0
    %860 = vmatpush1.xpose.msra.mxu0 %v855
    %861 = vmatprep.subr.mxu0 0.0
    %862 = vmatpush1.xpose.msra.mxu0 %v857
    %863 = vmatprep.subr.mxu0 0.0
    %864 = vmatpush1.xpose.msra.mxu0 0.0
    %865 = vmatprep.subr.mxu0 0.0
    %866 = vmatpush1.xpose.msra.mxu0 0.0
    %867 = vmatprep.subr.mxu0 0.0
    %868 = vmatpush1.xpose.msra.mxu0 0.0
    %869 = vmatprep.subr.mxu0 0.0
    %870 = vmatpush1.xpose.msra.mxu0 0.0
    %871 = vmatprep.subr.mxu0 0.0
    %872 = vmatpush1.xpose.msra.mxu0 0.0
    %873 = vmatprep.subr.mxu0 0.0
    %874 = vmatpush1.xpose.msra.mxu0 0.0
    %875 = vmatprep.subr.mxu0 0.0
    %876 = vmatpush1.xpose.msra.mxu0 0.0
    %877 = vmatprep.subr.mxu0 0.0
    %878 = vmatpush1.xpose.msra.mxu0 0.0
    %879 = vmatprep.subr.mxu0 0.0
    %880 = vmatpush1.xpose.msra.mxu0 0.0
    %881 = vmatprep.subr.mxu0 0.0
    %882 = vmatpush1.xpose.msra.mxu0 0.0
    %883 = vmatprep.subr.mxu0 0.0
    %884 = vmatpush1.xpose.msra.mxu0 0.0
    %885 = vmatprep.subr.mxu0 0.0
    %886 = vmatpush1.xpose.msra.mxu0 0.0
    %887 = vmatprep.subr.mxu0 0.0
    %888 = vmatpush1.xpose.msra.mxu0 0.0
    %889 = vmatprep.subr.mxu0 0.0
    %890 = vmatpush1.xpose.msra.mxu0 0.0
    %891 = vmatprep.subr.mxu0 0.0
    %892 = vmatpush1.xpose.msra.mxu0 0.0
    %893 = vmatprep.subr.mxu0 0.0
    %894 = vmatpush1.xpose.msra.mxu0 0.0
    %895 = vmatprep.subr.mxu0 0.0
    %896 = vmatpush1.xpose.msra.mxu0 0.0
    %897 = vmatprep.subr.mxu0 0.0
    %898 = vmatpush1.xpose.msra.mxu0 0.0
    %899 = vmatprep.subr.mxu0 0.0
    %900 = vmatpush1.xpose.msra.mxu0 0.0
    %901 = vmatprep.subr.mxu0 0.0
    %902 = vmatpush1.xpose.msra.mxu0 0.0
    %903 = vmatprep.subr.mxu0 0.0
    %904 = vmatpush1.xpose.msra.mxu0 0.0
    %905 = vmatprep.subr.mxu0 0.0
    %906 = vmatpush1.xpose.msra.mxu0 0.0
    %907 = vmatprep.subr.mxu0 0.0
    %908 = vmatpush1.xpose.msra.mxu0 0.0
    %909 = vmatprep.subr.mxu0 0.0
    %910 = vmatpush1.xpose.msra.mxu0 0.0
    %911 = vmatprep.subr.mxu0 0.0
    %912 = vmatpush1.xpose.msra.mxu0 0.0
    %913 = vmatprep.subr.mxu0 0.0
    %914 = vmatpush1.xpose.msra.mxu0 0.0
    %915 = vmatprep.subr.mxu0 0.0
    %916 = vmatpush1.xpose.msra.mxu0 0.0
    %917 = vmatprep.subr.mxu0 0.0
    %918 = vmatpush1.xpose.msra.mxu0 0.0
    %919 = vmatprep.subr.mxu0 0.0
    %920 = vmatpush1.xpose.msra.mxu0 0.0
    %921 = vmatprep.subr.mxu0 0.0
    %922 = vmatpush1.xpose.msra.mxu0 0.0
    %923 = vmatprep.mubr.f32.mxu0 0.0
    %924 = vmatmul.mubr.f32.gmra.mrb[0].mxu0 %v851
    %v925 = vpop.f32.mrb[0].mxu0
    %v926 = vadd.f32 0.0, %v925
    %v927 = vpop.f32.mrb[0].mxu0
    %928 = vmatprep.mubr.f32.mxu0 0.0
    %929 = vmatmul.mubr.f32.gmra.mrb[0].mxu0 %v853
    %v930 = vpop.f32.mrb[0].mxu0
    %v931 = vadd.f32 0.0, %v930
    %v932 = vpop.f32.mrb[0].mxu0
    %933 = vdwg.mxu0
    %v934 = vmul.f32 %v926, 0.35355338
    %v935 = vmul.f32 %v931, 0.35355338
    %v936 = vadd.f32 %v934, %v129
    %v937 = vadd.f32 %v935, %v130
    %v938 = vsel %vm367, %v936, -inf
    %939 = vmax.xlane.f32.xlu0 %v938
    %v940 = vpop.xlane.xlu0 %939
    %v941 = vsel %vm367, %v937, -inf
    %942 = vmax.xlane.f32.xlu0 %v941
    %v943 = vpop.xlane.xlu0 %942
    %v944 = vsub.f32 %v936, %v940
    %v945 = vsub.f32 %v937, %v943
    %v946 = vmul.f32 %v944, 1.442695
    %v947 = vpow.pop %v946
    %v948 = vmul.f32 %v945, 1.442695
    %v949 = vpow.pop %v948
    %v950 = vsel %vm367, %v947, 0.0
    %951 = vadd.xlane.f32.xlu0 %v950
    %v952 = vpop.xlane.xlu0 %951
    %v953 = vsel %vm367, %v949, 0.0
    %954 = vadd.xlane.f32.xlu0 %v953
    %v955 = vpop.xlane.xlu0 %954
    %v956 = vrcp.pop %v952
    %v957 = vrcp.pop %v955
    %v958 = vmul.f32 %v947, %v956
    %v959 = vmul.f32 %v949, %v957
    %960 = vrot.lane.b32.xlu0 %v261, 48
    %v961 = vpop.permute.xlu0 %960
    %962 = vrot.lane.b32.xlu0 %v266, 48
    %v963 = vpop.permute.xlu0 %962
    %v967 = vsel %vm367, %v958, 0
    %v970 = vsel %vm367, %v959, 0
    %972 = vmatprep.subr.mxu0 0.0
    %973 = vmatpush1.msra.mxu0 %v961
    %974 = vmatprep.subr.mxu0 0.0
    %975 = vmatpush1.msra.mxu0 %v963
    %976 = vmatprep.subr.mxu0 0.0
    %977 = vmatpush1.msra.mxu0 0.0
    %978 = vmatprep.subr.mxu0 0.0
    %979 = vmatpush1.msra.mxu0 0.0
    %980 = vmatprep.subr.mxu0 0.0
    %981 = vmatpush1.msra.mxu0 0.0
    %982 = vmatprep.subr.mxu0 0.0
    %983 = vmatpush1.msra.mxu0 0.0
    %984 = vmatprep.subr.mxu0 0.0
    %985 = vmatpush1.msra.mxu0 0.0
    %986 = vmatprep.subr.mxu0 0.0
    %987 = vmatpush1.msra.mxu0 0.0
    %988 = vmatprep.subr.mxu0 0.0
    %989 = vmatpush1.msra.mxu0 0.0
    %990 = vmatprep.subr.mxu0 0.0
    %991 = vmatpush1.msra.mxu0 0.0
    %992 = vmatprep.subr.mxu0 0.0
    %993 = vmatpush1.msra.mxu0 0.0
    %994 = vmatprep.subr.mxu0 0.0
    %995 = vmatpush1.msra.mxu0 0.0
    %996 = vmatprep.subr.mxu0 0.0
    %997 = vmatpush1.msra.mxu0 0.0
    %998 = vmatprep.subr.mxu0 0.0
    %999 = vmatpush1.msra.mxu0 0.0
    %1000 = vmatprep.subr.mxu0 0.0
    %1001 = vmatpush1.msra.mxu0 0.0
    %1002 = vmatprep.subr.mxu0 0.0
    %1003 = vmatpush1.msra.mxu0 0.0
    %1004 = vmatprep.subr.mxu0 0.0
    %1005 = vmatpush1.msra.mxu0 0.0
    %1006 = vmatprep.subr.mxu0 0.0
    %1007 = vmatpush1.msra.mxu0 0.0
    %1008 = vmatprep.subr.mxu0 0.0
    %1009 = vmatpush1.msra.mxu0 0.0
    %1010 = vmatprep.subr.mxu0 0.0
    %1011 = vmatpush1.msra.mxu0 0.0
    %1012 = vmatprep.subr.mxu0 0.0
    %1013 = vmatpush1.msra.mxu0 0.0
    %1014 = vmatprep.subr.mxu0 0.0
    %1015 = vmatpush1.msra.mxu0 0.0
    %1016 = vmatprep.subr.mxu0 0.0
    %1017 = vmatpush1.msra.mxu0 0.0
    %1018 = vmatprep.subr.mxu0 0.0
    %1019 = vmatpush1.msra.mxu0 0.0
    %1020 = vmatprep.subr.mxu0 0.0
    %1021 = vmatpush1.msra.mxu0 0.0
    %1022 = vmatprep.subr.mxu0 0.0
    %1023 = vmatpush1.msra.mxu0 0.0
    %1024 = vmatprep.subr.mxu0 0.0
    %1025 = vmatpush1.msra.mxu0 0.0
    %1026 = vmatprep.subr.mxu0 0.0
    %1027 = vmatpush1.msra.mxu0 0.0
    %1028 = vmatprep.subr.mxu0 0.0
    %1029 = vmatpush1.msra.mxu0 0.0
    %1030 = vmatprep.subr.mxu0 0.0
    %1031 = vmatpush1.msra.mxu0 0.0
    %1032 = vmatprep.subr.mxu0 0.0
    %1033 = vmatpush1.msra.mxu0 0.0
    %1034 = vmatprep.subr.mxu0 0.0
    %1035 = vmatpush1.msra.mxu0 0.0
    %1036 = vmatprep.mubr.f32.mxu0 0.0
    %1037 = vmatmul.mubr.f32.gmra.mrb[0].mxu0 %v967
    %v1038 = vpop.f32.mrb[0].mxu0
    %v1039 = vadd.f32 0.0, %v1038
    %v1040 = vpop.f32.mrb[0].mxu0
    %1041 = vmatprep.mubr.f32.mxu0 0.0
    %1042 = vmatmul.mubr.f32.gmra.mrb[0].mxu0 %v970
    %v1043 = vpop.f32.mrb[0].mxu0
    %v1044 = vadd.f32 0.0, %v1043
    %v1045 = vpop.f32.mrb[0].mxu0
    %1046 = vdwg.mxu0
    %v1048 = vsel %vm279, %v1039, 0
    %v1051 = vsel %vm279, %v1044, 0
    %1053 = vmatprep.subr.mxu0 0.0
    %1054 = vmatpush1.msra.mxu0 %v271
    %1055 = vmatprep.subr.mxu0 0.0
    %1056 = vmatpush1.msra.mxu0 0.0
    %1057 = vmatprep.subr.mxu0 0.0
    %1058 = vmatpush1.msra.mxu0 0.0
    %1059 = vmatprep.subr.mxu0 0.0
    %1060 = vmatpush1.msra.mxu0 0.0
    %1061 = vmatprep.subr.mxu0 0.0
    %1062 = vmatpush1.msra.mxu0 0.0
    %1063 = vmatprep.subr.mxu0 0.0
    %1064 = vmatpush1.msra.mxu0 0.0
    %1065 = vmatprep.subr.mxu0 0.0
    %1066 = vmatpush1.msra.mxu0 0.0
    %1067 = vmatprep.subr.mxu0 0.0
    %1068 = vmatpush1.msra.mxu0 0.0
    %1069 = vmatprep.subr.mxu0 0.0
    %1070 = vmatpush1.msra.mxu0 0.0
    %1071 = vmatprep.subr.mxu0 0.0
    %1072 = vmatpush1.msra.mxu0 0.0
    %1073 = vmatprep.subr.mxu0 0.0
    %1074 = vmatpush1.msra.mxu0 0.0
    %1075 = vmatprep.subr.mxu0 0.0
    %1076 = vmatpush1.msra.mxu0 0.0
    %1077 = vmatprep.subr.mxu0 0.0
    %1078 = vmatpush1.msra.mxu0 0.0
    %1079 = vmatprep.subr.mxu0 0.0
    %1080 = vmatpush1.msra.mxu0 0.0
    %1081 = vmatprep.subr.mxu0 0.0
    %1082 = vmatpush1.msra.mxu0 0.0
    %1083 = vmatprep.subr.mxu0 0.0
    %1084 = vmatpush1.msra.mxu0 0.0
    %1085 = vmatprep.subr.mxu0 0.0
    %1086 = vmatpush1.msra.mxu0 0.0
    %1087 = vmatprep.subr.mxu0 0.0
    %1088 = vmatpush1.msra.mxu0 0.0
    %1089 = vmatprep.subr.mxu0 0.0
    %1090 = vmatpush1.msra.mxu0 0.0
    %1091 = vmatprep.subr.mxu0 0.0
    %1092 = vmatpush1.msra.mxu0 0.0
    %1093 = vmatprep.subr.mxu0 0.0
    %1094 = vmatpush1.msra.mxu0 0.0
    %1095 = vmatprep.subr.mxu0 0.0
    %1096 = vmatpush1.msra.mxu0 0.0
    %1097 = vmatprep.subr.mxu0 0.0
    %1098 = vmatpush1.msra.mxu0 0.0
    %1099 = vmatprep.subr.mxu0 0.0
    %1100 = vmatpush1.msra.mxu0 0.0
    %1101 = vmatprep.subr.mxu0 0.0
    %1102 = vmatpush1.msra.mxu0 0.0
    %1103 = vmatprep.subr.mxu0 0.0
    %1104 = vmatpush1.msra.mxu0 0.0
    %1105 = vmatprep.subr.mxu0 0.0
    %1106 = vmatpush1.msra.mxu0 0.0
    %1107 = vmatprep.subr.mxu0 0.0
    %1108 = vmatpush1.msra.mxu0 0.0
    %1109 = vmatprep.subr.mxu0 0.0
    %1110 = vmatpush1.msra.mxu0 0.0
    %1111 = vmatprep.subr.mxu0 0.0
    %1112 = vmatpush1.msra.mxu0 0.0
    %1113 = vmatprep.subr.mxu0 0.0
    %1114 = vmatpush1.msra.mxu0 0.0
    %1115 = vmatprep.subr.mxu0 0.0
    %1116 = vmatpush1.msra.mxu0 0.0
    %1117 = vmatprep.mubr.f32.mxu0 0.0
    %1118 = vmatmul.mubr.f32.gmra.mrb[0].mxu0 %v1048
    %v1119 = vpop.f32.mrb[0].mxu0
    %v1120 = vadd.f32 0.0, %v1119
    %v1121 = vpop.f32.mrb[0].mxu0
    %1122 = vmatprep.mubr.f32.mxu0 0.0
    %1123 = vmatmul.mubr.f32.gmra.mrb[0].mxu0 %v1051
    %v1124 = vpop.f32.mrb[0].mxu0
    %v1125 = vadd.f32 0.0, %v1124
    %v1126 = vpop.f32.mrb[0].mxu0
    %1127 = vdwg.mxu0
    %v1128 = vadd.f32 %v835, %v1120
    %v1129 = vadd.f32 %v840, %v1125
    %1130 = vrot.lane.b32.xlu0 %v261, 104
    %v1131 = vpop.permute.xlu0 %1130
    %1132 = vrot.lane.b32.xlu0 %v266, 104
    %v1133 = vpop.permute.xlu0 %1132
    %1134 = vrot.lane.b32.xlu0 %v261, 72
    %v1135 = vpop.permute.xlu0 %1134
    %1136 = vrot.lane.b32.xlu0 %v266, 72
    %v1137 = vpop.permute.xlu0 %1136
    %v1138 = vsel %vm279, %v1131, 0
    %v1140 = vsel %vm279, %v1133, 0
    %v1142 = vsel %vm279, %v1135, 0
    %v1144 = vsel %vm279, %v1137, 0
    %1146 = vmatprep.subr.mxu0 0.0
    %1147 = vmatpush1.xpose.msra.mxu0 %v1142
    %1148 = vmatprep.subr.mxu0 0.0
    %1149 = vmatpush1.xpose.msra.mxu0 %v1144
    %1150 = vmatprep.subr.mxu0 0.0
    %1151 = vmatpush1.xpose.msra.mxu0 0.0
    %1152 = vmatprep.subr.mxu0 0.0
    %1153 = vmatpush1.xpose.msra.mxu0 0.0
    %1154 = vmatprep.subr.mxu0 0.0
    %1155 = vmatpush1.xpose.msra.mxu0 0.0
    %1156 = vmatprep.subr.mxu0 0.0
    %1157 = vmatpush1.xpose.msra.mxu0 0.0
    %1158 = vmatprep.subr.mxu0 0.0
    %1159 = vmatpush1.xpose.msra.mxu0 0.0
    %1160 = vmatprep.subr.mxu0 0.0
    %1161 = vmatpush1.xpose.msra.mxu0 0.0
    %1162 = vmatprep.subr.mxu0 0.0
    %1163 = vmatpush1.xpose.msra.mxu0 0.0
    %1164 = vmatprep.subr.mxu0 0.0
    %1165 = vmatpush1.xpose.msra.mxu0 0.0
    %1166 = vmatprep.subr.mxu0 0.0
    %1167 = vmatpush1.xpose.msra.mxu0 0.0
    %1168 = vmatprep.subr.mxu0 0.0
    %1169 = vmatpush1.xpose.msra.mxu0 0.0
    %1170 = vmatprep.subr.mxu0 0.0
    %1171 = vmatpush1.xpose.msra.mxu0 0.0
    %1172 = vmatprep.subr.mxu0 0.0
    %1173 = vmatpush1.xpose.msra.mxu0 0.0
    %1174 = vmatprep.subr.mxu0 0.0
    %1175 = vmatpush1.xpose.msra.mxu0 0.0
    %1176 = vmatprep.subr.mxu0 0.0
    %1177 = vmatpush1.xpose.msra.mxu0 0.0
    %1178 = vmatprep.subr.mxu0 0.0
    %1179 = vmatpush1.xpose.msra.mxu0 0.0
    %1180 = vmatprep.subr.mxu0 0.0
    %1181 = vmatpush1.xpose.msra.mxu0 0.0
    %1182 = vmatprep.subr.mxu0 0.0
    %1183 = vmatpush1.xpose.msra.mxu0 0.0
    %1184 = vmatprep.subr.mxu0 0.0
    %1185 = vmatpush1.xpose.msra.mxu0 0.0
    %1186 = vmatprep.subr.mxu0 0.0
    %1187 = vmatpush1.xpose.msra.mxu0 0.0
    %1188 = vmatprep.subr.mxu0 0.0
    %1189 = vmatpush1.xpose.msra.mxu0 0.0
    %1190 = vmatprep.subr.mxu0 0.0
    %1191 = vmatpush1.xpose.msra.mxu0 0.0
    %1192 = vmatprep.subr.mxu0 0.0
    %1193 = vmatpush1.xpose.msra.mxu0 0.0
    %1194 = vmatprep.subr.mxu0 0.0
    %1195 = vmatpush1.xpose.msra.mxu0 0.0
    %1196 = vmatprep.subr.mxu0 0.0
    %1197 = vmatpush1.xpose.msra.mxu0 0.0
    %1198 = vmatprep.subr.mxu0 0.0
    %1199 = vmatpush1.xpose.msra.mxu0 0.0
    %1200 = vmatprep.subr.mxu0 0.0
    %1201 = vmatpush1.xpose.msra.mxu0 0.0
    %1202 = vmatprep.subr.mxu0 0.0
    %1203 = vmatpush1.xpose.msra.mxu0 0.0
    %1204 = vmatprep.subr.mxu0 0.0
    %1205 = vmatpush1.xpose.msra.mxu0 0.0
    %1206 = vmatprep.subr.mxu0 0.0
    %1207 = vmatpush1.xpose.msra.mxu0 0.0
    %1208 = vmatprep.subr.mxu0 0.0
    %1209 = vmatpush1.xpose.msra.mxu0 0.0
    %1210 = vmatprep.mubr.f32.mxu0 0.0
    %1211 = vmatmul.mubr.f32.gmra.mrb[0].mxu0 %v1138
    %v1212 = vpop.f32.mrb[0].mxu0
    %v1213 = vadd.f32 0.0, %v1212
    %v1214 = vpop.f32.mrb[0].mxu0
    %1215 = vmatprep.mubr.f32.mxu0 0.0
    %1216 = vmatmul.mubr.f32.gmra.mrb[0].mxu0 %v1140
    %v1217 = vpop.f32.mrb[0].mxu0
    %v1218 = vadd.f32 0.0, %v1217
    %v1219 = vpop.f32.mrb[0].mxu0
    %1220 = vdwg.mxu0
    %v1221 = vmul.f32 %v1213, 0.35355338
    %v1222 = vmul.f32 %v1218, 0.35355338
    %v1223 = vadd.f32 %v1221, %v129
    %v1224 = vadd.f32 %v1222, %v130
    %v1225 = vsel %vm367, %v1223, -inf
    %1226 = vmax.xlane.f32.xlu0 %v1225
    %v1227 = vpop.xlane.xlu0 %1226
    %v1228 = vsel %vm367, %v1224, -inf
    %1229 = vmax.xlane.f32.xlu0 %v1228
    %v1230 = vpop.xlane.xlu0 %1229
    %v1231 = vsub.f32 %v1223, %v1227
    %v1232 = vsub.f32 %v1224, %v1230
    %v1233 = vmul.f32 %v1231, 1.442695
    %v1234 = vpow.pop %v1233
    %v1235 = vmul.f32 %v1232, 1.442695
    %v1236 = vpow.pop %v1235
    %v1237 = vsel %vm367, %v1234, 0.0
    %1238 = vadd.xlane.f32.xlu0 %v1237
    %v1239 = vpop.xlane.xlu0 %1238
    %v1240 = vsel %vm367, %v1236, 0.0
    %1241 = vadd.xlane.f32.xlu0 %v1240
    %v1242 = vpop.xlane.xlu0 %1241
    %v1243 = vrcp.pop %v1239
    %v1244 = vrcp.pop %v1242
    %v1245 = vmul.f32 %v1234, %v1243
    %v1246 = vmul.f32 %v1236, %v1244
    %1247 = vrot.lane.b32.xlu0 %v261, 40
    %v1248 = vpop.permute.xlu0 %1247
    %1249 = vrot.lane.b32.xlu0 %v266, 40
    %v1250 = vpop.permute.xlu0 %1249
    %v1254 = vsel %vm367, %v1245, 0
    %v1257 = vsel %vm367, %v1246, 0
    %1259 = vmatprep.subr.mxu0 0.0
    %1260 = vmatpush1.msra.mxu0 %v1248
    %1261 = vmatprep.subr.mxu0 0.0
    %1262 = vmatpush1.msra.mxu0 %v1250
    %1263 = vmatprep.subr.mxu0 0.0
    %1264 = vmatpush1.msra.mxu0 0.0
    %1265 = vmatprep.subr.mxu0 0.0
    %1266 = vmatpush1.msra.mxu0 0.0
    %1267 = vmatprep.subr.mxu0 0.0
    %1268 = vmatpush1.msra.mxu0 0.0
    %1269 = vmatprep.subr.mxu0 0.0
    %1270 = vmatpush1.msra.mxu0 0.0
    %1271 = vmatprep.subr.mxu0 0.0
    %1272 = vmatpush1.msra.mxu0 0.0
    %1273 = vmatprep.subr.mxu0 0.0
    %1274 = vmatpush1.msra.mxu0 0.0
    %1275 = vmatprep.subr.mxu0 0.0
    %1276 = vmatpush1.msra.mxu0 0.0
    %1277 = vmatprep.subr.mxu0 0.0
    %1278 = vmatpush1.msra.mxu0 0.0
    %1279 = vmatprep.subr.mxu0 0.0
    %1280 = vmatpush1.msra.mxu0 0.0
    %1281 = vmatprep.subr.mxu0 0.0
    %1282 = vmatpush1.msra.mxu0 0.0
    %1283 = vmatprep.subr.mxu0 0.0
    %1284 = vmatpush1.msra.mxu0 0.0
    %1285 = vmatprep.subr.mxu0 0.0
    %1286 = vmatpush1.msra.mxu0 0.0
    %1287 = vmatprep.subr.mxu0 0.0
    %1288 = vmatpush1.msra.mxu0 0.0
    %1289 = vmatprep.subr.mxu0 0.0
    %1290 = vmatpush1.msra.mxu0 0.0
    %1291 = vmatprep.subr.mxu0 0.0
    %1292 = vmatpush1.msra.mxu0 0.0
    %1293 = vmatprep.subr.mxu0 0.0
    %1294 = vmatpush1.msra.mxu0 0.0
    %1295 = vmatprep.subr.mxu0 0.0
    %1296 = vmatpush1.msra.mxu0 0.0
    %1297 = vmatprep.subr.mxu0 0.0
    %1298 = vmatpush1.msra.mxu0 0.0
    %1299 = vmatprep.subr.mxu0 0.0
    %1300 = vmatpush1.msra.mxu0 0.0
    %1301 = vmatprep.subr.mxu0 0.0
    %1302 = vmatpush1.msra.mxu0 0.0
    %1303 = vmatprep.subr.mxu0 0.0
    %1304 = vmatpush1.msra.mxu0 0.0
    %1305 = vmatprep.subr.mxu0 0.0
    %1306 = vmatpush1.msra.mxu0 0.0
    %1307 = vmatprep.subr.mxu0 0.0
    %1308 = vmatpush1.msra.mxu0 0.0
    %1309 = vmatprep.subr.mxu0 0.0
    %1310 = vmatpush1.msra.mxu0 0.0
    %1311 = vmatprep.subr.mxu0 0.0
    %1312 = vmatpush1.msra.mxu0 0.0
    %1313 = vmatprep.subr.mxu0 0.0
    %1314 = vmatpush1.msra.mxu0 0.0
    %1315 = vmatprep.subr.mxu0 0.0
    %1316 = vmatpush1.msra.mxu0 0.0
    %1317 = vmatprep.subr.mxu0 0.0
    %1318 = vmatpush1.msra.mxu0 0.0
    %1319 = vmatprep.subr.mxu0 0.0
    %1320 = vmatpush1.msra.mxu0 0.0
    %1321 = vmatprep.subr.mxu0 0.0
    %1322 = vmatpush1.msra.mxu0 0.0
    %1323 = vmatprep.mubr.f32.mxu0 0.0
    %1324 = vmatmul.mubr.f32.gmra.mrb[0].mxu0 %v1254
    %v1325 = vpop.f32.mrb[0].mxu0
    %v1326 = vadd.f32 0.0, %v1325
    %v1327 = vpop.f32.mrb[0].mxu0
    %1328 = vmatprep.mubr.f32.mxu0 0.0
    %1329 = vmatmul.mubr.f32.gmra.mrb[0].mxu0 %v1257
    %v1330 = vpop.f32.mrb[0].mxu0
    %v1331 = vadd.f32 0.0, %v1330
    %v1332 = vpop.f32.mrb[0].mxu0
    %1333 = vdwg.mxu0
    %v1335 = vsel %vm279, %v1326, 0
    %v1338 = vsel %vm279, %v1331, 0
    %1340 = vmatprep.subr.mxu0 0.0
    %1341 = vmatpush1.msra.mxu0 %v272
    %1342 = vmatprep.subr.mxu0 0.0
    %1343 = vmatpush1.msra.mxu0 0.0
    %1344 = vmatprep.subr.mxu0 0.0
    %1345 = vmatpush1.msra.mxu0 0.0
    %1346 = vmatprep.subr.mxu0 0.0
    %1347 = vmatpush1.msra.mxu0 0.0
    %1348 = vmatprep.subr.mxu0 0.0
    %1349 = vmatpush1.msra.mxu0 0.0
    %1350 = vmatprep.subr.mxu0 0.0
    %1351 = vmatpush1.msra.mxu0 0.0
    %1352 = vmatprep.subr.mxu0 0.0
    %1353 = vmatpush1.msra.mxu0 0.0
    %1354 = vmatprep.subr.mxu0 0.0
    %1355 = vmatpush1.msra.mxu0 0.0
    %1356 = vmatprep.subr.mxu0 0.0
    %1357 = vmatpush1.msra.mxu0 0.0
    %1358 = vmatprep.subr.mxu0 0.0
    %1359 = vmatpush1.msra.mxu0 0.0
    %1360 = vmatprep.subr.mxu0 0.0
    %1361 = vmatpush1.msra.mxu0 0.0
    %1362 = vmatprep.subr.mxu0 0.0
    %1363 = vmatpush1.msra.mxu0 0.0
    %1364 = vmatprep.subr.mxu0 0.0
    %1365 = vmatpush1.msra.mxu0 0.0
    %1366 = vmatprep.subr.mxu0 0.0
    %1367 = vmatpush1.msra.mxu0 0.0
    %1368 = vmatprep.subr.mxu0 0.0
    %1369 = vmatpush1.msra.mxu0 0.0
    %1370 = vmatprep.subr.mxu0 0.0
    %1371 = vmatpush1.msra.mxu0 0.0
    %1372 = vmatprep.subr.mxu0 0.0
    %1373 = vmatpush1.msra.mxu0 0.0
    %1374 = vmatprep.subr.mxu0 0.0
    %1375 = vmatpush1.msra.mxu0 0.0
    %1376 = vmatprep.subr.mxu0 0.0
    %1377 = vmatpush1.msra.mxu0 0.0
    %1378 = vmatprep.subr.mxu0 0.0
    %1379 = vmatpush1.msra.mxu0 0.0
    %1380 = vmatprep.subr.mxu0 0.0
    %1381 = vmatpush1.msra.mxu0 0.0
    %1382 = vmatprep.subr.mxu0 0.0
    %1383 = vmatpush1.msra.mxu0 0.0
    %1384 = vmatprep.subr.mxu0 0.0
    %1385 = vmatpush1.msra.mxu0 0.0
    %1386 = vmatprep.subr.mxu0 0.0
    %1387 = vmatpush1.msra.mxu0 0.0
    %1388 = vmatprep.subr.mxu0 0.0
    %1389 = vmatpush1.msra.mxu0 0.0
    %1390 = vmatprep.subr.mxu0 0.0
    %1391 = vmatpush1.msra.mxu0 0.0
    %1392 = vmatprep.subr.mxu0 0.0
    %1393 = vmatpush1.msra.mxu0 0.0
    %1394 = vmatprep.subr.mxu0 0.0
    %1395 = vmatpush1.msra.mxu0 0.0
    %1396 = vmatprep.subr.mxu0 0.0
    %1397 = vmatpush1.msra.mxu0 0.0
    %1398 = vmatprep.subr.mxu0 0.0
    %1399 = vmatpush1.msra.mxu0 0.0
    %1400 = vmatprep.subr.mxu0 0.0
    %1401 = vmatpush1.msra.mxu0 0.0
    %1402 = vmatprep.subr.mxu0 0.0
    %1403 = vmatpush1.msra.mxu0 0.0
    %1404 = vmatprep.mubr.f32.mxu0 0.0
    %1405 = vmatmul.mubr.f32.gmra.mrb[0].mxu0 %v1335
    %v1406 = vpop.f32.mrb[0].mxu0
    %v1407 = vadd.f32 0.0, %v1406
    %v1408 = vpop.f32.mrb[0].mxu0
    %1409 = vmatprep.mubr.f32.mxu0 0.0
    %1410 = vmatmul.mubr.f32.gmra.mrb[0].mxu0 %v1338
    %v1411 = vpop.f32.mrb[0].mxu0
    %v1412 = vadd.f32 0.0, %v1411
    %v1413 = vpop.f32.mrb[0].mxu0
    %1414 = vdwg.mxu0
    %v1415 = vadd.f32 %v1128, %v1407
    %v1416 = vadd.f32 %v1129, %v1412
    %v1417 = vadd.f32 %v127, %v1415
    %v1418 = vadd.f32 %v128, %v1416
    %v1419 = vld [vmem:[%s11] sm:$0x1]
    %v1421 = vlaneseq
    %v1422 = vshrl.u32 %v1421, 7
    %v1423 = vsub.s32 0, %v1422
    %v1424 = vrot.slane %v1419, %v1423
    %v1426 = vadd.f32 %v1417, %v1424
    %v1427 = vadd.f32 %v1418, %v1424
    %v1428 = vld [vmem:[%s17] sm:$0x1]
    %v1429 = vld [vmem:[%s19] sm:$0x1]
    %v1430 = vsel %vm133, %v1426, 0.0
    %1431 = vadd.xlane.f32.xlu0 %v1430
    %v1432 = vpop.xlane.xlu0 %1431
    %v1433 = vsel %vm133, %v1427, 0.0
    %1434 = vadd.xlane.f32.xlu0 %v1433
    %v1435 = vpop.xlane.xlu0 %1434
    %v1436 = vmul.f32 %v1432, %v140
    %v1437 = vmul.f32 %v1435, %v140
    %v1438 = vsub.f32 %v1426, %v1436
    %v1439 = vsub.f32 %v1427, %v1437
    %v1440 = vmul.f32 %v1438, %v1438
    %v1441 = vmul.f32 %v1439, %v1439
    %v1442 = vsel %vm133, %v1440, 0.0
    %1443 = vadd.xlane.f32.xlu0 %v1442
    %v1444 = vpop.xlane.xlu0 %1443
    %v1445 = vsel %vm133, %v1441, 0.0
    %1446 = vadd.xlane.f32.xlu0 %v1445
    %v1447 = vpop.xlane.xlu0 %1446
    %v1448 = vmul.f32 %v1444, %v140
    %v1449 = vmul.f32 %v1447, %v140
    %v1450 = vadd.f32 %v1448, 1e-05
    %v1451 = vadd.f32 %v1449, 1e-05
    %v1452 = vrsqrt.pop %v1450
    %v1453 = vrsqrt.pop %v1451
    %v1454 = vmul.f32 %v1438, %v1452
    %v1455 = vmul.f32 %v1439, %v1453
    %v1457 = vlaneseq
    %v1458 = vshrl.u32 %v1457, 7
    %v1459 = vsub.s32 0, %v1458
    %v1460 = vrot.slane %v1428, %v1459
    %v1462 = vmul.f32 %v1454, %v1460
    %v1463 = vmul.f32 %v1455, %v1460
    %v1465 = vlaneseq
    %v1466 = vshrl.u32 %v1465, 7
    %v1467 = vsub.s32 0, %v1466
    %v1468 = vrot.slane %v1429, %v1467
    %v1470 = vadd.f32 %v1462, %v1468
    %v1471 = vadd.f32 %v1463, %v1468
    %v1472 = vld [vmem:[%s21] sm:$0xff]
    %v1473 = vld [vmem:[%s21 + $0x8] sm:$0xff]
    %v1474 = vld [vmem:[%s21 + $0x10] sm:$0xff]
    %v1475 = vld [vmem:[%s21 + $0x18] sm:$0xff]
    %v1476 = vld [vmem:[%s23] sm:$0x1]
    %v1478 = vlaneseq
    %v1479 = vshrl.u32 %v1478, 7
    %v1480 = vsub.s32 0, %v1479
    %v1481 = vrot.slane %v1476, %v1480
    %v1484 = vsel %vm133, %v1470, 0
    %v1487 = vsel %vm133, %v1471, 0
    %1489 = vmatprep.subr.mxu0 0.0
    %1490 = vmatpush1.msra.mxu0 %v1472
    %1491 = vmatprep.subr.mxu0 0.0
    %1492 = vmatpush1.msra.mxu0 %v1473
    %1493 = vmatprep.subr.mxu0 0.0
    %1494 = vmatpush1.msra.mxu0 %v1474
    %1495 = vmatprep.subr.mxu0 0.0
    %1496 = vmatpush1.msra.mxu0 %v1475
    %1497 = vmatprep.subr.mxu0 0.0
    %1498 = vmatpush1.msra.mxu0 0.0
    %1499 = vmatprep.subr.mxu0 0.0
    %1500 = vmatpush1.msra.mxu0 0.0
    %1501 = vmatprep.subr.mxu0 0.0
    %1502 = vmatpush1.msra.mxu0 0.0
    %1503 = vmatprep.subr.mxu0 0.0
    %1504 = vmatpush1.msra.mxu0 0.0
    %1505 = vmatprep.subr.mxu0 0.0
    %1506 = vmatpush1.msra.mxu0 0.0
    %1507 = vmatprep.subr.mxu0 0.0
    %1508 = vmatpush1.msra.mxu0 0.0
    %1509 = vmatprep.subr.mxu0 0.0
    %1510 = vmatpush1.msra.mxu0 0.0
    %1511 = vmatprep.subr.mxu0 0.0
    %1512 = vmatpush1.msra.mxu0 0.0
    %1513 = vmatprep.subr.mxu0 0.0
    %1514 = vmatpush1.msra.mxu0 0.0
    %1515 = vmatprep.subr.mxu0 0.0
    %1516 = vmatpush1.msra.mxu0 0.0
    %1517 = vmatprep.subr.mxu0 0.0
    %1518 = vmatpush1.msra.mxu0 0.0
    %1519 = vmatprep.subr.mxu0 0.0
    %1520 = vmatpush1.msra.mxu0 0.0
    %1521 = vmatprep.subr.mxu0 0.0
    %1522 = vmatpush1.msra.mxu0 0.0
    %1523 = vmatprep.subr.mxu0 0.0
    %1524 = vmatpush1.msra.mxu0 0.0
    %1525 = vmatprep.subr.mxu0 0.0
    %1526 = vmatpush1.msra.mxu0 0.0
    %1527 = vmatprep.subr.mxu0 0.0
    %1528 = vmatpush1.msra.mxu0 0.0
    %1529 = vmatprep.subr.mxu0 0.0
    %1530 = vmatpush1.msra.mxu0 0.0
    %1531 = vmatprep.subr.mxu0 0.0
    %1532 = vmatpush1.msra.mxu0 0.0
    %1533 = vmatprep.subr.mxu0 0.0
    %1534 = vmatpush1.msra.mxu0 0.0
    %1535 = vmatprep.subr.mxu0 0.0
    %1536 = vmatpush1.msra.mxu0 0.0
    %1537 = vmatprep.subr.mxu0 0.0
    %1538 = vmatpush1.msra.mxu0 0.0
    %1539 = vmatprep.subr.mxu0 0.0
    %1540 = vmatpush1.msra.mxu0 0.0
    %1541 = vmatprep.subr.mxu0 0.0
    %1542 = vmatpush1.msra.mxu0 0.0
    %1543 = vmatprep.subr.mxu0 0.0
    %1544 = vmatpush1.msra.mxu0 0.0
    %1545 = vmatprep.subr.mxu0 0.0
    %1546 = vmatpush1.msra.mxu0 0.0
    %1547 = vmatprep.subr.mxu0 0.0
    %1548 = vmatpush1.msra.mxu0 0.0
    %1549 = vmatprep.subr.mxu0 0.0
    %1550 = vmatpush1.msra.mxu0 0.0
    %1551 = vmatprep.subr.mxu0 0.0
    %1552 = vmatpush1.msra.mxu0 0.0
    %1553 = vmatprep.mubr.f32.mxu0 0.0
    %1554 = vmatmul.mubr.f32.gmra.mrb[0].mxu0 %v1484
    %v1555 = vpop.f32.mrb[0].mxu0
    %v1556 = vadd.f32 %v1481, %v1555
    %v1557 = vpop.f32.mrb[0].mxu0
    %1558 = vmatprep.mubr.f32.mxu0 0.0
    %1559 = vmatmul.mubr.f32.gmra.mrb[0].mxu0 %v1487
    %v1560 = vpop.f32.mrb[0].mxu0
    %v1561 = vadd.f32 %v1481, %v1560
    %v1562 = vpop.f32.mrb[0].mxu0
    %1563 = vdwg.mxu0
    %v1564 = vmul.f32 %v1556, 0.5
    %v1565 = vmul.f32 %v1561, 0.5
    %v1566 = vmul.f32 %v1556, 0.70710677
    %v1567 = vmul.f32 %v1561, 0.70710677
    %v1568 = verf.f32.pop %v1566
    %v1569 = verf.f32.pop %v1567
    %v1570 = vadd.f32 %v1568, 1.0
    %v1571 = vadd.f32 %v1569, 1.0
    %v1572 = vmul.f32 %v1564, %v1570
    %v1573 = vmul.f32 %v1565, %v1571
    %v1574 = vld [vmem:[%s25] sm:$0xff]
    %v1575 = vld [vmem:[%s25 + $0x8] sm:$0xff]
    %v1576 = vld [vmem:[%s25 + $0x10] sm:$0xff]
    %v1577 = vld [vmem:[%s25 + $0x18] sm:$0xff]
    %v1578 = vld [vmem:[%s25 + $0x20] sm:$0xff]
    %v1579 = vld [vmem:[%s25 + $0x28] sm:$0xff]
    %v1580 = vld [vmem:[%s25 + $0x30] sm:$0xff]
    %v1581 = vld [vmem:[%s25 + $0x38] sm:$0xff]
    %v1582 = vld [vmem:[%s25 + $0x40] sm:$0xff]
    %v1583 = vld [vmem:[%s25 + $0x48] sm:$0xff]
    %v1584 = vld [vmem:[%s25 + $0x50] sm:$0xff]
    %v1585 = vld [vmem:[%s25 + $0x58] sm:$0xff]
    %v1586 = vld [vmem:[%s25 + $0x60] sm:$0xff]
    %v1587 = vld [vmem:[%s25 + $0x68] sm:$0xff]
    %v1588 = vld [vmem:[%s25 + $0x70] sm:$0xff]
    %v1589 = vld [vmem:[%s25 + $0x78] sm:$0xff]
    %v1590 = vld [vmem:[%s27] sm:$0x1]
    %v1592 = vlaneseq
    %v1593 = vshrl.u32 %v1592, 7
    %v1594 = vsub.s32 0, %v1593
    %v1595 = vrot.slane %v1590, %v1594
    %1597 = vmatprep.subr.mxu0 0.0
    %1598 = vmatpush1.msra.mxu0 %v1574
    %1599 = vmatprep.subr.mxu0 0.0
    %1600 = vmatpush1.msra.mxu0 %v1575
    %1601 = vmatprep.subr.mxu0 0.0
    %1602 = vmatpush1.msra.mxu0 %v1576
    %1603 = vmatprep.subr.mxu0 0.0
    %1604 = vmatpush1.msra.mxu0 %v1577
    %1605 = vmatprep.subr.mxu0 0.0
    %1606 = vmatpush1.msra.mxu0 %v1578
    %1607 = vmatprep.subr.mxu0 0.0
    %1608 = vmatpush1.msra.mxu0 %v1579
    %1609 = vmatprep.subr.mxu0 0.0
    %1610 = vmatpush1.msra.mxu0 %v1580
    %1611 = vmatprep.subr.mxu0 0.0
    %1612 = vmatpush1.msra.mxu0 %v1581
    %1613 = vmatprep.subr.mxu0 0.0
    %1614 = vmatpush1.msra.mxu0 %v1582
    %1615 = vmatprep.subr.mxu0 0.0
    %1616 = vmatpush1.msra.mxu0 %v1583
    %1617 = vmatprep.subr.mxu0 0.0
    %1618 = vmatpush1.msra.mxu0 %v1584
    %1619 = vmatprep.subr.mxu0 0.0
    %1620 = vmatpush1.msra.mxu0 %v1585
    %1621 = vmatprep.subr.mxu0 0.0
    %1622 = vmatpush1.msra.mxu0 %v1586
    %1623 = vmatprep.subr.mxu0 0.0
    %1624 = vmatpush1.msra.mxu0 %v1587
    %1625 = vmatprep.subr.mxu0 0.0
    %1626 = vmatpush1.msra.mxu0 %v1588
    %1627 = vmatprep.subr.mxu0 0.0
    %1628 = vmatpush1.msra.mxu0 %v1589
    %1629 = vmatprep.subr.mxu0 0.0
    %1630 = vmatpush1.msra.mxu0 0.0
    %1631 = vmatprep.subr.mxu0 0.0
    %1632 = vmatpush1.msra.mxu0 0.0
    %1633 = vmatprep.subr.mxu0 0.0
    %1634 = vmatpush1.msra.mxu0 0.0
    %1635 = vmatprep.subr.mxu0 0.0
    %1636 = vmatpush1.msra.mxu0 0.0
    %1637 = vmatprep.subr.mxu0 0.0
    %1638 = vmatpush1.msra.mxu0 0.0
    %1639 = vmatprep.subr.mxu0 0.0
    %1640 = vmatpush1.msra.mxu0 0.0
    %1641 = vmatprep.subr.mxu0 0.0
    %1642 = vmatpush1.msra.mxu0 0.0
    %1643 = vmatprep.subr.mxu0 0.0
    %1644 = vmatpush1.msra.mxu0 0.0
    %1645 = vmatprep.subr.mxu0 0.0
    %1646 = vmatpush1.msra.mxu0 0.0
    %1647 = vmatprep.subr.mxu0 0.0
    %1648 = vmatpush1.msra.mxu0 0.0
    %1649 = vmatprep.subr.mxu0 0.0
    %1650 = vmatpush1.msra.mxu0 0.0
    %1651 = vmatprep.subr.mxu0 0.0
    %1652 = vmatpush1.msra.mxu0 0.0
    %1653 = vmatprep.subr.mxu0 0.0
    %1654 = vmatpush1.msra.mxu0 0.0
    %1655 = vmatprep.subr.mxu0 0.0
    %1656 = vmatpush1.msra.mxu0 0.0
    %1657 = vmatprep.subr.mxu0 0.0
    %1658 = vmatpush1.msra.mxu0 0.0
    %1659 = vmatprep.subr.mxu0 0.0
    %1660 = vmatpush1.msra.mxu0 0.0
    %1661 = vmatprep.mubr.f32.mxu0 0.0
    %1662 = vmatmul.mubr.f32.gmra.mrb[0].mxu0 %v1572
    %v1663 = vpop.f32.mrb[0].mxu0
    %v1664 = vadd.f32 %v1595, %v1663
    %v1665 = vpop.f32.mrb[0].mxu0
    %1666 = vmatprep.mubr.f32.mxu0 0.0
    %1667 = vmatmul.mubr.f32.gmra.mrb[0].mxu0 %v1573
    %v1668 = vpop.f32.mrb[0].mxu0
    %v1669 = vadd.f32 %v1595, %v1668
    %v1670 = vpop.f32.mrb[0].mxu0
    %1671 = vdwg.mxu0
    %v1672 = vadd.f32 %v1426, %v1664
    %v1673 = vadd.f32 %v1427, %v1669
    %v1674 = vld [vmem:[%s37] sm:$0x1]
    %v1675 = vld [vmem:[%s39] sm:$0x1]
    %v1676 = vsel %vm133, %v1672, 0.0
    %1677 = vadd.xlane.f32.xlu0 %v1676
    %v1678 = vpop.xlane.xlu0 %1677
    %v1679 = vsel %vm133, %v1673, 0.0
    %1680 = vadd.xlane.f32.xlu0 %v1679
    %v1681 = vpop.xlane.xlu0 %1680
    %v1682 = vmul.f32 %v1678, %v140
    %v1683 = vmul.f32 %v1681, %v140
    %v1684 = vsub.f32 %v1672, %v1682
    %v1685 = vsub.f32 %v1673, %v1683
    %v1686 = vmul.f32 %v1684, %v1684
    %v1687 = vmul.f32 %v1685, %v1685
    %v1688 = vsel %vm133, %v1686, 0.0
    %1689 = vadd.xlane.f32.xlu0 %v1688
    %v1690 = vpop.xlane.xlu0 %1689
    %v1691 = vsel %vm133, %v1687, 0.0
    %1692 = vadd.xlane.f32.xlu0 %v1691
    %v1693 = vpop.xlane.xlu0 %1692
    %v1694 = vmul.f32 %v1690, %v140
    %v1695 = vmul.f32 %v1693, %v140
    %v1696 = vadd.f32 %v1694, 1e-05
    %v1697 = vadd.f32 %v1695, 1e-05
    %v1698 = vrsqrt.pop %v1696
    %v1699 = vrsqrt.pop %v1697
    %v1700 = vmul.f32 %v1684, %v1698
    %v1701 = vmul.f32 %v1685, %v1699
    %v1703 = vlaneseq
    %v1704 = vshrl.u32 %v1703, 7
    %v1705 = vsub.s32 0, %v1704
    %v1706 = vrot.slane %v1674, %v1705
    %v1708 = vmul.f32 %v1700, %v1706
    %v1709 = vmul.f32 %v1701, %v1706
    %v1711 = vlaneseq
    %v1712 = vshrl.u32 %v1711, 7
    %v1713 = vsub.s32 0, %v1712
    %v1714 = vrot.slane %v1675, %v1713
    %v1716 = vadd.f32 %v1708, %v1714
    %v1717 = vadd.f32 %v1709, %v1714
    %v1718 = vld [vmem:[%s29] sm:$0xff]
    %v1719 = vld [vmem:[%s29 + $0x8] sm:$0xff]
    %v1720 = vld [vmem:[%s29 + $0x10] sm:$0xff]
    %v1721 = vld [vmem:[%s29 + $0x18] sm:$0xff]
    %v1722 = vld [vmem:[%s31] sm:$0x1]
    %v1724 = vlaneseq
    %v1725 = vshrl.u32 %v1724, 7
    %v1726 = vsub.s32 0, %v1725
    %v1727 = vrot.slane %v1722, %v1726
    %v1730 = vsel %vm133, %v1716, 0
    %v1733 = vsel %vm133, %v1717, 0
    %1735 = vmatprep.subr.mxu0 0.0
    %1736 = vmatpush1.msra.mxu0 %v1718
    %1737 = vmatprep.subr.mxu0 0.0
    %1738 = vmatpush1.msra.mxu0 %v1719
    %1739 = vmatprep.subr.mxu0 0.0
    %1740 = vmatpush1.msra.mxu0 %v1720
    %1741 = vmatprep.subr.mxu0 0.0
    %1742 = vmatpush1.msra.mxu0 %v1721
    %1743 = vmatprep.subr.mxu0 0.0
    %1744 = vmatpush1.msra.mxu0 0.0
    %1745 = vmatprep.subr.mxu0 0.0
    %1746 = vmatpush1.msra.mxu0 0.0
    %1747 = vmatprep.subr.mxu0 0.0
    %1748 = vmatpush1.msra.mxu0 0.0
    %1749 = vmatprep.subr.mxu0 0.0
    %1750 = vmatpush1.msra.mxu0 0.0
    %1751 = vmatprep.subr.mxu0 0.0
    %1752 = vmatpush1.msra.mxu0 0.0
    %1753 = vmatprep.subr.mxu0 0.0
    %1754 = vmatpush1.msra.mxu0 0.0
    %1755 = vmatprep.subr.mxu0 0.0
    %1756 = vmatpush1.msra.mxu0 0.0
    %1757 = vmatprep.subr.mxu0 0.0
    %1758 = vmatpush1.msra.mxu0 0.0
    %1759 = vmatprep.subr.mxu0 0.0
    %1760 = vmatpush1.msra.mxu0 0.0
    %1761 = vmatprep.subr.mxu0 0.0
    %1762 = vmatpush1.msra.mxu0 0.0
    %1763 = vmatprep.subr.mxu0 0.0
    %1764 = vmatpush1.msra.mxu0 0.0
    %1765 = vmatprep.subr.mxu0 0.0
    %1766 = vmatpush1.msra.mxu0 0.0
    %1767 = vmatprep.subr.mxu0 0.0
    %1768 = vmatpush1.msra.mxu0 0.0
    %1769 = vmatprep.subr.mxu0 0.0
    %1770 = vmatpush1.msra.mxu0 0.0
    %1771 = vmatprep.subr.mxu0 0.0
    %1772 = vmatpush1.msra.mxu0 0.0
    %1773 = vmatprep.subr.mxu0 0.0
    %1774 = vmatpush1.msra.mxu0 0.0
    %1775 = vmatprep.subr.mxu0 0.0
    %1776 = vmatpush1.msra.mxu0 0.0
    %1777 = vmatprep.subr.mxu0 0.0
    %1778 = vmatpush1.msra.mxu0 0.0
    %1779 = vmatprep.subr.mxu0 0.0
    %1780 = vmatpush1.msra.mxu0 0.0
    %1781 = vmatprep.subr.mxu0 0.0
    %1782 = vmatpush1.msra.mxu0 0.0
    %1783 = vmatprep.subr.mxu0 0.0
    %1784 = vmatpush1.msra.mxu0 0.0
    %1785 = vmatprep.subr.mxu0 0.0
    %1786 = vmatpush1.msra.mxu0 0.0
    %1787 = vmatprep.subr.mxu0 0.0
    %1788 = vmatpush1.msra.mxu0 0.0
    %1789 = vmatprep.subr.mxu0 0.0
    %1790 = vmatpush1.msra.mxu0 0.0
    %1791 = vmatprep.subr.mxu0 0.0
    %1792 = vmatpush1.msra.mxu0 0.0
    %1793 = vmatprep.subr.mxu0 0.0
    %1794 = vmatpush1.msra.mxu0 0.0
    %1795 = vmatprep.subr.mxu0 0.0
    %1796 = vmatpush1.msra.mxu0 0.0
    %1797 = vmatprep.subr.mxu0 0.0
    %1798 = vmatpush1.msra.mxu0 0.0
    %1799 = vmatprep.mubr.f32.mxu0 0.0
    %1800 = vmatmul.mubr.f32.gmra.mrb[0].mxu0 %v1730
    %v1801 = vpop.f32.mrb[0].mxu0
    %v1802 = vadd.f32 %v1727, %v1801
    %v1803 = vpop.f32.mrb[0].mxu0
    %1804 = vmatprep.mubr.f32.mxu0 0.0
    %1805 = vmatmul.mubr.f32.gmra.mrb[0].mxu0 %v1733
    %v1806 = vpop.f32.mrb[0].mxu0
    %v1807 = vadd.f32 %v1727, %v1806
    %v1808 = vpop.f32.mrb[0].mxu0
    %1809 = vdwg.mxu0
    %v1810 = vld [vmem:[%s33] sm:$0xff]
    %v1811 = vld [vmem:[%s33 + $0x8] sm:$0xff]
    %v1812 = vld [vmem:[%s33 + $0x10] sm:$0xff]
    %v1813 = vld [vmem:[%s33 + $0x18] sm:$0xff]
    %1816 = vrot.lane.b32.xlu0 %v1802, 96
    %v1817 = vpop.permute.xlu0 %1816
    %1818 = vrot.lane.b32.xlu0 %v1807, 96
    %v1819 = vpop.permute.xlu0 %1818
    %v1820 = vsel %vm279, %v1802, 0
    %v1822 = vsel %vm279, %v1807, 0
    %v1824 = vsel %vm279, %v1817, 0
    %v1826 = vsel %vm279, %v1819, 0
    %1828 = vmatprep.subr.mxu0 0.0
    %1829 = vmatpush1.xpose.msra.mxu0 %v1824
    %1830 = vmatprep.subr.mxu0 0.0
    %1831 = vmatpush1.xpose.msra.mxu0 %v1826
    %1832 = vmatprep.subr.mxu0 0.0
    %1833 = vmatpush1.xpose.msra.mxu0 0.0
    %1834 = vmatprep.subr.mxu0 0.0
    %1835 = vmatpush1.xpose.msra.mxu0 0.0
    %1836 = vmatprep.subr.mxu0 0.0
    %1837 = vmatpush1.xpose.msra.mxu0 0.0
    %1838 = vmatprep.subr.mxu0 0.0
    %1839 = vmatpush1.xpose.msra.mxu0 0.0
    %1840 = vmatprep.subr.mxu0 0.0
    %1841 = vmatpush1.xpose.msra.mxu0 0.0
    %1842 = vmatprep.subr.mxu0 0.0
    %1843 = vmatpush1.xpose.msra.mxu0 0.0
    %1844 = vmatprep.subr.mxu0 0.0
    %1845 = vmatpush1.xpose.msra.mxu0 0.0
    %1846 = vmatprep.subr.mxu0 0.0
    %1847 = vmatpush1.xpose.msra.mxu0 0.0
    %1848 = vmatprep.subr.mxu0 0.0
    %1849 = vmatpush1.xpose.msra.mxu0 0.0
    %1850 = vmatprep.subr.mxu0 0.0
    %1851 = vmatpush1.xpose.msra.mxu0 0.0
    %1852 = vmatprep.subr.mxu0 0.0
    %1853 = vmatpush1.xpose.msra.mxu0 0.0
    %1854 = vmatprep.subr.mxu0 0.0
    %1855 = vmatpush1.xpose.msra.mxu0 0.0
    %1856 = vmatprep.subr.mxu0 0.0
    %1857 = vmatpush1.xpose.msra.mxu0 0.0
    %1858 = vmatprep.subr.mxu0 0.0
    %1859 = vmatpush1.xpose.msra.mxu0 0.0
    %1860 = vmatprep.subr.mxu0 0.0
    %1861 = vmatpush1.xpose.msra.mxu0 0.0
    %1862 = vmatprep.subr.mxu0 0.0
    %1863 = vmatpush1.xpose.msra.mxu0 0.0
    %1864 = vmatprep.subr.mxu0 0.0
    %1865 = vmatpush1.xpose.msra.mxu0 0.0
    %1866 = vmatprep.subr.mxu0 0.0
    %1867 = vmatpush1.xpose.msra.mxu0 0.0
    %1868 = vmatprep.subr.mxu0 0.0
    %1869 = vmatpush1.xpose.msra.mxu0 0.0
    %1870 = vmatprep.subr.mxu0 0.0
    %1871 = vmatpush1.xpose.msra.mxu0 0.0
    %1872 = vmatprep.subr.mxu0 0.0
    %1873 = vmatpush1.xpose.msra.mxu0 0.0
    %1874 = vmatprep.subr.mxu0 0.0
    %1875 = vmatpush1.xpose.msra.mxu0 0.0
    %1876 = vmatprep.subr.mxu0 0.0
    %1877 = vmatpush1.xpose.msra.mxu0 0.0
    %1878 = vmatprep.subr.mxu0 0.0
    %1879 = vmatpush1.xpose.msra.mxu0 0.0
    %1880 = vmatprep.subr.mxu0 0.0
    %1881 = vmatpush1.xpose.msra.mxu0 0.0
    %1882 = vmatprep.subr.mxu0 0.0
    %1883 = vmatpush1.xpose.msra.mxu0 0.0
    %1884 = vmatprep.subr.mxu0 0.0
    %1885 = vmatpush1.xpose.msra.mxu0 0.0
    %1886 = vmatprep.subr.mxu0 0.0
    %1887 = vmatpush1.xpose.msra.mxu0 0.0
    %1888 = vmatprep.subr.mxu0 0.0
    %1889 = vmatpush1.xpose.msra.mxu0 0.0
    %1890 = vmatprep.subr.mxu0 0.0
    %1891 = vmatpush1.xpose.msra.mxu0 0.0
    %1892 = vmatprep.mubr.f32.mxu0 0.0
    %1893 = vmatmul.mubr.f32.gmra.mrb[0].mxu0 %v1820
    %v1894 = vpop.f32.mrb[0].mxu0
    %v1895 = vadd.f32 0.0, %v1894
    %v1896 = vpop.f32.mrb[0].mxu0
    %1897 = vmatprep.mubr.f32.mxu0 0.0
    %1898 = vmatmul.mubr.f32.gmra.mrb[0].mxu0 %v1822
    %v1899 = vpop.f32.mrb[0].mxu0
    %v1900 = vadd.f32 0.0, %v1899
    %v1901 = vpop.f32.mrb[0].mxu0
    %1902 = vdwg.mxu0
    %v1903 = vmul.f32 %v1895, 0.35355338
    %v1904 = vmul.f32 %v1900, 0.35355338
    %v1905 = vadd.f32 %v1903, %v129
    %v1906 = vadd.f32 %v1904, %v130
    %v1907 = vsel %vm367, %v1905, -inf
    %1908 = vmax.xlane.f32.xlu0 %v1907
    %v1909 = vpop.xlane.xlu0 %1908
    %v1910 = vsel %vm367, %v1906, -inf
    %1911 = vmax.xlane.f32.xlu0 %v1910
    %v1912 = vpop.xlane.xlu0 %1911
    %v1913 = vsub.f32 %v1905, %v1909
    %v1914 = vsub.f32 %v1906, %v1912
    %v1915 = vmul.f32 %v1913, 1.442695
    %v1916 = vpow.pop %v1915
    %v1917 = vmul.f32 %v1914, 1.442695
    %v1918 = vpow.pop %v1917
    %v1919 = vsel %vm367, %v1916, 0.0
    %1920 = vadd.xlane.f32.xlu0 %v1919
    %v1921 = vpop.xlane.xlu0 %1920
    %v1922 = vsel %vm367, %v1918, 0.0
    %1923 = vadd.xlane.f32.xlu0 %v1922
    %v1924 = vpop.xlane.xlu0 %1923
    %v1925 = vrcp.pop %v1921
    %v1926 = vrcp.pop %v1924
    %v1927 = vmul.f32 %v1916, %v1925
    %v1928 = vmul.f32 %v1918, %v1926
    %1929 = vrot.lane.b32.xlu0 %v1802, 64
    %v1930 = vpop.permute.xlu0 %1929
    %1931 = vrot.lane.b32.xlu0 %v1807, 64
    %v1932 = vpop.permute.xlu0 %1931
    %v1936 = vsel %vm367, %v1927, 0
    %v1939 = vsel %vm367, %v1928, 0
    %1941 = vmatprep.subr.mxu0 0.0
    %1942 = vmatpush1.msra.mxu0 %v1930
    %1943 = vmatprep.subr.mxu0 0.0
    %1944 = vmatpush1.msra.mxu0 %v1932
    %1945 = vmatprep.subr.mxu0 0.0
    %1946 = vmatpush1.msra.mxu0 0.0
    %1947 = vmatprep.subr.mxu0 0.0
    %1948 = vmatpush1.msra.mxu0 0.0
    %1949 = vmatprep.subr.mxu0 0.0
    %1950 = vmatpush1.msra.mxu0 0.0
    %1951 = vmatprep.subr.mxu0 0.0
    %1952 = vmatpush1.msra.mxu0 0.0
    %1953 = vmatprep.subr.mxu0 0.0
    %1954 = vmatpush1.msra.mxu0 0.0
    %1955 = vmatprep.subr.mxu0 0.0
    %1956 = vmatpush1.msra.mxu0 0.0
    %1957 = vmatprep.subr.mxu0 0.0
    %1958 = vmatpush1.msra.mxu0 0.0
    %1959 = vmatprep.subr.mxu0 0.0
    %1960 = vmatpush1.msra.mxu0 0.0
    %1961 = vmatprep.subr.mxu0 0.0
    %1962 = vmatpush1.msra.mxu0 0.0
    %1963 = vmatprep.subr.mxu0 0.0
    %1964 = vmatpush1.msra.mxu0 0.0
    %1965 = vmatprep.subr.mxu0 0.0
    %1966 = vmatpush1.msra.mxu0 0.0
    %1967 = vmatprep.subr.mxu0 0.0
    %1968 = vmatpush1.msra.mxu0 0.0
    %1969 = vmatprep.subr.mxu0 0.0
    %1970 = vmatpush1.msra.mxu0 0.0
    %1971 = vmatprep.subr.mxu0 0.0
    %1972 = vmatpush1.msra.mxu0 0.0
    %1973 = vmatprep.subr.mxu0 0.0
    %1974 = vmatpush1.msra.mxu0 0.0
    %1975 = vmatprep.subr.mxu0 0.0
    %1976 = vmatpush1.msra.mxu0 0.0
    %1977 = vmatprep.subr.mxu0 0.0
    %1978 = vmatpush1.msra.mxu0 0.0
    %1979 = vmatprep.subr.mxu0 0.0
    %1980 = vmatpush1.msra.mxu0 0.0
    %1981 = vmatprep.subr.mxu0 0.0
    %1982 = vmatpush1.msra.mxu0 0.0
    %1983 = vmatprep.subr.mxu0 0.0
    %1984 = vmatpush1.msra.mxu0 0.0
    %1985 = vmatprep.subr.mxu0 0.0
    %1986 = vmatpush1.msra.mxu0 0.0
    %1987 = vmatprep.subr.mxu0 0.0
    %1988 = vmatpush1.msra.mxu0 0.0
    %1989 = vmatprep.subr.mxu0 0.0
    %1990 = vmatpush1.msra.mxu0 0.0
    %1991 = vmatprep.subr.mxu0 0.0
    %1992 = vmatpush1.msra.mxu0 0.0
    %1993 = vmatprep.subr.mxu0 0.0
    %1994 = vmatpush1.msra.mxu0 0.0
    %1995 = vmatprep.subr.mxu0 0.0
    %1996 = vmatpush1.msra.mxu0 0.0
    %1997 = vmatprep.subr.mxu0 0.0
    %1998 = vmatpush1.msra.mxu0 0.0
    %1999 = vmatprep.subr.mxu0 0.0
    %2000 = vmatpush1.msra.mxu0 0.0
    %2001 = vmatprep.subr.mxu0 0.0
    %2002 = vmatpush1.msra.mxu0 0.0
    %2003 = vmatprep.subr.mxu0 0.0
    %2004 = vmatpush1.msra.mxu0 0.0
    %2005 = vmatprep.mubr.f32.mxu0 0.0
    %2006 = vmatmul.mubr.f32.gmra.mrb[0].mxu0 %v1936
    %v2007 = vpop.f32.mrb[0].mxu0
    %v2008 = vadd.f32 0.0, %v2007
    %v2009 = vpop.f32.mrb[0].mxu0
    %2010 = vmatprep.mubr.f32.mxu0 0.0
    %2011 = vmatmul.mubr.f32.gmra.mrb[0].mxu0 %v1939
    %v2012 = vpop.f32.mrb[0].mxu0
    %v2013 = vadd.f32 0.0, %v2012
    %v2014 = vpop.f32.mrb[0].mxu0
    %2015 = vdwg.mxu0
    %2016 = vrot.lane.b32.xlu0 %v1802, 120
    %v2017 = vpop.permute.xlu0 %2016
    %2018 = vrot.lane.b32.xlu0 %v1807, 120
    %v2019 = vpop.permute.xlu0 %2018
    %2020 = vrot.lane.b32.xlu0 %v1802, 88
    %v2021 = vpop.permute.xlu0 %2020
    %2022 = vrot.lane.b32.xlu0 %v1807, 88
    %v2023 = vpop.permute.xlu0 %2022
    %v2024 = vsel %vm279, %v2017, 0
    %v2026 = vsel %vm279, %v2019, 0
    %v2028 = vsel %vm279, %v2021, 0
    %v2030 = vsel %vm279, %v2023, 0
    %2032 = vmatprep.subr.mxu0 0.0
    %2033 = vmatpush1.xpose.msra.mxu0 %v2028
    %2034 = vmatprep.subr.mxu0 0.0
    %2035 = vmatpush1.xpose.msra.mxu0 %v2030
    %2036 = vmatprep.subr.mxu0 0.0
    %2037 = vmatpush1.xpose.msra.mxu0 0.0
    %2038 = vmatprep.subr.mxu0 0.0
    %2039 = vmatpush1.xpose.msra.mxu0 0.0
    %2040 = vmatprep.subr.mxu0 0.0
    %2041 = vmatpush1.xpose.msra.mxu0 0.0
    %2042 = vmatprep.subr.mxu0 0.0
    %2043 = vmatpush1.xpose.msra.mxu0 0.0
    %2044 = vmatprep.subr.mxu0 0.0
    %2045 = vmatpush1.xpose.msra.mxu0 0.0
    %2046 = vmatprep.subr.mxu0 0.0
    %2047 = vmatpush1.xpose.msra.mxu0 0.0
    %2048 = vmatprep.subr.mxu0 0.0
    %2049 = vmatpush1.xpose.msra.mxu0 0.0
    %2050 = vmatprep.subr.mxu0 0.0
    %2051 = vmatpush1.xpose.msra.mxu0 0.0
    %2052 = vmatprep.subr.mxu0 0.0
    %2053 = vmatpush1.xpose.msra.mxu0 0.0
    %2054 = vmatprep.subr.mxu0 0.0
    %2055 = vmatpush1.xpose.msra.mxu0 0.0
    %2056 = vmatprep.subr.mxu0 0.0
    %2057 = vmatpush1.xpose.msra.mxu0 0.0
    %2058 = vmatprep.subr.mxu0 0.0
    %2059 = vmatpush1.xpose.msra.mxu0 0.0
    %2060 = vmatprep.subr.mxu0 0.0
    %2061 = vmatpush1.xpose.msra.mxu0 0.0
    %2062 = vmatprep.subr.mxu0 0.0
    %2063 = vmatpush1.xpose.msra.mxu0 0.0
    %2064 = vmatprep.subr.mxu0 0.0
    %2065 = vmatpush1.xpose.msra.mxu0 0.0
    %2066 = vmatprep.subr.mxu0 0.0
    %2067 = vmatpush1.xpose.msra.mxu0 0.0
    %2068 = vmatprep.subr.mxu0 0.0
    %2069 = vmatpush1.xpose.msra.mxu0 0.0
    %2070 = vmatprep.subr.mxu0 0.0
    %2071 = vmatpush1.xpose.msra.mxu0 0.0
    %2072 = vmatprep.subr.mxu0 0.0
    %2073 = vmatpush1.xpose.msra.mxu0 0.0
    %2074 = vmatprep.subr.mxu0 0.0
    %2075 = vmatpush1.xpose.msra.mxu0 0.0
    %2076 = vmatprep.subr.mxu0 0.0
    %2077 = vmatpush1.xpose.msra.mxu0 0.0
    %2078 = vmatprep.subr.mxu0 0.0
    %2079 = vmatpush1.xpose.msra.mxu0 0.0
    %2080 = vmatprep.subr.mxu0 0.0
    %2081 = vmatpush1.xpose.msra.mxu0 0.0
    %2082 = vmatprep.subr.mxu0 0.0
    %2083 = vmatpush1.xpose.msra.mxu0 0.0
    %2084 = vmatprep.subr.mxu0 0.0
    %2085 = vmatpush1.xpose.msra.mxu0 0.0
    %2086 = vmatprep.subr.mxu0 0.0
    %2087 = vmatpush1.xpose.msra.mxu0 0.0
    %2088 = vmatprep.subr.mxu0 0.0
    %2089 = vmatpush1.xpose.msra.mxu0 0.0
    %2090 = vmatprep.subr.mxu0 0.0
    %2091 = vmatpush1.xpose.msra.mxu0 0.0
    %2092 = vmatprep.subr.mxu0 0.0
    %2093 = vmatpush1.xpose.msra.mxu0 0.0
    %2094 = vmatprep.subr.mxu0 0.0
    %2095 = vmatpush1.xpose.msra.mxu0 0.0
    %2096 = vmatprep.mubr.f32.mxu0 0.0
    %2097 = vmatmul.mubr.f32.gmra.mrb[0].mxu0 %v2024
    %v2098 = vpop.f32.mrb[0].mxu0
    %v2099 = vadd.f32 0.0, %v2098
    %v2100 = vpop.f32.mrb[0].mxu0
    %2101 = vmatprep.mubr.f32.mxu0 0.0
    %2102 = vmatmul.mubr.f32.gmra.mrb[0].mxu0 %v2026
    %v2103 = vpop.f32.mrb[0].mxu0
    %v2104 = vadd.f32 0.0, %v2103
    %v2105 = vpop.f32.mrb[0].mxu0
    %2106 = vdwg.mxu0
    %v2107 = vmul.f32 %v2099, 0.35355338
    %v2108 = vmul.f32 %v2104, 0.35355338
    %v2109 = vadd.f32 %v2107, %v129
    %v2110 = vadd.f32 %v2108, %v130
    %v2111 = vsel %vm367, %v2109, -inf
    %2112 = vmax.xlane.f32.xlu0 %v2111
    %v2113 = vpop.xlane.xlu0 %2112
    %v2114 = vsel %vm367, %v2110, -inf
    %2115 = vmax.xlane.f32.xlu0 %v2114
    %v2116 = vpop.xlane.xlu0 %2115
    %v2117 = vsub.f32 %v2109, %v2113
    %v2118 = vsub.f32 %v2110, %v2116
    %v2119 = vmul.f32 %v2117, 1.442695
    %v2120 = vpow.pop %v2119
    %v2121 = vmul.f32 %v2118, 1.442695
    %v2122 = vpow.pop %v2121
    %v2123 = vsel %vm367, %v2120, 0.0
    %2124 = vadd.xlane.f32.xlu0 %v2123
    %v2125 = vpop.xlane.xlu0 %2124
    %v2126 = vsel %vm367, %v2122, 0.0
    %2127 = vadd.xlane.f32.xlu0 %v2126
    %v2128 = vpop.xlane.xlu0 %2127
    %v2129 = vrcp.pop %v2125
    %v2130 = vrcp.pop %v2128
    %v2131 = vmul.f32 %v2120, %v2129
    %v2132 = vmul.f32 %v2122, %v2130
    %2133 = vrot.lane.b32.xlu0 %v1802, 56
    %v2134 = vpop.permute.xlu0 %2133
    %2135 = vrot.lane.b32.xlu0 %v1807, 56
    %v2136 = vpop.permute.xlu0 %2135
    %v2140 = vsel %vm367, %v2131, 0
    %v2143 = vsel %vm367, %v2132, 0
    %2145 = vmatprep.subr.mxu0 0.0
    %2146 = vmatpush1.msra.mxu0 %v2134
    %2147 = vmatprep.subr.mxu0 0.0
    %2148 = vmatpush1.msra.mxu0 %v2136
    %2149 = vmatprep.subr.mxu0 0.0
    %2150 = vmatpush1.msra.mxu0 0.0
    %2151 = vmatprep.subr.mxu0 0.0
    %2152 = vmatpush1.msra.mxu0 0.0
    %2153 = vmatprep.subr.mxu0 0.0
    %2154 = vmatpush1.msra.mxu0 0.0
    %2155 = vmatprep.subr.mxu0 0.0
    %2156 = vmatpush1.msra.mxu0 0.0
    %2157 = vmatprep.subr.mxu0 0.0
    %2158 = vmatpush1.msra.mxu0 0.0
    %2159 = vmatprep.subr.mxu0 0.0
    %2160 = vmatpush1.msra.mxu0 0.0
    %2161 = vmatprep.subr.mxu0 0.0
    %2162 = vmatpush1.msra.mxu0 0.0
    %2163 = vmatprep.subr.mxu0 0.0
    %2164 = vmatpush1.msra.mxu0 0.0
    %2165 = vmatprep.subr.mxu0 0.0
    %2166 = vmatpush1.msra.mxu0 0.0
    %2167 = vmatprep.subr.mxu0 0.0
    %2168 = vmatpush1.msra.mxu0 0.0
    %2169 = vmatprep.subr.mxu0 0.0
    %2170 = vmatpush1.msra.mxu0 0.0
    %2171 = vmatprep.subr.mxu0 0.0
    %2172 = vmatpush1.msra.mxu0 0.0
    %2173 = vmatprep.subr.mxu0 0.0
    %2174 = vmatpush1.msra.mxu0 0.0
    %2175 = vmatprep.subr.mxu0 0.0
    %2176 = vmatpush1.msra.mxu0 0.0
    %2177 = vmatprep.subr.mxu0 0.0
    %2178 = vmatpush1.msra.mxu0 0.0
    %2179 = vmatprep.subr.mxu0 0.0
    %2180 = vmatpush1.msra.mxu0 0.0
    %2181 = vmatprep.subr.mxu0 0.0
    %2182 = vmatpush1.msra.mxu0 0.0
    %2183 = vmatprep.subr.mxu0 0.0
    %2184 = vmatpush1.msra.mxu0 0.0
    %2185 = vmatprep.subr.mxu0 0.0
    %2186 = vmatpush1.msra.mxu0 0.0
    %2187 = vmatprep.subr.mxu0 0.0
    %2188 = vmatpush1.msra.mxu0 0.0
    %2189 = vmatprep.subr.mxu0 0.0
    %2190 = vmatpush1.msra.mxu0 0.0
    %2191 = vmatprep.subr.mxu0 0.0
    %2192 = vmatpush1.msra.mxu0 0.0
    %2193 = vmatprep.subr.mxu0 0.0
    %2194 = vmatpush1.msra.mxu0 0.0
    %2195 = vmatprep.subr.mxu0 0.0
    %2196 = vmatpush1.msra.mxu0 0.0
    %2197 = vmatprep.subr.mxu0 0.0
    %2198 = vmatpush1.msra.mxu0 0.0
    %2199 = vmatprep.subr.mxu0 0.0
    %2200 = vmatpush1.msra.mxu0 0.0
    %2201 = vmatprep.subr.mxu0 0.0
    %2202 = vmatpush1.msra.mxu0 0.0
    %2203 = vmatprep.subr.mxu0 0.0
    %2204 = vmatpush1.msra.mxu0 0.0
    %2205 = vmatprep.subr.mxu0 0.0
    %2206 = vmatpush1.msra.mxu0 0.0
    %2207 = vmatprep.subr.mxu0 0.0
    %2208 = vmatpush1.msra.mxu0 0.0
    %2209 = vmatprep.mubr.f32.mxu0 0.0
    %2210 = vmatmul.mubr.f32.gmra.mrb[0].mxu0 %v2140
    %v2211 = vpop.f32.mrb[0].mxu0
    %v2212 = vadd.f32 0.0, %v2211
    %v2213 = vpop.f32.mrb[0].mxu0
    %2214 = vmatprep.mubr.f32.mxu0 0.0
    %2215 = vmatmul.mubr.f32.gmra.mrb[0].mxu0 %v2143
    %v2216 = vpop.f32.mrb[0].mxu0
    %v2217 = vadd.f32 0.0, %v2216
    %v2218 = vpop.f32.mrb[0].mxu0
    %2219 = vdwg.mxu0
    %v2221 = vsel %vm279, %v2212, 0
    %v2224 = vsel %vm279, %v2217, 0
    %2226 = vmatprep.subr.mxu0 0.0
    %2227 = vmatpush1.msra.mxu0 %v1811
    %2228 = vmatprep.subr.mxu0 0.0
    %2229 = vmatpush1.msra.mxu0 0.0
    %2230 = vmatprep.subr.mxu0 0.0
    %2231 = vmatpush1.msra.mxu0 0.0
    %2232 = vmatprep.subr.mxu0 0.0
    %2233 = vmatpush1.msra.mxu0 0.0
    %2234 = vmatprep.subr.mxu0 0.0
    %2235 = vmatpush1.msra.mxu0 0.0
    %2236 = vmatprep.subr.mxu0 0.0
    %2237 = vmatpush1.msra.mxu0 0.0
    %2238 = vmatprep.subr.mxu0 0.0
    %2239 = vmatpush1.msra.mxu0 0.0
    %2240 = vmatprep.subr.mxu0 0.0
    %2241 = vmatpush1.msra.mxu0 0.0
    %2242 = vmatprep.subr.mxu0 0.0
    %2243 = vmatpush1.msra.mxu0 0.0
    %2244 = vmatprep.subr.mxu0 0.0
    %2245 = vmatpush1.msra.mxu0 0.0
    %2246 = vmatprep.subr.mxu0 0.0
    %2247 = vmatpush1.msra.mxu0 0.0
    %2248 = vmatprep.subr.mxu0 0.0
    %2249 = vmatpush1.msra.mxu0 0.0
    %2250 = vmatprep.subr.mxu0 0.0
    %2251 = vmatpush1.msra.mxu0 0.0
    %2252 = vmatprep.subr.mxu0 0.0
    %2253 = vmatpush1.msra.mxu0 0.0
    %2254 = vmatprep.subr.mxu0 0.0
    %2255 = vmatpush1.msra.mxu0 0.0
    %2256 = vmatprep.subr.mxu0 0.0
    %2257 = vmatpush1.msra.mxu0 0.0
    %2258 = vmatprep.subr.mxu0 0.0
    %2259 = vmatpush1.msra.mxu0 0.0
    %2260 = vmatprep.subr.mxu0 0.0
    %2261 = vmatpush1.msra.mxu0 0.0
    %2262 = vmatprep.subr.mxu0 0.0
    %2263 = vmatpush1.msra.mxu0 0.0
    %2264 = vmatprep.subr.mxu0 0.0
    %2265 = vmatpush1.msra.mxu0 0.0
    %2266 = vmatprep.subr.mxu0 0.0
    %2267 = vmatpush1.msra.mxu0 0.0
    %2268 = vmatprep.subr.mxu0 0.0
    %2269 = vmatpush1.msra.mxu0 0.0
    %2270 = vmatprep.subr.mxu0 0.0
    %2271 = vmatpush1.msra.mxu0 0.0
    %2272 = vmatprep.subr.mxu0 0.0
    %2273 = vmatpush1.msra.mxu0 0.0
    %2274 = vmatprep.subr.mxu0 0.0
    %2275 = vmatpush1.msra.mxu0 0.0
    %2276 = vmatprep.subr.mxu0 0.0
    %2277 = vmatpush1.msra.mxu0 0.0
    %2278 = vmatprep.subr.mxu0 0.0
    %2279 = vmatpush1.msra.mxu0 0.0
    %2280 = vmatprep.subr.mxu0 0.0
    %2281 = vmatpush1.msra.mxu0 0.0
    %2282 = vmatprep.subr.mxu0 0.0
    %2283 = vmatpush1.msra.mxu0 0.0
    %2284 = vmatprep.subr.mxu0 0.0
    %2285 = vmatpush1.msra.mxu0 0.0
    %2286 = vmatprep.subr.mxu0 0.0
    %2287 = vmatpush1.msra.mxu0 0.0
    %2288 = vmatprep.subr.mxu0 0.0
    %2289 = vmatpush1.msra.mxu0 0.0
    %2290 = vmatprep.mubr.f32.mxu0 0.0
    %2291 = vmatmul.mubr.f32.gmra.mrb[0].mxu0 %v2221
    %v2292 = vpop.f32.mrb[0].mxu0
    %v2293 = vadd.f32 0.0, %v2292
    %v2294 = vpop.f32.mrb[0].mxu0
    %2295 = vmatprep.mubr.f32.mxu0 0.0
    %2296 = vmatmul.mubr.f32.gmra.mrb[0].mxu0 %v2224
    %v2297 = vpop.f32.mrb[0].mxu0
    %v2298 = vadd.f32 0.0, %v2297
    %v2299 = vpop.f32.mrb[0].mxu0
    %2300 = vdwg.mxu0
    %v2302 = vsel %vm279, %v2008, 0
    %v2305 = vsel %vm279, %v2013, 0
    %2307 = vmatprep.subr.mxu0 0.0
    %2308 = vmatpush1.msra.mxu0 %v1810
    %2309 = vmatprep.subr.mxu0 0.0
    %2310 = vmatpush1.msra.mxu0 0.0
    %2311 = vmatprep.subr.mxu0 0.0
    %2312 = vmatpush1.msra.mxu0 0.0
    %2313 = vmatprep.subr.mxu0 0.0
    %2314 = vmatpush1.msra.mxu0 0.0
    %2315 = vmatprep.subr.mxu0 0.0
    %2316 = vmatpush1.msra.mxu0 0.0
    %2317 = vmatprep.subr.mxu0 0.0
    %2318 = vmatpush1.msra.mxu0 0.0
    %2319 = vmatprep.subr.mxu0 0.0
    %2320 = vmatpush1.msra.mxu0 0.0
    %2321 = vmatprep.subr.mxu0 0.0
    %2322 = vmatpush1.msra.mxu0 0.0
    %2323 = vmatprep.subr.mxu0 0.0
    %2324 = vmatpush1.msra.mxu0 0.0
    %2325 = vmatprep.subr.mxu0 0.0
    %2326 = vmatpush1.msra.mxu0 0.0
    %2327 = vmatprep.subr.mxu0 0.0
    %2328 = vmatpush1.msra.mxu0 0.0
    %2329 = vmatprep.subr.mxu0 0.0
    %2330 = vmatpush1.msra.mxu0 0.0
    %2331 = vmatprep.subr.mxu0 0.0
    %2332 = vmatpush1.msra.mxu0 0.0
    %2333 = vmatprep.subr.mxu0 0.0
    %2334 = vmatpush1.msra.mxu0 0.0
    %2335 = vmatprep.subr.mxu0 0.0
    %2336 = vmatpush1.msra.mxu0 0.0
    %2337 = vmatprep.subr.mxu0 0.0
    %2338 = vmatpush1.msra.mxu0 0.0
    %2339 = vmatprep.subr.mxu0 0.0
    %2340 = vmatpush1.msra.mxu0 0.0
    %2341 = vmatprep.subr.mxu0 0.0
    %2342 = vmatpush1.msra.mxu0 0.0
    %2343 = vmatprep.subr.mxu0 0.0
    %2344 = vmatpush1.msra.mxu0 0.0
    %2345 = vmatprep.subr.mxu0 0.0
    %2346 = vmatpush1.msra.mxu0 0.0
    %2347 = vmatprep.subr.mxu0 0.0
    %2348 = vmatpush1.msra.mxu0 0.0
    %2349 = vmatprep.subr.mxu0 0.0
    %2350 = vmatpush1.msra.mxu0 0.0
    %2351 = vmatprep.subr.mxu0 0.0
    %2352 = vmatpush1.msra.mxu0 0.0
    %2353 = vmatprep.subr.mxu0 0.0
    %2354 = vmatpush1.msra.mxu0 0.0
    %2355 = vmatprep.subr.mxu0 0.0
    %2356 = vmatpush1.msra.mxu0 0.0
    %2357 = vmatprep.subr.mxu0 0.0
    %2358 = vmatpush1.msra.mxu0 0.0
    %2359 = vmatprep.subr.mxu0 0.0
    %2360 = vmatpush1.msra.mxu0 0.0
    %2361 = vmatprep.subr.mxu0 0.0
    %2362 = vmatpush1.msra.mxu0 0.0
    %2363 = vmatprep.subr.mxu0 0.0
    %2364 = vmatpush1.msra.mxu0 0.0
    %2365 = vmatprep.subr.mxu0 0.0
    %2366 = vmatpush1.msra.mxu0 0.0
    %2367 = vmatprep.subr.mxu0 0.0
    %2368 = vmatpush1.msra.mxu0 0.0
    %2369 = vmatprep.subr.mxu0 0.0
    %2370 = vmatpush1.msra.mxu0 0.0
    %2371 = vmatprep.mubr.f32.mxu0 0.0
    %2372 = vmatmul.mubr.f32.gmra.mrb[0].mxu0 %v2302
    %v2373 = vpop.f32.mrb[0].mxu0
    %v2374 = vadd.f32 %v2293, %v2373
    %v2375 = vpop.f32.mrb[0].mxu0
    %2376 = vmatprep.mubr.f32.mxu0 0.0
    %2377 = vmatmul.mubr.f32.gmra.mrb[0].mxu0 %v2305
    %v2378 = vpop.f32.mrb[0].mxu0
    %v2379 = vadd.f32 %v2298, %v2378
    %v2380 = vpop.f32.mrb[0].mxu0
    %2381 = vdwg.mxu0
    %2382 = vrot.lane.b32.xlu0 %v1802, 112
    %v2383 = vpop.permute.xlu0 %2382
    %2384 = vrot.lane.b32.xlu0 %v1807, 112
    %v2385 = vpop.permute.xlu0 %2384
    %2386 = vrot.lane.b32.xlu0 %v1802, 80
    %v2387 = vpop.permute.xlu0 %2386
    %2388 = vrot.lane.b32.xlu0 %v1807, 80
    %v2389 = vpop.permute.xlu0 %2388
    %v2390 = vsel %vm279, %v2383, 0
    %v2392 = vsel %vm279, %v2385, 0
    %v2394 = vsel %vm279, %v2387, 0
    %v2396 = vsel %vm279, %v2389, 0
    %2398 = vmatprep.subr.mxu0 0.0
    %2399 = vmatpush1.xpose.msra.mxu0 %v2394
    %2400 = vmatprep.subr.mxu0 0.0
    %2401 = vmatpush1.xpose.msra.mxu0 %v2396
    %2402 = vmatprep.subr.mxu0 0.0
    %2403 = vmatpush1.xpose.msra.mxu0 0.0
    %2404 = vmatprep.subr.mxu0 0.0
    %2405 = vmatpush1.xpose.msra.mxu0 0.0
    %2406 = vmatprep.subr.mxu0 0.0
    %2407 = vmatpush1.xpose.msra.mxu0 0.0
    %2408 = vmatprep.subr.mxu0 0.0
    %2409 = vmatpush1.xpose.msra.mxu0 0.0
    %2410 = vmatprep.subr.mxu0 0.0
    %2411 = vmatpush1.xpose.msra.mxu0 0.0
    %2412 = vmatprep.subr.mxu0 0.0
    %2413 = vmatpush1.xpose.msra.mxu0 0.0
    %2414 = vmatprep.subr.mxu0 0.0
    %2415 = vmatpush1.xpose.msra.mxu0 0.0
    %2416 = vmatprep.subr.mxu0 0.0
    %2417 = vmatpush1.xpose.msra.mxu0 0.0
    %2418 = vmatprep.subr.mxu0 0.0
    %2419 = vmatpush1.xpose.msra.mxu0 0.0
    %2420 = vmatprep.subr.mxu0 0.0
    %2421 = vmatpush1.xpose.msra.mxu0 0.0
    %2422 = vmatprep.subr.mxu0 0.0
    %2423 = vmatpush1.xpose.msra.mxu0 0.0
    %2424 = vmatprep.subr.mxu0 0.0
    %2425 = vmatpush1.xpose.msra.mxu0 0.0
    %2426 = vmatprep.subr.mxu0 0.0
    %2427 = vmatpush1.xpose.msra.mxu0 0.0
    %2428 = vmatprep.subr.mxu0 0.0
    %2429 = vmatpush1.xpose.msra.mxu0 0.0
    %2430 = vmatprep.subr.mxu0 0.0
    %2431 = vmatpush1.xpose.msra.mxu0 0.0
    %2432 = vmatprep.subr.mxu0 0.0
    %2433 = vmatpush1.xpose.msra.mxu0 0.0
    %2434 = vmatprep.subr.mxu0 0.0
    %2435 = vmatpush1.xpose.msra.mxu0 0.0
    %2436 = vmatprep.subr.mxu0 0.0
    %2437 = vmatpush1.xpose.msra.mxu0 0.0
    %2438 = vmatprep.subr.mxu0 0.0
    %2439 = vmatpush1.xpose.msra.mxu0 0.0
    %2440 = vmatprep.subr.mxu0 0.0
    %2441 = vmatpush1.xpose.msra.mxu0 0.0
    %2442 = vmatprep.subr.mxu0 0.0
    %2443 = vmatpush1.xpose.msra.mxu0 0.0
    %2444 = vmatprep.subr.mxu0 0.0
    %2445 = vmatpush1.xpose.msra.mxu0 0.0
    %2446 = vmatprep.subr.mxu0 0.0
    %2447 = vmatpush1.xpose.msra.mxu0 0.0
    %2448 = vmatprep.subr.mxu0 0.0
    %2449 = vmatpush1.xpose.msra.mxu0 0.0
    %2450 = vmatprep.subr.mxu0 0.0
    %2451 = vmatpush1.xpose.msra.mxu0 0.0
    %2452 = vmatprep.subr.mxu0 0.0
    %2453 = vmatpush1.xpose.msra.mxu0 0.0
    %2454 = vmatprep.subr.mxu0 0.0
    %2455 = vmatpush1.xpose.msra.mxu0 0.0
    %2456 = vmatprep.subr.mxu0 0.0
    %2457 = vmatpush1.xpose.msra.mxu0 0.0
    %2458 = vmatprep.subr.mxu0 0.0
    %2459 = vmatpush1.xpose.msra.mxu0 0.0
    %2460 = vmatprep.subr.mxu0 0.0
    %2461 = vmatpush1.xpose.msra.mxu0 0.0
    %2462 = vmatprep.mubr.f32.mxu0 0.0
    %2463 = vmatmul.mubr.f32.gmra.mrb[0].mxu0 %v2390
    %v2464 = vpop.f32.mrb[0].mxu0
    %v2465 = vadd.f32 0.0, %v2464
    %v2466 = vpop.f32.mrb[0].mxu0
    %2467 = vmatprep.mubr.f32.mxu0 0.0
    %2468 = vmatmul.mubr.f32.gmra.mrb[0].mxu0 %v2392
    %v2469 = vpop.f32.mrb[0].mxu0
    %v2470 = vadd.f32 0.0, %v2469
    %v2471 = vpop.f32.mrb[0].mxu0
    %2472 = vdwg.mxu0
    %v2473 = vmul.f32 %v2465, 0.35355338
    %v2474 = vmul.f32 %v2470, 0.35355338
    %v2475 = vadd.f32 %v2473, %v129
    %v2476 = vadd.f32 %v2474, %v130
    %v2477 = vsel %vm367, %v2475, -inf
    %2478 = vmax.xlane.f32.xlu0 %v2477
    %v2479 = vpop.xlane.xlu0 %2478
    %v2480 = vsel %vm367, %v2476, -inf
    %2481 = vmax.xlane.f32.xlu0 %v2480
    %v2482 = vpop.xlane.xlu0 %2481
    %v2483 = vsub.f32 %v2475, %v2479
    %v2484 = vsub.f32 %v2476, %v2482
    %v2485 = vmul.f32 %v2483, 1.442695
    %v2486 = vpow.pop %v2485
    %v2487 = vmul.f32 %v2484, 1.442695
    %v2488 = vpow.pop %v2487
    %v2489 = vsel %vm367, %v2486, 0.0
    %2490 = vadd.xlane.f32.xlu0 %v2489
    %v2491 = vpop.xlane.xlu0 %2490
    %v2492 = vsel %vm367, %v2488, 0.0
    %2493 = vadd.xlane.f32.xlu0 %v2492
    %v2494 = vpop.xlane.xlu0 %2493
    %v2495 = vrcp.pop %v2491
    %v2496 = vrcp.pop %v2494
    %v2497 = vmul.f32 %v2486, %v2495
    %v2498 = vmul.f32 %v2488, %v2496
    %2499 = vrot.lane.b32.xlu0 %v1802, 48
    %v2500 = vpop.permute.xlu0 %2499
    %2501 = vrot.lane.b32.xlu0 %v1807, 48
    %v2502 = vpop.permute.xlu0 %2501
    %v2506 = vsel %vm367, %v2497, 0
    %v2509 = vsel %vm367, %v2498, 0
    %2511 = vmatprep.subr.mxu0 0.0
    %2512 = vmatpush1.msra.mxu0 %v2500
    %2513 = vmatprep.subr.mxu0 0.0
    %2514 = vmatpush1.msra.mxu0 %v2502
    %2515 = vmatprep.subr.mxu0 0.0
    %2516 = vmatpush1.msra.mxu0 0.0
    %2517 = vmatprep.subr.mxu0 0.0
    %2518 = vmatpush1.msra.mxu0 0.0
    %2519 = vmatprep.subr.mxu0 0.0
    %2520 = vmatpush1.msra.mxu0 0.0
    %2521 = vmatprep.subr.mxu0 0.0
    %2522 = vmatpush1.msra.mxu0 0.0
    %2523 = vmatprep.subr.mxu0 0.0
    %2524 = vmatpush1.msra.mxu0 0.0
    %2525 = vmatprep.subr.mxu0 0.0
    %2526 = vmatpush1.msra.mxu0 0.0
    %2527 = vmatprep.subr.mxu0 0.0
    %2528 = vmatpush1.msra.mxu0 0.0
    %2529 = vmatprep.subr.mxu0 0.0
    %2530 = vmatpush1.msra.mxu0 0.0
    %2531 = vmatprep.subr.mxu0 0.0
    %2532 = vmatpush1.msra.mxu0 0.0
    %2533 = vmatprep.subr.mxu0 0.0
    %2534 = vmatpush1.msra.mxu0 0.0
    %2535 = vmatprep.subr.mxu0 0.0
    %2536 = vmatpush1.msra.mxu0 0.0
    %2537 = vmatprep.subr.mxu0 0.0
    %2538 = vmatpush1.msra.mxu0 0.0
    %2539 = vmatprep.subr.mxu0 0.0
    %2540 = vmatpush1.msra.mxu0 0.0
    %2541 = vmatprep.subr.mxu0 0.0
    %2542 = vmatpush1.msra.mxu0 0.0
    %2543 = vmatprep.subr.mxu0 0.0
    %2544 = vmatpush1.msra.mxu0 0.0
    %2545 = vmatprep.subr.mxu0 0.0
    %2546 = vmatpush1.msra.mxu0 0.0
    %2547 = vmatprep.subr.mxu0 0.0
    %2548 = vmatpush1.msra.mxu0 0.0
    %2549 = vmatprep.subr.mxu0 0.0
    %2550 = vmatpush1.msra.mxu0 0.0
    %2551 = vmatprep.subr.mxu0 0.0
    %2552 = vmatpush1.msra.mxu0 0.0
    %2553 = vmatprep.subr.mxu0 0.0
    %2554 = vmatpush1.msra.mxu0 0.0
    %2555 = vmatprep.subr.mxu0 0.0
    %2556 = vmatpush1.msra.mxu0 0.0
    %2557 = vmatprep.subr.mxu0 0.0
    %2558 = vmatpush1.msra.mxu0 0.0
    %2559 = vmatprep.subr.mxu0 0.0
    %2560 = vmatpush1.msra.mxu0 0.0
    %2561 = vmatprep.subr.mxu0 0.0
    %2562 = vmatpush1.msra.mxu0 0.0
    %2563 = vmatprep.subr.mxu0 0.0
    %2564 = vmatpush1.msra.mxu0 0.0
    %2565 = vmatprep.subr.mxu0 0.0
    %2566 = vmatpush1.msra.mxu0 0.0
    %2567 = vmatprep.subr.mxu0 0.0
    %2568 = vmatpush1.msra.mxu0 0.0
    %2569 = vmatprep.subr.mxu0 0.0
    %2570 = vmatpush1.msra.mxu0 0.0
    %2571 = vmatprep.subr.mxu0 0.0
    %2572 = vmatpush1.msra.mxu0 0.0
    %2573 = vmatprep.subr.mxu0 0.0
    %2574 = vmatpush1.msra.mxu0 0.0
    %2575 = vmatprep.mubr.f32.mxu0 0.0
    %2576 = vmatmul.mubr.f32.gmra.mrb[0].mxu0 %v2506
    %v2577 = vpop.f32.mrb[0].mxu0
    %v2578 = vadd.f32 0.0, %v2577
    %v2579 = vpop.f32.mrb[0].mxu0
    %2580 = vmatprep.mubr.f32.mxu0 0.0
    %2581 = vmatmul.mubr.f32.gmra.mrb[0].mxu0 %v2509
    %v2582 = vpop.f32.mrb[0].mxu0
    %v2583 = vadd.f32 0.0, %v2582
    %v2584 = vpop.f32.mrb[0].mxu0
    %2585 = vdwg.mxu0
    %v2587 = vsel %vm279, %v2578, 0
    %v2590 = vsel %vm279, %v2583, 0
    %2592 = vmatprep.subr.mxu0 0.0
    %2593 = vmatpush1.msra.mxu0 %v1812
    %2594 = vmatprep.subr.mxu0 0.0
    %2595 = vmatpush1.msra.mxu0 0.0
    %2596 = vmatprep.subr.mxu0 0.0
    %2597 = vmatpush1.msra.mxu0 0.0
    %2598 = vmatprep.subr.mxu0 0.0
    %2599 = vmatpush1.msra.mxu0 0.0
    %2600 = vmatprep.subr.mxu0 0.0
    %2601 = vmatpush1.msra.mxu0 0.0
    %2602 = vmatprep.subr.mxu0 0.0
    %2603 = vmatpush1.msra.mxu0 0.0
    %2604 = vmatprep.subr.mxu0 0.0
    %2605 = vmatpush1.msra.mxu0 0.0
    %2606 = vmatprep.subr.mxu0 0.0
    %2607 = vmatpush1.msra.mxu0 0.0
    %2608 = vmatprep.subr.mxu0 0.0
    %2609 = vmatpush1.msra.mxu0 0.0
    %2610 = vmatprep.subr.mxu0 0.0
    %2611 = vmatpush1.msra.mxu0 0.0
    %2612 = vmatprep.subr.mxu0 0.0
    %2613 = vmatpush1.msra.mxu0 0.0
    %2614 = vmatprep.subr.mxu0 0.0
    %2615 = vmatpush1.msra.mxu0 0.0
    %2616 = vmatprep.subr.mxu0 0.0
    %2617 = vmatpush1.msra.mxu0 0.0
    %2618 = vmatprep.subr.mxu0 0.0
    %2619 = vmatpush1.msra.mxu0 0.0
    %2620 = vmatprep.subr.mxu0 0.0
    %2621 = vmatpush1.msra.mxu0 0.0
    %2622 = vmatprep.subr.mxu0 0.0
    %2623 = vmatpush1.msra.mxu0 0.0
    %2624 = vmatprep.subr.mxu0 0.0
    %2625 = vmatpush1.msra.mxu0 0.0
    %2626 = vmatprep.subr.mxu0 0.0
    %2627 = vmatpush1.msra.mxu0 0.0
    %2628 = vmatprep.subr.mxu0 0.0
    %2629 = vmatpush1.msra.mxu0 0.0
    %2630 = vmatprep.subr.mxu0 0.0
    %2631 = vmatpush1.msra.mxu0 0.0
    %2632 = vmatprep.subr.mxu0 0.0
    %2633 = vmatpush1.msra.mxu0 0.0
    %2634 = vmatprep.subr.mxu0 0.0
    %2635 = vmatpush1.msra.mxu0 0.0
    %2636 = vmatprep.subr.mxu0 0.0
    %2637 = vmatpush1.msra.mxu0 0.0
    %2638 = vmatprep.subr.mxu0 0.0
    %2639 = vmatpush1.msra.mxu0 0.0
    %2640 = vmatprep.subr.mxu0 0.0
    %2641 = vmatpush1.msra.mxu0 0.0
    %2642 = vmatprep.subr.mxu0 0.0
    %2643 = vmatpush1.msra.mxu0 0.0
    %2644 = vmatprep.subr.mxu0 0.0
    %2645 = vmatpush1.msra.mxu0 0.0
    %2646 = vmatprep.subr.mxu0 0.0
    %2647 = vmatpush1.msra.mxu0 0.0
    %2648 = vmatprep.subr.mxu0 0.0
    %2649 = vmatpush1.msra.mxu0 0.0
    %2650 = vmatprep.subr.mxu0 0.0
    %2651 = vmatpush1.msra.mxu0 0.0
    %2652 = vmatprep.subr.mxu0 0.0
    %2653 = vmatpush1.msra.mxu0 0.0
    %2654 = vmatprep.subr.mxu0 0.0
    %2655 = vmatpush1.msra.mxu0 0.0
    %2656 = vmatprep.mubr.f32.mxu0 0.0
    %2657 = vmatmul.mubr.f32.gmra.mrb[0].mxu0 %v2587
    %v2658 = vpop.f32.mrb[0].mxu0
    %v2659 = vadd.f32 0.0, %v2658
    %v2660 = vpop.f32.mrb[0].mxu0
    %2661 = vmatprep.mubr.f32.mxu0 0.0
    %2662 = vmatmul.mubr.f32.gmra.mrb[0].mxu0 %v2590
    %v2663 = vpop.f32.mrb[0].mxu0
    %v2664 = vadd.f32 0.0, %v2663
    %v2665 = vpop.f32.mrb[0].mxu0
    %2666 = vdwg.mxu0
    %v2667 = vadd.f32 %v2374, %v2659
    %v2668 = vadd.f32 %v2379, %v2664
    %2669 = vrot.lane.b32.xlu0 %v1802, 104
    %v2670 = vpop.permute.xlu0 %2669
    %2671 = vrot.lane.b32.xlu0 %v1807, 104
    %v2672 = vpop.permute.xlu0 %2671
    %2673 = vrot.lane.b32.xlu0 %v1802, 72
    %v2674 = vpop.permute.xlu0 %2673
    %2675 = vrot.lane.b32.xlu0 %v1807, 72
    %v2676 = vpop.permute.xlu0 %2675
    %v2677 = vsel %vm279, %v2670, 0
    %v2679 = vsel %vm279, %v2672, 0
    %v2681 = vsel %vm279, %v2674, 0
    %v2683 = vsel %vm279, %v2676, 0
    %2685 = vmatprep.subr.mxu0 0.0
    %2686 = vmatpush1.xpose.msra.mxu0 %v2681
    %2687 = vmatprep.subr.mxu0 0.0
    %2688 = vmatpush1.xpose.msra.mxu0 %v2683
    %2689 = vmatprep.subr.mxu0 0.0
    %2690 = vmatpush1.xpose.msra.mxu0 0.0
    %2691 = vmatprep.subr.mxu0 0.0
    %2692 = vmatpush1.xpose.msra.mxu0 0.0
    %2693 = vmatprep.subr.mxu0 0.0
    %2694 = vmatpush1.xpose.msra.mxu0 0.0
    %2695 = vmatprep.subr.mxu0 0.0
    %2696 = vmatpush1.xpose.msra.mxu0 0.0
    %2697 = vmatprep.subr.mxu0 0.0
    %2698 = vmatpush1.xpose.msra.mxu0 0.0
    %2699 = vmatprep.subr.mxu0 0.0
    %2700 = vmatpush1.xpose.msra.mxu0 0.0
    %2701 = vmatprep.subr.mxu0 0.0
    %2702 = vmatpush1.xpose.msra.mxu0 0.0
    %2703 = vmatprep.subr.mxu0 0.0
    %2704 = vmatpush1.xpose.msra.mxu0 0.0
    %2705 = vmatprep.subr.mxu0 0.0
    %2706 = vmatpush1.xpose.msra.mxu0 0.0
    %2707 = vmatprep.subr.mxu0 0.0
    %2708 = vmatpush1.xpose.msra.mxu0 0.0
    %2709 = vmatprep.subr.mxu0 0.0
    %2710 = vmatpush1.xpose.msra.mxu0 0.0
    %2711 = vmatprep.subr.mxu0 0.0
    %2712 = vmatpush1.xpose.msra.mxu0 0.0
    %2713 = vmatprep.subr.mxu0 0.0
    %2714 = vmatpush1.xpose.msra.mxu0 0.0
    %2715 = vmatprep.subr.mxu0 0.0
    %2716 = vmatpush1.xpose.msra.mxu0 0.0
    %2717 = vmatprep.subr.mxu0 0.0
    %2718 = vmatpush1.xpose.msra.mxu0 0.0
    %2719 = vmatprep.subr.mxu0 0.0
    %2720 = vmatpush1.xpose.msra.mxu0 0.0
    %2721 = vmatprep.subr.mxu0 0.0
    %2722 = vmatpush1.xpose.msra.mxu0 0.0
    %2723 = vmatprep.subr.mxu0 0.0
    %2724 = vmatpush1.xpose.msra.mxu0 0.0
    %2725 = vmatprep.subr.mxu0 0.0
    %2726 = vmatpush1.xpose.msra.mxu0 0.0
    %2727 = vmatprep.subr.mxu0 0.0
    %2728 = vmatpush1.xpose.msra.mxu0 0.0
    %2729 = vmatprep.subr.mxu0 0.0
    %2730 = vmatpush1.xpose.msra.mxu0 0.0
    %2731 = vmatprep.subr.mxu0 0.0
    %2732 = vmatpush1.xpose.msra.mxu0 0.0
    %2733 = vmatprep.subr.mxu0 0.0
    %2734 = vmatpush1.xpose.msra.mxu0 0.0
    %2735 = vmatprep.subr.mxu0 0.0
    %2736 = vmatpush1.xpose.msra.mxu0 0.0
    %2737 = vmatprep.subr.mxu0 0.0
    %2738 = vmatpush1.xpose.msra.mxu0 0.0
    %2739 = vmatprep.subr.mxu0 0.0
    %2740 = vmatpush1.xpose.msra.mxu0 0.0
    %2741 = vmatprep.subr.mxu0 0.0
    %2742 = vmatpush1.xpose.msra.mxu0 0.0
    %2743 = vmatprep.subr.mxu0 0.0
    %2744 = vmatpush1.xpose.msra.mxu0 0.0
    %2745 = vmatprep.subr.mxu0 0.0
    %2746 = vmatpush1.xpose.msra.mxu0 0.0
    %2747 = vmatprep.subr.mxu0 0.0
    %2748 = vmatpush1.xpose.msra.mxu0 0.0
    %2749 = vmatprep.mubr.f32.mxu0 0.0
    %2750 = vmatmul.mubr.f32.gmra.mrb[0].mxu0 %v2677
    %v2751 = vpop.f32.mrb[0].mxu0
    %v2752 = vadd.f32 0.0, %v2751
    %v2753 = vpop.f32.mrb[0].mxu0
    %2754 = vmatprep.mubr.f32.mxu0 0.0
    %2755 = vmatmul.mubr.f32.gmra.mrb[0].mxu0 %v2679
    %v2756 = vpop.f32.mrb[0].mxu0
    %v2757 = vadd.f32 0.0, %v2756
    %v2758 = vpop.f32.mrb[0].mxu0
    %2759 = vdwg.mxu0
    %v2760 = vmul.f32 %v2752, 0.35355338
    %v2761 = vmul.f32 %v2757, 0.35355338
    %v2762 = vadd.f32 %v2760, %v129
    %v2763 = vadd.f32 %v2761, %v130
    %v2764 = vsel %vm367, %v2762, -inf
    %2765 = vmax.xlane.f32.xlu0 %v2764
    %v2766 = vpop.xlane.xlu0 %2765
    %v2767 = vsel %vm367, %v2763, -inf
    %2768 = vmax.xlane.f32.xlu0 %v2767
    %v2769 = vpop.xlane.xlu0 %2768
    %v2770 = vsub.f32 %v2762, %v2766
    %v2771 = vsub.f32 %v2763, %v2769
    %v2772 = vmul.f32 %v2770, 1.442695
    %v2773 = vpow.pop %v2772
    %v2774 = vmul.f32 %v2771, 1.442695
    %v2775 = vpow.pop %v2774
    %v2776 = vsel %vm367, %v2773, 0.0
    %2777 = vadd.xlane.f32.xlu0 %v2776
    %v2778 = vpop.xlane.xlu0 %2777
    %v2779 = vsel %vm367, %v2775, 0.0
    %2780 = vadd.xlane.f32.xlu0 %v2779
    %v2781 = vpop.xlane.xlu0 %2780
    %v2782 = vrcp.pop %v2778
    %v2783 = vrcp.pop %v2781
    %v2784 = vmul.f32 %v2773, %v2782
    %v2785 = vmul.f32 %v2775, %v2783
    %2786 = vrot.lane.b32.xlu0 %v1802, 40
    %v2787 = vpop.permute.xlu0 %2786
    %2788 = vrot.lane.b32.xlu0 %v1807, 40
    %v2789 = vpop.permute.xlu0 %2788
    %v2793 = vsel %vm367, %v2784, 0
    %v2796 = vsel %vm367, %v2785, 0
    %2798 = vmatprep.subr.mxu0 0.0
    %2799 = vmatpush1.msra.mxu0 %v2787
    %2800 = vmatprep.subr.mxu0 0.0
    %2801 = vmatpush1.msra.mxu0 %v2789
    %2802 = vmatprep.subr.mxu0 0.0
    %2803 = vmatpush1.msra.mxu0 0.0
    %2804 = vmatprep.subr.mxu0 0.0
    %2805 = vmatpush1.msra.mxu0 0.0
    %2806 = vmatprep.subr.mxu0 0.0
    %2807 = vmatpush1.msra.mxu0 0.0
    %2808 = vmatprep.subr.mxu0 0.0
    %2809 = vmatpush1.msra.mxu0 0.0
    %2810 = vmatprep.subr.mxu0 0.0
    %2811 = vmatpush1.msra.mxu0 0.0
    %2812 = vmatprep.subr.mxu0 0.0
    %2813 = vmatpush1.msra.mxu0 0.0
    %2814 = vmatprep.subr.mxu0 0.0
    %2815 = vmatpush1.msra.mxu0 0.0
    %2816 = vmatprep.subr.mxu0 0.0
    %2817 = vmatpush1.msra.mxu0 0.0
    %2818 = vmatprep.subr.mxu0 0.0
    %2819 = vmatpush1.msra.mxu0 0.0
    %2820 = vmatprep.subr.mxu0 0.0
    %2821 = vmatpush1.msra.mxu0 0.0
    %2822 = vmatprep.subr.mxu0 0.0
    %2823 = vmatpush1.msra.mxu0 0.0
    %2824 = vmatprep.subr.mxu0 0.0
    %2825 = vmatpush1.msra.mxu0 0.0
    %2826 = vmatprep.subr.mxu0 0.0
    %2827 = vmatpush1.msra.mxu0 0.0
    %2828 = vmatprep.subr.mxu0 0.0
    %2829 = vmatpush1.msra.mxu0 0.0
    %2830 = vmatprep.subr.mxu0 0.0
    %2831 = vmatpush1.msra.mxu0 0.0
    %2832 = vmatprep.subr.mxu0 0.0
    %2833 = vmatpush1.msra.mxu0 0.0
    %2834 = vmatprep.subr.mxu0 0.0
    %2835 = vmatpush1.msra.mxu0 0.0
    %2836 = vmatprep.subr.mxu0 0.0
    %2837 = vmatpush1.msra.mxu0 0.0
    %2838 = vmatprep.subr.mxu0 0.0
    %2839 = vmatpush1.msra.mxu0 0.0
    %2840 = vmatprep.subr.mxu0 0.0
    %2841 = vmatpush1.msra.mxu0 0.0
    %2842 = vmatprep.subr.mxu0 0.0
    %2843 = vmatpush1.msra.mxu0 0.0
    %2844 = vmatprep.subr.mxu0 0.0
    %2845 = vmatpush1.msra.mxu0 0.0
    %2846 = vmatprep.subr.mxu0 0.0
    %2847 = vmatpush1.msra.mxu0 0.0
    %2848 = vmatprep.subr.mxu0 0.0
    %2849 = vmatpush1.msra.mxu0 0.0
    %2850 = vmatprep.subr.mxu0 0.0
    %2851 = vmatpush1.msra.mxu0 0.0
    %2852 = vmatprep.subr.mxu0 0.0
    %2853 = vmatpush1.msra.mxu0 0.0
    %2854 = vmatprep.subr.mxu0 0.0
    %2855 = vmatpush1.msra.mxu0 0.0
    %2856 = vmatprep.subr.mxu0 0.0
    %2857 = vmatpush1.msra.mxu0 0.0
    %2858 = vmatprep.subr.mxu0 0.0
    %2859 = vmatpush1.msra.mxu0 0.0
    %2860 = vmatprep.subr.mxu0 0.0
    %2861 = vmatpush1.msra.mxu0 0.0
    %2862 = vmatprep.mubr.f32.mxu0 0.0
    %2863 = vmatmul.mubr.f32.gmra.mrb[0].mxu0 %v2793
    %v2864 = vpop.f32.mrb[0].mxu0
    %v2865 = vadd.f32 0.0, %v2864
    %v2866 = vpop.f32.mrb[0].mxu0
    %2867 = vmatprep.mubr.f32.mxu0 0.0
    %2868 = vmatmul.mubr.f32.gmra.mrb[0].mxu0 %v2796
    %v2869 = vpop.f32.mrb[0].mxu0
    %v2870 = vadd.f32 0.0, %v2869
    %v2871 = vpop.f32.mrb[0].mxu0
    %2872 = vdwg.mxu0
    %v2874 = vsel %vm279, %v2865, 0
    %v2877 = vsel %vm279, %v2870, 0
    %2879 = vmatprep.subr.mxu0 0.0
    %2880 = vmatpush1.msra.mxu0 %v1813
    %2881 = vmatprep.subr.mxu0 0.0
    %2882 = vmatpush1.msra.mxu0 0.0
    %2883 = vmatprep.subr.mxu0 0.0
    %2884 = vmatpush1.msra.mxu0 0.0
    %2885 = vmatprep.subr.mxu0 0.0
    %2886 = vmatpush1.msra.mxu0 0.0
    %2887 = vmatprep.subr.mxu0 0.0
    %2888 = vmatpush1.msra.mxu0 0.0
    %2889 = vmatprep.subr.mxu0 0.0
    %2890 = vmatpush1.msra.mxu0 0.0
    %2891 = vmatprep.subr.mxu0 0.0
    %2892 = vmatpush1.msra.mxu0 0.0
    %2893 = vmatprep.subr.mxu0 0.0
    %2894 = vmatpush1.msra.mxu0 0.0
    %2895 = vmatprep.subr.mxu0 0.0
    %2896 = vmatpush1.msra.mxu0 0.0
    %2897 = vmatprep.subr.mxu0 0.0
    %2898 = vmatpush1.msra.mxu0 0.0
    %2899 = vmatprep.subr.mxu0 0.0
    %2900 = vmatpush1.msra.mxu0 0.0
    %2901 = vmatprep.subr.mxu0 0.0
    %2902 = vmatpush1.msra.mxu0 0.0
    %2903 = vmatprep.subr.mxu0 0.0
    %2904 = vmatpush1.msra.mxu0 0.0
    %2905 = vmatprep.subr.mxu0 0.0
    %2906 = vmatpush1.msra.mxu0 0.0
    %2907 = vmatprep.subr.mxu0 0.0
    %2908 = vmatpush1.msra.mxu0 0.0
    %2909 = vmatprep.subr.mxu0 0.0
    %2910 = vmatpush1.msra.mxu0 0.0
    %2911 = vmatprep.subr.mxu0 0.0
    %2912 = vmatpush1.msra.mxu0 0.0
    %2913 = vmatprep.subr.mxu0 0.0
    %2914 = vmatpush1.msra.mxu0 0.0
    %2915 = vmatprep.subr.mxu0 0.0
    %2916 = vmatpush1.msra.mxu0 0.0
    %2917 = vmatprep.subr.mxu0 0.0
    %2918 = vmatpush1.msra.mxu0 0.0
    %2919 = vmatprep.subr.mxu0 0.0
    %2920 = vmatpush1.msra.mxu0 0.0
    %2921 = vmatprep.subr.mxu0 0.0
    %2922 = vmatpush1.msra.mxu0 0.0
    %2923 = vmatprep.subr.mxu0 0.0
    %2924 = vmatpush1.msra.mxu0 0.0
    %2925 = vmatprep.subr.mxu0 0.0
    %2926 = vmatpush1.msra.mxu0 0.0
    %2927 = vmatprep.subr.mxu0 0.0
    %2928 = vmatpush1.msra.mxu0 0.0
    %2929 = vmatprep.subr.mxu0 0.0
    %2930 = vmatpush1.msra.mxu0 0.0
    %2931 = vmatprep.subr.mxu0 0.0
    %2932 = vmatpush1.msra.mxu0 0.0
    %2933 = vmatprep.subr.mxu0 0.0
    %2934 = vmatpush1.msra.mxu0 0.0
    %2935 = vmatprep.subr.mxu0 0.0
    %2936 = vmatpush1.msra.mxu0 0.0
    %2937 = vmatprep.subr.mxu0 0.0
    %2938 = vmatpush1.msra.mxu0 0.0
    %2939 = vmatprep.subr.mxu0 0.0
    %2940 = vmatpush1.msra.mxu0 0.0
    %2941 = vmatprep.subr.mxu0 0.0
    %2942 = vmatpush1.msra.mxu0 0.0
    %2943 = vmatprep.mubr.f32.mxu0 0.0
    %2944 = vmatmul.mubr.f32.gmra.mrb[0].mxu0 %v2874
    %v2945 = vpop.f32.mrb[0].mxu0
    %v2946 = vadd.f32 0.0, %v2945
    %v2947 = vpop.f32.mrb[0].mxu0
    %2948 = vmatprep.mubr.f32.mxu0 0.0
    %2949 = vmatmul.mubr.f32.gmra.mrb[0].mxu0 %v2877
    %v2950 = vpop.f32.mrb[0].mxu0
    %v2951 = vadd.f32 0.0, %v2950
    %v2952 = vpop.f32.mrb[0].mxu0
    %2953 = vdwg.mxu0
    %v2954 = vadd.f32 %v2667, %v2946
    %v2955 = vadd.f32 %v2668, %v2951
    %v2956 = vadd.f32 %v1672, %v2954
    %v2957 = vadd.f32 %v1673, %v2955
    %v2958 = vld [vmem:[%s35] sm:$0x1]
    %v2960 = vlaneseq
    %v2961 = vshrl.u32 %v2960, 7
    %v2962 = vsub.s32 0, %v2961
    %v2963 = vrot.slane %v2958, %v2962
    %v2965 = vadd.f32 %v2956, %v2963
    %v2966 = vadd.f32 %v2957, %v2963
    %v2967 = vld [vmem:[%s41] sm:$0x1]
    %v2968 = vld [vmem:[%s43] sm:$0x1]
    %v2969 = vsel %vm133, %v2965, 0.0
    %2970 = vadd.xlane.f32.xlu0 %v2969
    %v2971 = vpop.xlane.xlu0 %2970
    %v2972 = vsel %vm133, %v2966, 0.0
    %2973 = vadd.xlane.f32.xlu0 %v2972
    %v2974 = vpop.xlane.xlu0 %2973
    %v2975 = vmul.f32 %v2971, %v140
    %v2976 = vmul.f32 %v2974, %v140
    %v2977 = vsub.f32 %v2965, %v2975
    %v2978 = vsub.f32 %v2966, %v2976
    %v2979 = vmul.f32 %v2977, %v2977
    %v2980 = vmul.f32 %v2978, %v2978
    %v2981 = vsel %vm133, %v2979, 0.0
    %2982 = vadd.xlane.f32.xlu0 %v2981
    %v2983 = vpop.xlane.xlu0 %2982
    %v2984 = vsel %vm133, %v2980, 0.0
    %2985 = vadd.xlane.f32.xlu0 %v2984
    %v2986 = vpop.xlane.xlu0 %2985
    %v2987 = vmul.f32 %v2983, %v140
    %v2988 = vmul.f32 %v2986, %v140
    %v2989 = vadd.f32 %v2987, 1e-05
    %v2990 = vadd.f32 %v2988, 1e-05
    %v2991 = vrsqrt.pop %v2989
    %v2992 = vrsqrt.pop %v2990
    %v2993 = vmul.f32 %v2977, %v2991
    %v2994 = vmul.f32 %v2978, %v2992
    %v2996 = vlaneseq
    %v2997 = vshrl.u32 %v2996, 7
    %v2998 = vsub.s32 0, %v2997
    %v2999 = vrot.slane %v2967, %v2998
    %v3001 = vmul.f32 %v2993, %v2999
    %v3002 = vmul.f32 %v2994, %v2999
    %v3004 = vlaneseq
    %v3005 = vshrl.u32 %v3004, 7
    %v3006 = vsub.s32 0, %v3005
    %v3007 = vrot.slane %v2968, %v3006
    %v3009 = vadd.f32 %v3001, %v3007
    %v3010 = vadd.f32 %v3002, %v3007
    %v3011 = vld [vmem:[%s45] sm:$0xff]
    %v3012 = vld [vmem:[%s45 + $0x8] sm:$0xff]
    %v3013 = vld [vmem:[%s45 + $0x10] sm:$0xff]
    %v3014 = vld [vmem:[%s45 + $0x18] sm:$0xff]
    %v3015 = vld [vmem:[%s47] sm:$0x1]
    %v3017 = vlaneseq
    %v3018 = vshrl.u32 %v3017, 7
    %v3019 = vsub.s32 0, %v3018
    %v3020 = vrot.slane %v3015, %v3019
    %v3023 = vsel %vm133, %v3009, 0
    %v3026 = vsel %vm133, %v3010, 0
    %3028 = vmatprep.subr.mxu0 0.0
    %3029 = vmatpush1.msra.mxu0 %v3011
    %3030 = vmatprep.subr.mxu0 0.0
    %3031 = vmatpush1.msra.mxu0 %v3012
    %3032 = vmatprep.subr.mxu0 0.0
    %3033 = vmatpush1.msra.mxu0 %v3013
    %3034 = vmatprep.subr.mxu0 0.0
    %3035 = vmatpush1.msra.mxu0 %v3014
    %3036 = vmatprep.subr.mxu0 0.0
    %3037 = vmatpush1.msra.mxu0 0.0
    %3038 = vmatprep.subr.mxu0 0.0
    %3039 = vmatpush1.msra.mxu0 0.0
    %3040 = vmatprep.subr.mxu0 0.0
    %3041 = vmatpush1.msra.mxu0 0.0
    %3042 = vmatprep.subr.mxu0 0.0
    %3043 = vmatpush1.msra.mxu0 0.0
    %3044 = vmatprep.subr.mxu0 0.0
    %3045 = vmatpush1.msra.mxu0 0.0
    %3046 = vmatprep.subr.mxu0 0.0
    %3047 = vmatpush1.msra.mxu0 0.0
    %3048 = vmatprep.subr.mxu0 0.0
    %3049 = vmatpush1.msra.mxu0 0.0
    %3050 = vmatprep.subr.mxu0 0.0
    %3051 = vmatpush1.msra.mxu0 0.0
    %3052 = vmatprep.subr.mxu0 0.0
    %3053 = vmatpush1.msra.mxu0 0.0
    %3054 = vmatprep.subr.mxu0 0.0
    %3055 = vmatpush1.msra.mxu0 0.0
    %3056 = vmatprep.subr.mxu0 0.0
    %3057 = vmatpush1.msra.mxu0 0.0
    %3058 = vmatprep.subr.mxu0 0.0
    %3059 = vmatpush1.msra.mxu0 0.0
    %3060 = vmatprep.subr.mxu0 0.0
    %3061 = vmatpush1.msra.mxu0 0.0
    %3062 = vmatprep.subr.mxu0 0.0
    %3063 = vmatpush1.msra.mxu0 0.0
    %3064 = vmatprep.subr.mxu0 0.0
    %3065 = vmatpush1.msra.mxu0 0.0
    %3066 = vmatprep.subr.mxu0 0.0
    %3067 = vmatpush1.msra.mxu0 0.0
    %3068 = vmatprep.subr.mxu0 0.0
    %3069 = vmatpush1.msra.mxu0 0.0
    %3070 = vmatprep.subr.mxu0 0.0
    %3071 = vmatpush1.msra.mxu0 0.0
    %3072 = vmatprep.subr.mxu0 0.0
    %3073 = vmatpush1.msra.mxu0 0.0
    %3074 = vmatprep.subr.mxu0 0.0
    %3075 = vmatpush1.msra.mxu0 0.0
    %3076 = vmatprep.subr.mxu0 0.0
    %3077 = vmatpush1.msra.mxu0 0.0
    %3078 = vmatprep.subr.mxu0 0.0
    %3079 = vmatpush1.msra.mxu0 0.0
    %3080 = vmatprep.subr.mxu0 0.0
    %3081 = vmatpush1.msra.mxu0 0.0
    %3082 = vmatprep.subr.mxu0 0.0
    %3083 = vmatpush1.msra.mxu0 0.0
    %3084 = vmatprep.subr.mxu0 0.0
    %3085 = vmatpush1.msra.mxu0 0.0
    %3086 = vmatprep.subr.mxu0 0.0
    %3087 = vmatpush1.msra.mxu0 0.0
    %3088 = vmatprep.subr.mxu0 0.0
    %3089 = vmatpush1.msra.mxu0 0.0
    %3090 = vmatprep.subr.mxu0 0.0
    %3091 = vmatpush1.msra.mxu0 0.0
    %3092 = vmatprep.mubr.f32.mxu0 0.0
    %3093 = vmatmul.mubr.f32.gmra.mrb[0].mxu0 %v3023
    %v3094 = vpop.f32.mrb[0].mxu0
    %v3095 = vadd.f32 %v3020, %v3094
    %v3096 = vpop.f32.mrb[0].mxu0
    %3097 = vmatprep.mubr.f32.mxu0 0.0
    %3098 = vmatmul.mubr.f32.gmra.mrb[0].mxu0 %v3026
    %v3099 = vpop.f32.mrb[0].mxu0
    %v3100 = vadd.f32 %v3020, %v3099
    %v3101 = vpop.f32.mrb[0].mxu0
    %3102 = vdwg.mxu0
    %v3103 = vmul.f32 %v3095, 0.5
    %v3104 = vmul.f32 %v3100, 0.5
    %v3105 = vmul.f32 %v3095, 0.70710677
    %v3106 = vmul.f32 %v3100, 0.70710677
    %v3107 = verf.f32.pop %v3105
    %v3108 = verf.f32.pop %v3106
    %v3109 = vadd.f32 %v3107, 1.0
    %v3110 = vadd.f32 %v3108, 1.0
    %v3111 = vmul.f32 %v3103, %v3109
    %v3112 = vmul.f32 %v3104, %v3110
    %v3113 = vld [vmem:[%s49] sm:$0xff]
    %v3114 = vld [vmem:[%s49 + $0x8] sm:$0xff]
    %v3115 = vld [vmem:[%s49 + $0x10] sm:$0xff]
    %v3116 = vld [vmem:[%s49 + $0x18] sm:$0xff]
    %v3117 = vld [vmem:[%s49 + $0x20] sm:$0xff]
    %v3118 = vld [vmem:[%s49 + $0x28] sm:$0xff]
    %v3119 = vld [vmem:[%s49 + $0x30] sm:$0xff]
    %v3120 = vld [vmem:[%s49 + $0x38] sm:$0xff]
    %v3121 = vld [vmem:[%s49 + $0x40] sm:$0xff]
    %v3122 = vld [vmem:[%s49 + $0x48] sm:$0xff]
    %v3123 = vld [vmem:[%s49 + $0x50] sm:$0xff]
    %v3124 = vld [vmem:[%s49 + $0x58] sm:$0xff]
    %v3125 = vld [vmem:[%s49 + $0x60] sm:$0xff]
    %v3126 = vld [vmem:[%s49 + $0x68] sm:$0xff]
    %v3127 = vld [vmem:[%s49 + $0x70] sm:$0xff]
    %v3128 = vld [vmem:[%s49 + $0x78] sm:$0xff]
    %v3129 = vld [vmem:[%s51] sm:$0x1]
    %v3131 = vlaneseq
    %v3132 = vshrl.u32 %v3131, 7
    %v3133 = vsub.s32 0, %v3132
    %v3134 = vrot.slane %v3129, %v3133
    %3136 = vmatprep.subr.mxu0 0.0
    %3137 = vmatpush1.msra.mxu0 %v3113
    %3138 = vmatprep.subr.mxu0 0.0
    %3139 = vmatpush1.msra.mxu0 %v3114
    %3140 = vmatprep.subr.mxu0 0.0
    %3141 = vmatpush1.msra.mxu0 %v3115
    %3142 = vmatprep.subr.mxu0 0.0
    %3143 = vmatpush1.msra.mxu0 %v3116
    %3144 = vmatprep.subr.mxu0 0.0
    %3145 = vmatpush1.msra.mxu0 %v3117
    %3146 = vmatprep.subr.mxu0 0.0
    %3147 = vmatpush1.msra.mxu0 %v3118
    %3148 = vmatprep.subr.mxu0 0.0
    %3149 = vmatpush1.msra.mxu0 %v3119
    %3150 = vmatprep.subr.mxu0 0.0
    %3151 = vmatpush1.msra.mxu0 %v3120
    %3152 = vmatprep.subr.mxu0 0.0
    %3153 = vmatpush1.msra.mxu0 %v3121
    %3154 = vmatprep.subr.mxu0 0.0
    %3155 = vmatpush1.msra.mxu0 %v3122
    %3156 = vmatprep.subr.mxu0 0.0
    %3157 = vmatpush1.msra.mxu0 %v3123
    %3158 = vmatprep.subr.mxu0 0.0
    %3159 = vmatpush1.msra.mxu0 %v3124
    %3160 = vmatprep.subr.mxu0 0.0
    %3161 = vmatpush1.msra.mxu0 %v3125
    %3162 = vmatprep.subr.mxu0 0.0
    %3163 = vmatpush1.msra.mxu0 %v3126
    %3164 = vmatprep.subr.mxu0 0.0
    %3165 = vmatpush1.msra.mxu0 %v3127
    %3166 = vmatprep.subr.mxu0 0.0
    %3167 = vmatpush1.msra.mxu0 %v3128
    %3168 = vmatprep.subr.mxu0 0.0
    %3169 = vmatpush1.msra.mxu0 0.0
    %3170 = vmatprep.subr.mxu0 0.0
    %3171 = vmatpush1.msra.mxu0 0.0
    %3172 = vmatprep.subr.mxu0 0.0
    %3173 = vmatpush1.msra.mxu0 0.0
    %3174 = vmatprep.subr.mxu0 0.0
    %3175 = vmatpush1.msra.mxu0 0.0
    %3176 = vmatprep.subr.mxu0 0.0
    %3177 = vmatpush1.msra.mxu0 0.0
    %3178 = vmatprep.subr.mxu0 0.0
    %3179 = vmatpush1.msra.mxu0 0.0
    %3180 = vmatprep.subr.mxu0 0.0
    %3181 = vmatpush1.msra.mxu0 0.0
    %3182 = vmatprep.subr.mxu0 0.0
    %3183 = vmatpush1.msra.mxu0 0.0
    %3184 = vmatprep.subr.mxu0 0.0
    %3185 = vmatpush1.msra.mxu0 0.0
    %3186 = vmatprep.subr.mxu0 0.0
    %3187 = vmatpush1.msra.mxu0 0.0
    %3188 = vmatprep.subr.mxu0 0.0
    %3189 = vmatpush1.msra.mxu0 0.0
    %3190 = vmatprep.subr.mxu0 0.0
    %3191 = vmatpush1.msra.mxu0 0.0
    %3192 = vmatprep.subr.mxu0 0.0
    %3193 = vmatpush1.msra.mxu0 0.0
    %3194 = vmatprep.subr.mxu0 0.0
    %3195 = vmatpush1.msra.mxu0 0.0
    %3196 = vmatprep.subr.mxu0 0.0
    %3197 = vmatpush1.msra.mxu0 0.0
    %3198 = vmatprep.subr.mxu0 0.0
    %3199 = vmatpush1.msra.mxu0 0.0
    %3200 = vmatprep.mubr.f32.mxu0 0.0
    %3201 = vmatmul.mubr.f32.gmra.mrb[0].mxu0 %v3111
    %v3202 = vpop.f32.mrb[0].mxu0
    %v3203 = vadd.f32 %v3134, %v3202
    %v3204 = vpop.f32.mrb[0].mxu0
    %3205 = vmatprep.mubr.f32.mxu0 0.0
    %3206 = vmatmul.mubr.f32.gmra.mrb[0].mxu0 %v3112
    %v3207 = vpop.f32.mrb[0].mxu0
    %v3208 = vadd.f32 %v3134, %v3207
    %v3209 = vpop.f32.mrb[0].mxu0
    %3210 = vdwg.mxu0
    %v3211 = vadd.f32 %v2965, %v3203
    %v3212 = vadd.f32 %v2966, %v3208
    %v3213 = vld [vmem:[%s53] sm:$0x1]
    %v3214 = vld [vmem:[%s55] sm:$0x1]
    %v3215 = vsel %vm133, %v3211, 0.0
    %3216 = vadd.xlane.f32.xlu0 %v3215
    %v3217 = vpop.xlane.xlu0 %3216
    %v3218 = vsel %vm133, %v3212, 0.0
    %3219 = vadd.xlane.f32.xlu0 %v3218
    %v3220 = vpop.xlane.xlu0 %3219
    %v3221 = vmul.f32 %v3217, %v140
    %v3222 = vmul.f32 %v3220, %v140
    %v3223 = vsub.f32 %v3211, %v3221
    %v3224 = vsub.f32 %v3212, %v3222
    %v3225 = vmul.f32 %v3223, %v3223
    %v3226 = vmul.f32 %v3224, %v3224
    %v3227 = vsel %vm133, %v3225, 0.0
    %3228 = vadd.xlane.f32.xlu0 %v3227
    %v3229 = vpop.xlane.xlu0 %3228
    %v3230 = vsel %vm133, %v3226, 0.0
    %3231 = vadd.xlane.f32.xlu0 %v3230
    %v3232 = vpop.xlane.xlu0 %3231
    %v3233 = vmul.f32 %v3229, %v140
    %v3234 = vmul.f32 %v3232, %v140
    %v3235 = vadd.f32 %v3233, 1e-05
    %v3236 = vadd.f32 %v3234, 1e-05
    %v3237 = vrsqrt.pop %v3235
    %v3238 = vrsqrt.pop %v3236
    %v3239 = vmul.f32 %v3223, %v3237
    %v3240 = vmul.f32 %v3224, %v3238
    %v3242 = vlaneseq
    %v3243 = vshrl.u32 %v3242, 7
    %v3244 = vsub.s32 0, %v3243
    %v3245 = vrot.slane %v3213, %v3244
    %v3247 = vmul.f32 %v3239, %v3245
    %v3248 = vmul.f32 %v3240, %v3245
    %v3250 = vlaneseq
    %v3251 = vshrl.u32 %v3250, 7
    %v3252 = vsub.s32 0, %v3251
    %v3253 = vrot.slane %v3214, %v3252
    %v3255 = vadd.f32 %v3247, %v3253
    %v3256 = vadd.f32 %v3248, %v3253
    %v3257 = vld [vmem:[%s57] sm:$0xff]
    %v3258 = vld [vmem:[%s57 + $0x8] sm:$0xff]
    %v3259 = vld [vmem:[%s57 + $0x10] sm:$0xff]
    %v3260 = vld [vmem:[%s57 + $0x18] sm:$0xff]
    %v3261 = vld [vmem:[%s59] sm:$0x1]
    %v3263 = vlaneseq
    %v3264 = vshrl.u32 %v3263, 7
    %v3265 = vsub.s32 0, %v3264
    %v3266 = vrot.slane %v3261, %v3265
    %v3269 = vsel %vm133, %v3255, 0
    %v3272 = vsel %vm133, %v3256, 0
    %3274 = vmatprep.subr.mxu0 0.0
    %3275 = vmatpush1.msra.mxu0 %v3257
    %3276 = vmatprep.subr.mxu0 0.0
    %3277 = vmatpush1.msra.mxu0 %v3258
    %3278 = vmatprep.subr.mxu0 0.0
    %3279 = vmatpush1.msra.mxu0 %v3259
    %3280 = vmatprep.subr.mxu0 0.0
    %3281 = vmatpush1.msra.mxu0 %v3260
    %3282 = vmatprep.subr.mxu0 0.0
    %3283 = vmatpush1.msra.mxu0 0.0
    %3284 = vmatprep.subr.mxu0 0.0
    %3285 = vmatpush1.msra.mxu0 0.0
    %3286 = vmatprep.subr.mxu0 0.0
    %3287 = vmatpush1.msra.mxu0 0.0
    %3288 = vmatprep.subr.mxu0 0.0
    %3289 = vmatpush1.msra.mxu0 0.0
    %3290 = vmatprep.subr.mxu0 0.0
    %3291 = vmatpush1.msra.mxu0 0.0
    %3292 = vmatprep.subr.mxu0 0.0
    %3293 = vmatpush1.msra.mxu0 0.0
    %3294 = vmatprep.subr.mxu0 0.0
    %3295 = vmatpush1.msra.mxu0 0.0
    %3296 = vmatprep.subr.mxu0 0.0
    %3297 = vmatpush1.msra.mxu0 0.0
    %3298 = vmatprep.subr.mxu0 0.0
    %3299 = vmatpush1.msra.mxu0 0.0
    %3300 = vmatprep.subr.mxu0 0.0
    %3301 = vmatpush1.msra.mxu0 0.0
    %3302 = vmatprep.subr.mxu0 0.0
    %3303 = vmatpush1.msra.mxu0 0.0
    %3304 = vmatprep.subr.mxu0 0.0
    %3305 = vmatpush1.msra.mxu0 0.0
    %3306 = vmatprep.subr.mxu0 0.0
    %3307 = vmatpush1.msra.mxu0 0.0
    %3308 = vmatprep.subr.mxu0 0.0
    %3309 = vmatpush1.msra.mxu0 0.0
    %3310 = vmatprep.subr.mxu0 0.0
    %3311 = vmatpush1.msra.mxu0 0.0
    %3312 = vmatprep.subr.mxu0 0.0
    %3313 = vmatpush1.msra.mxu0 0.0
    %3314 = vmatprep.subr.mxu0 0.0
    %3315 = vmatpush1.msra.mxu0 0.0
    %3316 = vmatprep.subr.mxu0 0.0
    %3317 = vmatpush1.msra.mxu0 0.0
    %3318 = vmatprep.subr.mxu0 0.0
    %3319 = vmatpush1.msra.mxu0 0.0
    %3320 = vmatprep.subr.mxu0 0.0
    %3321 = vmatpush1.msra.mxu0 0.0
    %3322 = vmatprep.subr.mxu0 0.0
    %3323 = vmatpush1.msra.mxu0 0.0
    %3324 = vmatprep.subr.mxu0 0.0
    %3325 = vmatpush1.msra.mxu0 0.0
    %3326 = vmatprep.subr.mxu0 0.0
    %3327 = vmatpush1.msra.mxu0 0.0
    %3328 = vmatprep.subr.mxu0 0.0
    %3329 = vmatpush1.msra.mxu0 0.0
    %3330 = vmatprep.subr.mxu0 0.0
    %3331 = vmatpush1.msra.mxu0 0.0
    %3332 = vmatprep.subr.mxu0 0.0
    %3333 = vmatpush1.msra.mxu0 0.0
    %3334 = vmatprep.subr.mxu0 0.0
    %3335 = vmatpush1.msra.mxu0 0.0
    %3336 = vmatprep.subr.mxu0 0.0
    %3337 = vmatpush1.msra.mxu0 0.0
    %3338 = vmatprep.mubr.f32.mxu0 0.0
    %3339 = vmatmul.mubr.f32.gmra.mrb[0].mxu0 %v3269
    %v3340 = vpop.f32.mrb[0].mxu0
    %v3341 = vadd.f32 %v3266, %v3340
    %v3342 = vpop.f32.mrb[0].mxu0
    %3343 = vmatprep.mubr.f32.mxu0 0.0
    %3344 = vmatmul.mubr.f32.gmra.mrb[0].mxu0 %v3272
    %v3345 = vpop.f32.mrb[0].mxu0
    %v3346 = vadd.f32 %v3266, %v3345
    %v3347 = vpop.f32.mrb[0].mxu0
    %3348 = vdwg.mxu0
    %3349 = vmax.xlane.f32.xlu0 %v3341
    %v3350 = vpop.xlane.xlu0 %3349
    %3351 = vmax.xlane.f32.xlu0 %v3346
    %v3352 = vpop.xlane.xlu0 %3351
    %v3353 = vsub.f32 %v3341, %v3350
    %v3354 = vsub.f32 %v3346, %v3352
    %v3355 = vmul.f32 %v3353, 1.442695
    %v3356 = vpow.pop %v3355
    %v3357 = vmul.f32 %v3354, 1.442695
    %v3358 = vpow.pop %v3357
    %3359 = vadd.xlane.f32.xlu0 %v3356
    %v3360 = vpop.xlane.xlu0 %3359
    %3361 = vadd.xlane.f32.xlu0 %v3358
    %v3362 = vpop.xlane.xlu0 %3361
    %v3363 = vlog2.pop %v3360
    %v3364 = vmul.f32 %v3363, 0.6931472
    %v3365 = vlog2.pop %v3362
    %v3366 = vmul.f32 %v3365, 0.6931472
    %v3367 = vsub.f32 %v3353, %v3364
    %v3368 = vsub.f32 %v3354, %v3366
    %3369 = vst [vmem:[#allocation2] sm:$0xff] %v3367
    %3370 = vst [vmem:[#allocation2 + $0x8] sm:$0xff] %v3368
    // Predicated region
    $region122: #{tpu_custom_call.1} parent=1 // pred_check
      _
    $region123: #{tpu_custom_call.1} parent=1 // pred_check_branch
      %3372 = sbr.rel (0) target = $region125
    $region124: #{tpu_custom_call.1} parent=1 // pred_region
      %s3374 = ssub.s32 256, 256
      %3375 = vsyncadd [#allocation3], %s3374
      %s3376 = sshll.u32 [#allocation2], 4
      %s3377 = int_to_ptr.vmem [resolvable:$true] %s3376
      %3382 = dma.vmem_to_hbm [thread:$0]  %s3377, 256, %s61, [#allocation3], 128, 128, 8
    $region125: #{tpu_custom_call.1} parent=1 // pred_fallthru
      _
    // Predicated region
    $region126: #{tpu_custom_call.1} parent=1 // pred_check
      _
    $region127: #{tpu_custom_call.1} parent=1 // pred_check_branch
      %3384 = sbr.rel (0) target = $region129
    $region128: #{tpu_custom_call.1} parent=1 // pred_region
      %3385 = dma.done [#allocation3], 256
    $region129: #{tpu_custom_call.1} parent=1 // pred_fallthru
      _
    %3386 = vsyncpa [#allocation3], 1

</llo_original>
